<compile_context>
chip_gen: v7x
topology: tpu7x:2x2x1
jax: 0.10.0
libtpu: 0.0.40
codegen_flags: <defaults>
</compile_context>

<pallas_src>
import jax
import jax.numpy as jnp
import numpy as np
from jax.experimental import pallas as pl
from jax.experimental.pallas import tpu as pltpu

# Layer dims per the PyTorch module: input 12, then hl1..hl7, then n_classes.
DIMS = [12, 12, 24, 24, 24, 10, 3, 2, 2]
N_LAYERS = 8
N_CLASSES = 2
IN_DIM = DIMS[0]
F_PAD = 128          # lane width of the packed activation slab
TILE_B = 2048        # max batch tile (output block = 1 MiB -> well within VMEM x2 buffers)

# Lane layout of the (TB, 128) slab: input x at lanes [0, 12), then each layer's output.
OUT_OFF = []
_cur = IN_DIM
for _li in range(N_LAYERS):
    OUT_OFF.append(_cur)
    _cur += DIMS[_li + 1]
assert _cur <= F_PAD, _cur           # 12 + (12+24+24+24+10+3+2+2) = 113 <= 128
IN_OFF = [0] + OUT_OFF[:-1]          # layer li reads lanes [IN_OFF[li], IN_OFF[li]+DIMS[li])


def _round_up(n, m):
    return ((n + m - 1) // m) * m


def mlp_kernel(x_ref, w_ref, b_ref, o_ref):
    """Whole net in one kernel (tiny dims).

    x_ref: (TB, 12)        raw input tile (no lane padding)
    w_ref: (8, 128, 128)   chained-offset packed weights (grid-resident)
    b_ref: (8, 1, 128)     packed biases (grid-resident)
    o_ref: (TB, 128)       lane-packed activation slab (single lane-dense store)
    """
    # Zero-extend x to 128 lanes by staging through the output VMEM block (cheap, once per
    # tile; avoids any wrapper-side pad materialization in HBM).
    o_ref[...] = jnp.zeros_like(o_ref)
    o_ref[:, 0:IN_DIM] = x_ref[...]
    slab = o_ref[...]                                  # (TB, 128): x at lanes [0, 12)

    # Hidden layers 1..7.  Weight rows outside a layer's input lanes and columns outside
    # its output lanes are exactly zero, so z (and tanh(z)) is exactly zero on every lane
    # the layer does not own, and `slab + tanh(z)` fills each layer's lanes in place.
    for li in range(N_LAYERS - 1):
        z = jnp.dot(slab, w_ref[li], preferred_element_type=jnp.float32,
                    precision=jax.lax.Precision.HIGHEST) + b_ref[li]
        slab = slab + jnp.tanh(z)

    # Output layer: logits occupy lanes [OUT_OFF[-1], OUT_OFF[-1] + 2); masked softmax.
    logits = jnp.dot(slab, w_ref[N_LAYERS - 1], preferred_element_type=jnp.float32,
                     precision=jax.lax.Precision.HIGHEST) + b_ref[N_LAYERS - 1]
    col = jax.lax.broadcasted_iota(jnp.int32, logits.shape, dimension=1)
    valid = (col >= OUT_OFF[-1]) & (col < OUT_OFF[-1] + N_CLASSES)
    m = jnp.max(jnp.where(valid, logits, -jnp.inf), axis=-1, keepdims=True)
    e = jnp.where(valid, jnp.exp(logits - m), 0.0)
    probs = e / jnp.sum(e, axis=-1, keepdims=True)
    # TODO(synk): N_CLASSES==2 admits a sigmoid closed form (p0 = sigmoid(l0-l1)); kept the
    # known-good masked softmax since its cost is negligible at these sizes.

    # Single lane-dense, unmasked 128-wide store per row.
    o_ref[...] = slab + probs


def init_params(key):
    """Truncated-normal(std=1/out_features) weights, zero biases (matches __init_weights__)."""
    ws, bs = [], []
    for li in range(N_LAYERS):
        key, sub = jax.random.split(key)
        fan_in, fan_out = DIMS[li], DIMS[li + 1]
        std = 1.0 / fan_out
        # PyTorch Linear weight is (out, in); keep that convention for the "model" params.
        w = jax.random.truncated_normal(sub, -2.0, 2.0, (fan_out, fan_in), jnp.float32) * std
        b = jnp.zeros((fan_out,), jnp.float32)
        ws.append(w)
        bs.append(b)
    return ws, bs


def pack_params(ws, bs):
    """ONE-TIME packing (outside the hot path): chained-offset zero-padded (128,128) tiles."""
    w_packed = jnp.zeros((N_LAYERS, F_PAD, F_PAD), jnp.float32)
    b_packed = jnp.zeros((N_LAYERS, 1, F_PAD), jnp.float32)
    for li in range(N_LAYERS):
        fan_in, fan_out = DIMS[li], DIMS[li + 1]
        io, oo = IN_OFF[li], OUT_OFF[li]
        w_packed = w_packed.at[li, io:io + fan_in, oo:oo + fan_out].set(ws[li].T)
        b_packed = b_packed.at[li, 0, oo:oo + fan_out].set(bs[li])
    return jax.device_put(w_packed), jax.device_put(b_packed)


@jax.jit
def mlp_forward(x, w_packed, b_packed):
    B, D = x.shape
    # Batch tile: big enough to keep per-step output DMA large, but capped at ceil(B/2)
    # (rounded to a sublane multiple) so mid/large batches always give >= 2 'parallel'
    # grid steps -> both v7x TensorCores get work; weights stay VMEM-resident across steps.
    tb = max(8, min(TILE_B, _round_up(pl.cdiv(B, 2), 8)))
    Bp = _round_up(B, tb)
    x32 = x.astype(jnp.float32)
    if Bp != B:
        # Row-only pad (12 lanes per row) so every grid step is fully in-bounds.
        x32 = jnp.zeros((Bp, D), jnp.float32).at[:B, :].set(x32)
    # TODO(synk): in a real pipeline the producer would emit the batch already padded to a
    # tile multiple, removing this copy entirely.

    out = pl.pallas_call(
        mlp_kernel,
        grid=(Bp // tb,),
        in_specs=[
            pl.BlockSpec((tb, IN_DIM), lambda i: (i, 0)),                   # batch tile
            pl.BlockSpec((N_LAYERS, F_PAD, F_PAD), lambda i: (0, 0, 0)),    # resident weights
            pl.BlockSpec((N_LAYERS, 1, F_PAD), lambda i: (0, 0, 0)),        # resident biases
        ],
        out_specs=pl.BlockSpec((tb, F_PAD), lambda i: (i, 0)),
        out_shape=jax.ShapeDtypeStruct((Bp, F_PAD), jnp.float32),
        compiler_params=pltpu.CompilerParams(
            dimension_semantics=("parallel",),
        ),
    )(x32, w_packed, b_packed)

    # Lane-range slices back to the true per-layer activation shapes.
    acts = [out[:B, OUT_OFF[li]:OUT_OFF[li] + DIMS[li + 1]] for li in range(N_LAYERS)]
    return acts[-1], acts


def reference_forward_np(x, ws, bs):
    """Pure-numpy (float64) reference, independent of TPU matmul precision."""
    h = np.asarray(x, dtype=np.float64)
    acts = []
    for li in range(N_LAYERS - 1):
        h = np.tanh(h @ np.asarray(ws[li], np.float64).T + np.asarray(bs[li], np.float64))
        acts.append(h)
    logits = h @ np.asarray(ws[-1], np.float64).T + np.asarray(bs[-1], np.float64)
    e = np.exp(logits - logits.max(axis=1, keepdims=True))
    probs = e / e.sum(axis=1, keepdims=True)
    acts.append(probs)
    return probs, acts


def _check(x, ws, bs, w_packed, b_packed):
    probs, acts = mlp_forward(x, w_packed, b_packed)
    probs = jax.block_until_ready(probs)
    acts = jax.block_until_ready(acts)
    ref_probs, ref_acts = reference_forward_np(np.asarray(x), ws, bs)
    B = x.shape[0]
    assert probs.shape == (B, N_CLASSES)
    assert np.allclose(np.asarray(probs), ref_probs, atol=1e-4), "softmax output mismatch"
    for a, r in zip(acts, ref_acts):
        assert a.shape == r.shape, (a.shape, r.shape)
        assert np.allclose(np.asarray(a), r, atol=1e-4), "intermediate activation mismatch"
    # simplex check (as in the PyTorch assert)
    assert np.all(np.asarray(probs) >= 0.0)
    assert np.all(np.abs(np.asarray(probs).sum(axis=1) - 1.0) < 1e-5)


if __name__ == "__main__":
    key = jax.random.PRNGKey(0)
    pkey, xkey1, xkey2 = jax.random.split(key, 3)
    ws, bs = init_params(pkey)
    # Param packing hoisted out of the per-call path (done once, stored padded).
    w_packed, b_packed = pack_params(ws, bs)

    # Small batch (single grid step).
    _check(jax.random.normal(xkey1, (2, IN_DIM), jnp.float32), ws, bs, w_packed, b_packed)
    # Non-tile-multiple batch exercising a 2-step 'parallel' grid + row padding.
    _check(jax.random.normal(xkey2, (300, IN_DIM), jnp.float32), ws, bs, w_packed, b_packed)

    print("KERNEL_OK")
</pallas_src>

<mosaic_0001>
module attributes {stable_mosaic.version = 11 : i64} {
  func.func @mlp_kernel(%arg0: i32, %arg1: memref<8x12xf32, #tpu.memory_space<vmem>>, %arg2: memref<8x128x128xf32, #tpu.memory_space<vmem>>, %arg3: memref<8x1x128xf32, #tpu.memory_space<vmem>>, %arg4: memref<8x128xf32, #tpu.memory_space<vmem>>) attributes {dimension_semantics = [#tpu.dimension_semantics<parallel>], iteration_bounds = array<i64: 1>, scalar_prefetch = 0 : i64, scratch_operands = 0 : i64, tpu.core_type = #tpu.core_type<tc>, window_params = [{transform_indices = @transform_0, window_bounds = array<i64: 8, 12>}, {pipeline_mode = #tpu.pipeline_mode<synchronous>, transform_indices = @transform_1, window_bounds = array<i64: 8, 128, 128>}, {pipeline_mode = #tpu.pipeline_mode<synchronous>, transform_indices = @transform_2, window_bounds = array<i64: 8, 1, 128>}, {transform_indices = @transform_3, window_bounds = array<i64: 8, 128>}]} {
    %cst = arith.constant 0.000000e+00 : f32
    %0 = vector.broadcast %cst : f32 to vector<8x128xf32>
    %c0 = arith.constant 0 : index
    %c0_0 = arith.constant 0 : index
    %1 = vector.load %arg4[%c0, %c0_0] : memref<8x128xf32, #tpu.memory_space<vmem>>, vector<8x128xf32>
    tpu.vector_store %arg4[%c0, %c0_0], %0 {strides = array<i32>} : memref<8x128xf32, #tpu.memory_space<vmem>>, vector<8x128xf32>,
    %c0_1 = arith.constant 0 : index
    %c0_2 = arith.constant 0 : index
    %2 = vector.load %arg1[%c0_1, %c0_2] : memref<8x12xf32, #tpu.memory_space<vmem>>, vector<8x12xf32>
    %c0_3 = arith.constant 0 : index
    %c0_4 = arith.constant 0 : index
    %3 = vector.load %arg4[%c0_3, %c0_4] : memref<8x128xf32, #tpu.memory_space<vmem>>, vector<8x12xf32>
    tpu.vector_store %arg4[%c0_3, %c0_4], %2 {strides = array<i32>} : memref<8x128xf32, #tpu.memory_space<vmem>>, vector<8x12xf32>,
    %c0_5 = arith.constant 0 : index
    %c0_6 = arith.constant 0 : index
    %4 = vector.load %arg4[%c0_5, %c0_6] : memref<8x128xf32, #tpu.memory_space<vmem>>, vector<8x128xf32>
    %c0_7 = arith.constant 0 : index
    %c0_8 = arith.constant 0 : index
    %c0_9 = arith.constant 0 : index
    %5 = vector.load %arg2[%c0_7, %c0_8, %c0_9] : memref<8x128x128xf32, #tpu.memory_space<vmem>>, vector<1x128x128xf32>
    %6 = vector.shape_cast %5 : vector<1x128x128xf32> to vector<128x128xf32>
    %cst_10 = arith.constant dense<0.000000e+00> : vector<8x128xf32>
    %7 = tpu.matmul %4, %6, %cst_10 {dimension_numbers = #tpu.dot_dimension_numbers<[1], [0], [0], [1], [0, 0, 1, 1], [], []>, precision = #tpu.contract_precision<fp32>} : vector<8x128xf32>, vector<128x128xf32>, vector<8x128xf32> -> vector<8x128xf32>
    %c0_11 = arith.constant 0 : index
    %c0_12 = arith.constant 0 : index
    %c0_13 = arith.constant 0 : index
    %8 = vector.load %arg3[%c0_11, %c0_12, %c0_13] : memref<8x1x128xf32, #tpu.memory_space<vmem>>, vector<1x1x128xf32>
    %9 = vector.shape_cast %8 : vector<1x1x128xf32> to vector<1x128xf32>
    %10 = vector.broadcast %9 : vector<1x128xf32> to vector<8x128xf32>
    %11 = arith.addf %7, %10 : vector<8x128xf32>
    %12 = math.tanh %11 : vector<8x128xf32>
    %13 = arith.addf %4, %12 : vector<8x128xf32>
    %c1 = arith.constant 1 : index
    %c0_14 = arith.constant 0 : index
    %c0_15 = arith.constant 0 : index
    %14 = vector.load %arg2[%c1, %c0_14, %c0_15] : memref<8x128x128xf32, #tpu.memory_space<vmem>>, vector<1x128x128xf32>
    %15 = vector.shape_cast %14 : vector<1x128x128xf32> to vector<128x128xf32>
    %cst_16 = arith.constant dense<0.000000e+00> : vector<8x128xf32>
    %16 = tpu.matmul %13, %15, %cst_16 {dimension_numbers = #tpu.dot_dimension_numbers<[1], [0], [0], [1], [0, 0, 1, 1], [], []>, precision = #tpu.contract_precision<fp32>} : vector<8x128xf32>, vector<128x128xf32>, vector<8x128xf32> -> vector<8x128xf32>
    %c1_17 = arith.constant 1 : index
    %c0_18 = arith.constant 0 : index
    %c0_19 = arith.constant 0 : index
    %17 = vector.load %arg3[%c1_17, %c0_18, %c0_19] : memref<8x1x128xf32, #tpu.memory_space<vmem>>, vector<1x1x128xf32>
    %18 = vector.shape_cast %17 : vector<1x1x128xf32> to vector<1x128xf32>
    %19 = vector.broadcast %18 : vector<1x128xf32> to vector<8x128xf32>
    %20 = arith.addf %16, %19 : vector<8x128xf32>
    %21 = math.tanh %20 : vector<8x128xf32>
    %22 = arith.addf %13, %21 : vector<8x128xf32>
    %c2 = arith.constant 2 : index
    %c0_20 = arith.constant 0 : index
    %c0_21 = arith.constant 0 : index
    %23 = vector.load %arg2[%c2, %c0_20, %c0_21] : memref<8x128x128xf32, #tpu.memory_space<vmem>>, vector<1x128x128xf32>
    %24 = vector.shape_cast %23 : vector<1x128x128xf32> to vector<128x128xf32>
    %cst_22 = arith.constant dense<0.000000e+00> : vector<8x128xf32>
    %25 = tpu.matmul %22, %24, %cst_22 {dimension_numbers = #tpu.dot_dimension_numbers<[1], [0], [0], [1], [0, 0, 1, 1], [], []>, precision = #tpu.contract_precision<fp32>} : vector<8x128xf32>, vector<128x128xf32>, vector<8x128xf32> -> vector<8x128xf32>
    %c2_23 = arith.constant 2 : index
    %c0_24 = arith.constant 0 : index
    %c0_25 = arith.constant 0 : index
    %26 = vector.load %arg3[%c2_23, %c0_24, %c0_25] : memref<8x1x128xf32, #tpu.memory_space<vmem>>, vector<1x1x128xf32>
    %27 = vector.shape_cast %26 : vector<1x1x128xf32> to vector<1x128xf32>
    %28 = vector.broadcast %27 : vector<1x128xf32> to vector<8x128xf32>
    %29 = arith.addf %25, %28 : vector<8x128xf32>
    %30 = math.tanh %29 : vector<8x128xf32>
    %31 = arith.addf %22, %30 : vector<8x128xf32>
    %c3 = arith.constant 3 : index
    %c0_26 = arith.constant 0 : index
    %c0_27 = arith.constant 0 : index
    %32 = vector.load %arg2[%c3, %c0_26, %c0_27] : memref<8x128x128xf32, #tpu.memory_space<vmem>>, vector<1x128x128xf32>
    %33 = vector.shape_cast %32 : vector<1x128x128xf32> to vector<128x128xf32>
    %cst_28 = arith.constant dense<0.000000e+00> : vector<8x128xf32>
    %34 = tpu.matmul %31, %33, %cst_28 {dimension_numbers = #tpu.dot_dimension_numbers<[1], [0], [0], [1], [0, 0, 1, 1], [], []>, precision = #tpu.contract_precision<fp32>} : vector<8x128xf32>, vector<128x128xf32>, vector<8x128xf32> -> vector<8x128xf32>
    %c3_29 = arith.constant 3 : index
    %c0_30 = arith.constant 0 : index
    %c0_31 = arith.constant 0 : index
    %35 = vector.load %arg3[%c3_29, %c0_30, %c0_31] : memref<8x1x128xf32, #tpu.memory_space<vmem>>, vector<1x1x128xf32>
    %36 = vector.shape_cast %35 : vector<1x1x128xf32> to vector<1x128xf32>
    %37 = vector.broadcast %36 : vector<1x128xf32> to vector<8x128xf32>
    %38 = arith.addf %34, %37 : vector<8x128xf32>
    %39 = math.tanh %38 : vector<8x128xf32>
    %40 = arith.addf %31, %39 : vector<8x128xf32>
    %c4 = arith.constant 4 : index
    %c0_32 = arith.constant 0 : index
    %c0_33 = arith.constant 0 : index
    %41 = vector.load %arg2[%c4, %c0_32, %c0_33] : memref<8x128x128xf32, #tpu.memory_space<vmem>>, vector<1x128x128xf32>
    %42 = vector.shape_cast %41 : vector<1x128x128xf32> to vector<128x128xf32>
    %cst_34 = arith.constant dense<0.000000e+00> : vector<8x128xf32>
    %43 = tpu.matmul %40, %42, %cst_34 {dimension_numbers = #tpu.dot_dimension_numbers<[1], [0], [0], [1], [0, 0, 1, 1], [], []>, precision = #tpu.contract_precision<fp32>} : vector<8x128xf32>, vector<128x128xf32>, vector<8x128xf32> -> vector<8x128xf32>
    %c4_35 = arith.constant 4 : index
    %c0_36 = arith.constant 0 : index
    %c0_37 = arith.constant 0 : index
    %44 = vector.load %arg3[%c4_35, %c0_36, %c0_37] : memref<8x1x128xf32, #tpu.memory_space<vmem>>, vector<1x1x128xf32>
    %45 = vector.shape_cast %44 : vector<1x1x128xf32> to vector<1x128xf32>
    %46 = vector.broadcast %45 : vector<1x128xf32> to vector<8x128xf32>
    %47 = arith.addf %43, %46 : vector<8x128xf32>
    %48 = math.tanh %47 : vector<8x128xf32>
    %49 = arith.addf %40, %48 : vector<8x128xf32>
    %c5 = arith.constant 5 : index
    %c0_38 = arith.constant 0 : index
    %c0_39 = arith.constant 0 : index
    %50 = vector.load %arg2[%c5, %c0_38, %c0_39] : memref<8x128x128xf32, #tpu.memory_space<vmem>>, vector<1x128x128xf32>
    %51 = vector.shape_cast %50 : vector<1x128x128xf32> to vector<128x128xf32>
    %cst_40 = arith.constant dense<0.000000e+00> : vector<8x128xf32>
    %52 = tpu.matmul %49, %51, %cst_40 {dimension_numbers = #tpu.dot_dimension_numbers<[1], [0], [0], [1], [0, 0, 1, 1], [], []>, precision = #tpu.contract_precision<fp32>} : vector<8x128xf32>, vector<128x128xf32>, vector<8x128xf32> -> vector<8x128xf32>
    %c5_41 = arith.constant 5 : index
    %c0_42 = arith.constant 0 : index
    %c0_43 = arith.constant 0 : index
    %53 = vector.load %arg3[%c5_41, %c0_42, %c0_43] : memref<8x1x128xf32, #tpu.memory_space<vmem>>, vector<1x1x128xf32>
    %54 = vector.shape_cast %53 : vector<1x1x128xf32> to vector<1x128xf32>
    %55 = vector.broadcast %54 : vector<1x128xf32> to vector<8x128xf32>
    %56 = arith.addf %52, %55 : vector<8x128xf32>
    %57 = math.tanh %56 : vector<8x128xf32>
    %58 = arith.addf %49, %57 : vector<8x128xf32>
    %c6 = arith.constant 6 : index
    %c0_44 = arith.constant 0 : index
    %c0_45 = arith.constant 0 : index
    %59 = vector.load %arg2[%c6, %c0_44, %c0_45] : memref<8x128x128xf32, #tpu.memory_space<vmem>>, vector<1x128x128xf32>
    %60 = vector.shape_cast %59 : vector<1x128x128xf32> to vector<128x128xf32>
    %cst_46 = arith.constant dense<0.000000e+00> : vector<8x128xf32>
    %61 = tpu.matmul %58, %60, %cst_46 {dimension_numbers = #tpu.dot_dimension_numbers<[1], [0], [0], [1], [0, 0, 1, 1], [], []>, precision = #tpu.contract_precision<fp32>} : vector<8x128xf32>, vector<128x128xf32>, vector<8x128xf32> -> vector<8x128xf32>
    %c6_47 = arith.constant 6 : index
    %c0_48 = arith.constant 0 : index
    %c0_49 = arith.constant 0 : index
    %62 = vector.load %arg3[%c6_47, %c0_48, %c0_49] : memref<8x1x128xf32, #tpu.memory_space<vmem>>, vector<1x1x128xf32>
    %63 = vector.shape_cast %62 : vector<1x1x128xf32> to vector<1x128xf32>
    %64 = vector.broadcast %63 : vector<1x128xf32> to vector<8x128xf32>
    %65 = arith.addf %61, %64 : vector<8x128xf32>
    %66 = math.tanh %65 : vector<8x128xf32>
    %67 = arith.addf %58, %66 : vector<8x128xf32>
    %c7 = arith.constant 7 : index
    %c0_50 = arith.constant 0 : index
    %c0_51 = arith.constant 0 : index
    %68 = vector.load %arg2[%c7, %c0_50, %c0_51] : memref<8x128x128xf32, #tpu.memory_space<vmem>>, vector<1x128x128xf32>
    %69 = vector.shape_cast %68 : vector<1x128x128xf32> to vector<128x128xf32>
    %cst_52 = arith.constant dense<0.000000e+00> : vector<8x128xf32>
    %70 = tpu.matmul %67, %69, %cst_52 {dimension_numbers = #tpu.dot_dimension_numbers<[1], [0], [0], [1], [0, 0, 1, 1], [], []>, precision = #tpu.contract_precision<fp32>} : vector<8x128xf32>, vector<128x128xf32>, vector<8x128xf32> -> vector<8x128xf32>
    %c7_53 = arith.constant 7 : index
    %c0_54 = arith.constant 0 : index
    %c0_55 = arith.constant 0 : index
    %71 = vector.load %arg3[%c7_53, %c0_54, %c0_55] : memref<8x1x128xf32, #tpu.memory_space<vmem>>, vector<1x1x128xf32>
    %72 = vector.shape_cast %71 : vector<1x1x128xf32> to vector<1x128xf32>
    %73 = vector.broadcast %72 : vector<1x128xf32> to vector<8x128xf32>
    %74 = arith.addf %70, %73 : vector<8x128xf32>
    %75 = tpu.iota {dimensions = array<i32: 1>} : vector<8x128xi32>
    %c111_i32 = arith.constant 111 : i32
    %76 = vector.broadcast %c111_i32 : i32 to vector<8x128xi32>
    %77 = arith.cmpi sge, %75, %76 : vector<8x128xi32>
    %c113_i32 = arith.constant 113 : i32
    %78 = vector.broadcast %c113_i32 : i32 to vector<8x128xi32>
    %79 = arith.cmpi slt, %75, %78 : vector<8x128xi32>
    %80 = arith.andi %77, %79 : vector<8x128xi1>
    %cst_56 = arith.constant 0xFF800000 : f32
    %81 = vector.broadcast %cst_56 : f32 to vector<8x128xf32>
    %82 = arith.select %80, %74, %81 : vector<8x128xi1>, vector<8x128xf32>
    %cst_57 = arith.constant dense<0xFF800000> : vector<8xf32>
    %83 = vector.multi_reduction <maximumf>, %82, %cst_57 [1] : vector<8x128xf32> to vector<8xf32>
    %84 = vector.shape_cast %83 : vector<8xf32> to vector<8x1xf32>
    %85 = vector.broadcast %84 : vector<8x1xf32> to vector<8x128xf32>
    %86 = arith.subf %74, %85 : vector<8x128xf32>
    %87 = math.exp %86 : vector<8x128xf32>
    %cst_58 = arith.constant 0.000000e+00 : f32
    %88 = vector.broadcast %cst_58 : f32 to vector<8x128xf32>
    %89 = arith.select %80, %87, %88 : vector<8x128xi1>, vector<8x128xf32>
    %cst_59 = arith.constant dense<0.000000e+00> : vector<8xf32>
    %90 = vector.multi_reduction <add>, %89, %cst_59 [1] : vector<8x128xf32> to vector<8xf32>
    %91 = vector.shape_cast %90 : vector<8xf32> to vector<8x1xf32>
    %92 = vector.broadcast %91 : vector<8x1xf32> to vector<8x128xf32>
    %93 = arith.divf %89, %92 : vector<8x128xf32>
    %94 = arith.addf %67, %93 : vector<8x128xf32>
    %c0_60 = arith.constant 0 : index
    %c0_61 = arith.constant 0 : index
    %95 = vector.load %arg4[%c0_60, %c0_61] : memref<8x128xf32, #tpu.memory_space<vmem>>, vector<8x128xf32>
    tpu.vector_store %arg4[%c0_60, %c0_61], %94 {strides = array<i32>} : memref<8x128xf32, #tpu.memory_space<vmem>>, vector<8x128xf32>,
    return
  }
  func.func @transform_0(%arg0: i32) -> (i32, i32) {
    %c0_i32 = arith.constant 0 : i32
    %c0_i32_0 = arith.constant 0 : i32
    return %arg0, %c0_i32 : i32, i32
  }
  func.func @transform_1(%arg0: i32) -> (i32, i32, i32) {
    %c0_i32 = arith.constant 0 : i32
    %c0_i32_0 = arith.constant 0 : i32
    %c0_i32_1 = arith.constant 0 : i32
    %c0_i32_2 = arith.constant 0 : i32
    return %c0_i32, %c0_i32_0, %c0_i32_1 : i32, i32, i32
  }
  func.func @transform_2(%arg0: i32) -> (i32, i32, i32) {
    %c0_i32 = arith.constant 0 : i32
    %c0_i32_0 = arith.constant 0 : i32
    %c0_i32_1 = arith.constant 0 : i32
    %c0_i32_2 = arith.constant 0 : i32
    return %c0_i32, %c0_i32_0, %c0_i32_1 : i32, i32, i32
  }
  func.func @transform_3(%arg0: i32) -> (i32, i32) {
    %c0_i32 = arith.constant 0 : i32
    %c0_i32_0 = arith.constant 0 : i32
    return %arg0, %c0_i32 : i32, i32
  }
}

</mosaic_0001>

<llo_original>
// kernel: mlp_forward.1
$region0: #{mlp_forward.1}
  #allocation0 [shape = 'u32[]', space=smem, size = 0x4, offset = 0x4, fixed_abs, tag = 'smem constant byte address 0x4 - core index']
  #allocation1 [shape = 'u32[144,128]{1,0:T(1,128)}', space=vmem, size = 0x12000, scoped, tag = 'internal scratch']
  %s0 = inlined_call_operand.vmem [shape: f32[8,12], index: 0, kind: input, shape index: {}]
  %s1 = inlined_call_operand.hbm [shape: f32[8,128,128], index: 1, kind: input, shape index: {}]
  %s2 = inlined_call_operand.vmem [shape: f32[8,1,128], index: 2, kind: input, shape index: {}]
  %s3 = inlined_call_operand.vmem [shape: f32[8,128], index: 3, kind: output, shape index: {}]
  %s4 = sld [smem:[#allocation0]]
  $region26: #{mlp_forward.1} parent=0
    _
  %s6 = ssub.s32 1, %s4
  %s7 = scalar_select 0, %s6, %s4
  $region1: #{mlp_forward.1} parent=0
    #allocation2 [shape = 'u8[524288]{0}', space=vmem, size = 0x80000, scoped, tag = 'input window, operand 1, single buffered']
    #allocation3 [shape = 's32[1]{0}', space=sflag, size = 0x4, scoped, tag = 'scoped memory for mlp_forward.1']
    %8 = vsyncpa [#allocation3], 0
    // Predicated region
    $region2: #{mlp_forward.1} parent=1 // pred_check
      _
    $region3: #{mlp_forward.1} parent=1 // pred_check_branch
      %10 = sbr.rel (0) target = $region5
    $region4: #{mlp_forward.1} parent=1 // pred_region
      _
    $region5: #{mlp_forward.1} parent=1 // pred_fallthru
      _
    // Predicated region
    $region6: #{mlp_forward.1} parent=1 // pred_check
      _
    $region7: #{mlp_forward.1} parent=1 // pred_check_branch
      %12 = sbr.rel (0) target = $region9
    $region8: #{mlp_forward.1} parent=1 // pred_region
      %s14 = ssub.s32 16384, 16384
      %15 = vsyncadd [#allocation3], %s14
      %s16 = sshll.u32 [#allocation2], 4
      %s17 = int_to_ptr.vmem [resolvable:$true] %s16
      %22 = dma.hbm_to_vmem [thread:$0]  %s1, 16384, %s17, [#allocation3], 128, 128, 8
    $region9: #{mlp_forward.1} parent=1 // pred_fallthru
      _
    // Predicated region
    $region10: #{mlp_forward.1} parent=1 // pred_check
      _
    $region11: #{mlp_forward.1} parent=1 // pred_check_branch
      %24 = sbr.rel (0) target = $region13
    $region12: #{mlp_forward.1} parent=1 // pred_region
      _
    $region13: #{mlp_forward.1} parent=1 // pred_fallthru
      _
    // Predicated region
    $region14: #{mlp_forward.1} parent=1 // pred_check
      _
    $region15: #{mlp_forward.1} parent=1 // pred_check_branch
      %26 = sbr.rel (0) target = $region17
    $region16: #{mlp_forward.1} parent=1 // pred_region
      %27 = dma.done [#allocation3], 16384
    $region17: #{mlp_forward.1} parent=1 // pred_fallthru
      _
    %28 = vst [vmem:[%s3] sm:$0xff] 0.0
    %v29 = vld [vmem:[%s0] sm:$0xff]
    %vm30 = vcmask 97280
    %31 = vst.msk [vmem:[%s3] sm:$0xff] %vm30, %v29
    %v32 = vld [vmem:[%s3] sm:$0xff]
    %v33 = vld [vmem:[#allocation2] sm:$0xff]
    %v34 = vld [vmem:[#allocation2 + $0x8] sm:$0xff]
    %v35 = vld [vmem:[#allocation2 + $0x10] sm:$0xff]
    %v36 = vld [vmem:[#allocation2 + $0x18] sm:$0xff]
    %v37 = vld [vmem:[#allocation2 + $0x20] sm:$0xff]
    %v38 = vld [vmem:[#allocation2 + $0x28] sm:$0xff]
    %v39 = vld [vmem:[#allocation2 + $0x30] sm:$0xff]
    %v40 = vld [vmem:[#allocation2 + $0x38] sm:$0xff]
    %v41 = vld [vmem:[#allocation2 + $0x40] sm:$0xff]
    %v42 = vld [vmem:[#allocation2 + $0x48] sm:$0xff]
    %v43 = vld [vmem:[#allocation2 + $0x50] sm:$0xff]
    %v44 = vld [vmem:[#allocation2 + $0x58] sm:$0xff]
    %v45 = vld [vmem:[#allocation2 + $0x60] sm:$0xff]
    %v46 = vld [vmem:[#allocation2 + $0x68] sm:$0xff]
    %v47 = vld [vmem:[#allocation2 + $0x70] sm:$0xff]
    %v48 = vld [vmem:[#allocation2 + $0x78] sm:$0xff]
    %v49 = vld [vmem:[%s2] sm:$0x1]
    %v51 = vlaneseq
    %v52 = vshrl.u32 %v51, 7
    %v53 = vsub.s32 0, %v52
    %v54 = vrot.slane %v49, %v53
    %56 = vmatprep.subr.mxu0 0.0
    %v57 = vand.u32 %v33, 4294901760
    %58 = vmatpush1.msra.mxu0 %v57
    %59 = vmatprep.subr.mxu0 0.0
    %v60 = vand.u32 %v34, 4294901760
    %61 = vmatpush1.msra.mxu0 %v60
    %62 = vmatprep.subr.mxu0 0.0
    %v63 = vand.u32 %v35, 4294901760
    %64 = vmatpush1.msra.mxu0 %v63
    %65 = vmatprep.subr.mxu0 0.0
    %v66 = vand.u32 %v36, 4294901760
    %67 = vmatpush1.msra.mxu0 %v66
    %68 = vmatprep.subr.mxu0 0.0
    %v69 = vand.u32 %v37, 4294901760
    %70 = vmatpush1.msra.mxu0 %v69
    %71 = vmatprep.subr.mxu0 0.0
    %v72 = vand.u32 %v38, 4294901760
    %73 = vmatpush1.msra.mxu0 %v72
    %74 = vmatprep.subr.mxu0 0.0
    %v75 = vand.u32 %v39, 4294901760
    %76 = vmatpush1.msra.mxu0 %v75
    %77 = vmatprep.subr.mxu0 0.0
    %v78 = vand.u32 %v40, 4294901760
    %79 = vmatpush1.msra.mxu0 %v78
    %80 = vmatprep.subr.mxu0 0.0
    %v81 = vand.u32 %v41, 4294901760
    %82 = vmatpush1.msra.mxu0 %v81
    %83 = vmatprep.subr.mxu0 0.0
    %v84 = vand.u32 %v42, 4294901760
    %85 = vmatpush1.msra.mxu0 %v84
    %86 = vmatprep.subr.mxu0 0.0
    %v87 = vand.u32 %v43, 4294901760
    %88 = vmatpush1.msra.mxu0 %v87
    %89 = vmatprep.subr.mxu0 0.0
    %v90 = vand.u32 %v44, 4294901760
    %91 = vmatpush1.msra.mxu0 %v90
    %92 = vmatprep.subr.mxu0 0.0
    %v93 = vand.u32 %v45, 4294901760
    %94 = vmatpush1.msra.mxu0 %v93
    %95 = vmatprep.subr.mxu0 0.0
    %v96 = vand.u32 %v46, 4294901760
    %97 = vmatpush1.msra.mxu0 %v96
    %98 = vmatprep.subr.mxu0 0.0
    %v99 = vand.u32 %v47, 4294901760
    %100 = vmatpush1.msra.mxu0 %v99
    %101 = vmatprep.subr.mxu0 0.0
    %v102 = vand.u32 %v48, 4294901760
    %103 = vmatpush1.msra.mxu0 %v102
    %104 = vmatprep.subr.mxu0 0.0
    %105 = vmatpush1.msra.mxu0 0.0
    %106 = vmatprep.subr.mxu0 0.0
    %107 = vmatpush1.msra.mxu0 0.0
    %108 = vmatprep.subr.mxu0 0.0
    %109 = vmatpush1.msra.mxu0 0.0
    %110 = vmatprep.subr.mxu0 0.0
    %111 = vmatpush1.msra.mxu0 0.0
    %112 = vmatprep.subr.mxu0 0.0
    %113 = vmatpush1.msra.mxu0 0.0
    %114 = vmatprep.subr.mxu0 0.0
    %115 = vmatpush1.msra.mxu0 0.0
    %116 = vmatprep.subr.mxu0 0.0
    %117 = vmatpush1.msra.mxu0 0.0
    %118 = vmatprep.subr.mxu0 0.0
    %119 = vmatpush1.msra.mxu0 0.0
    %120 = vmatprep.subr.mxu0 0.0
    %121 = vmatpush1.msra.mxu0 0.0
    %122 = vmatprep.subr.mxu0 0.0
    %123 = vmatpush1.msra.mxu0 0.0
    %124 = vmatprep.subr.mxu0 0.0
    %125 = vmatpush1.msra.mxu0 0.0
    %126 = vmatprep.subr.mxu0 0.0
    %127 = vmatpush1.msra.mxu0 0.0
    %128 = vmatprep.subr.mxu0 0.0
    %129 = vmatpush1.msra.mxu0 0.0
    %130 = vmatprep.subr.mxu0 0.0
    %131 = vmatpush1.msra.mxu0 0.0
    %132 = vmatprep.subr.mxu0 0.0
    %133 = vmatpush1.msra.mxu0 0.0
    %134 = vmatprep.subr.mxu0 0.0
    %135 = vmatpush1.msra.mxu0 0.0
    %136 = vmatprep.mubr.f32.mxu0 0.0
    %v137 = vand.u32 %v32, 4294901760
    %v138 = vsub.f32 %v32, %v137
    %v139 = vand.u32 %v138, 4294901760
    %v140 = vsub.f32 %v138, %v139
    %v141 = vand.u32 %v140, 4294901760
    %142 = vmatmul.mubr.f32.gmra.mrb[0].mxu0 %v141
    %v143 = vpop.f32.mrb[0].mxu0
    %v144 = vadd.f32 %v54, %v143
    %v145 = vpop.f32.mrb[0].mxu0
    %146 = vdwg.mxu0
    %147 = vmatprep.subr.mxu0 0.0
    %v148 = vand.u32 %v33, 4294901760
    %v149 = vsub.f32 %v33, %v148
    %v150 = vand.u32 %v149, 4294901760
    %v151 = vsub.f32 %v149, %v150
    %v152 = vand.u32 %v151, 4294901760
    %153 = vmatpush1.msra.mxu0 %v152
    %154 = vmatprep.subr.mxu0 0.0
    %v155 = vand.u32 %v34, 4294901760
    %v156 = vsub.f32 %v34, %v155
    %v157 = vand.u32 %v156, 4294901760
    %v158 = vsub.f32 %v156, %v157
    %v159 = vand.u32 %v158, 4294901760
    %160 = vmatpush1.msra.mxu0 %v159
    %161 = vmatprep.subr.mxu0 0.0
    %v162 = vand.u32 %v35, 4294901760
    %v163 = vsub.f32 %v35, %v162
    %v164 = vand.u32 %v163, 4294901760
    %v165 = vsub.f32 %v163, %v164
    %v166 = vand.u32 %v165, 4294901760
    %167 = vmatpush1.msra.mxu0 %v166
    %168 = vmatprep.subr.mxu0 0.0
    %v169 = vand.u32 %v36, 4294901760
    %v170 = vsub.f32 %v36, %v169
    %v171 = vand.u32 %v170, 4294901760
    %v172 = vsub.f32 %v170, %v171
    %v173 = vand.u32 %v172, 4294901760
    %174 = vmatpush1.msra.mxu0 %v173
    %175 = vmatprep.subr.mxu0 0.0
    %v176 = vand.u32 %v37, 4294901760
    %v177 = vsub.f32 %v37, %v176
    %v178 = vand.u32 %v177, 4294901760
    %v179 = vsub.f32 %v177, %v178
    %v180 = vand.u32 %v179, 4294901760
    %181 = vmatpush1.msra.mxu0 %v180
    %182 = vmatprep.subr.mxu0 0.0
    %v183 = vand.u32 %v38, 4294901760
    %v184 = vsub.f32 %v38, %v183
    %v185 = vand.u32 %v184, 4294901760
    %v186 = vsub.f32 %v184, %v185
    %v187 = vand.u32 %v186, 4294901760
    %188 = vmatpush1.msra.mxu0 %v187
    %189 = vmatprep.subr.mxu0 0.0
    %v190 = vand.u32 %v39, 4294901760
    %v191 = vsub.f32 %v39, %v190
    %v192 = vand.u32 %v191, 4294901760
    %v193 = vsub.f32 %v191, %v192
    %v194 = vand.u32 %v193, 4294901760
    %195 = vmatpush1.msra.mxu0 %v194
    %196 = vmatprep.subr.mxu0 0.0
    %v197 = vand.u32 %v40, 4294901760
    %v198 = vsub.f32 %v40, %v197
    %v199 = vand.u32 %v198, 4294901760
    %v200 = vsub.f32 %v198, %v199
    %v201 = vand.u32 %v200, 4294901760
    %202 = vmatpush1.msra.mxu0 %v201
    %203 = vmatprep.subr.mxu0 0.0
    %v204 = vand.u32 %v41, 4294901760
    %v205 = vsub.f32 %v41, %v204
    %v206 = vand.u32 %v205, 4294901760
    %v207 = vsub.f32 %v205, %v206
    %v208 = vand.u32 %v207, 4294901760
    %209 = vmatpush1.msra.mxu0 %v208
    %210 = vmatprep.subr.mxu0 0.0
    %v211 = vand.u32 %v42, 4294901760
    %v212 = vsub.f32 %v42, %v211
    %v213 = vand.u32 %v212, 4294901760
    %v214 = vsub.f32 %v212, %v213
    %v215 = vand.u32 %v214, 4294901760
    %216 = vmatpush1.msra.mxu0 %v215
    %217 = vmatprep.subr.mxu0 0.0
    %v218 = vand.u32 %v43, 4294901760
    %v219 = vsub.f32 %v43, %v218
    %v220 = vand.u32 %v219, 4294901760
    %v221 = vsub.f32 %v219, %v220
    %v222 = vand.u32 %v221, 4294901760
    %223 = vmatpush1.msra.mxu0 %v222
    %224 = vmatprep.subr.mxu0 0.0
    %v225 = vand.u32 %v44, 4294901760
    %v226 = vsub.f32 %v44, %v225
    %v227 = vand.u32 %v226, 4294901760
    %v228 = vsub.f32 %v226, %v227
    %v229 = vand.u32 %v228, 4294901760
    %230 = vmatpush1.msra.mxu0 %v229
    %231 = vmatprep.subr.mxu0 0.0
    %v232 = vand.u32 %v45, 4294901760
    %v233 = vsub.f32 %v45, %v232
    %v234 = vand.u32 %v233, 4294901760
    %v235 = vsub.f32 %v233, %v234
    %v236 = vand.u32 %v235, 4294901760
    %237 = vmatpush1.msra.mxu0 %v236
    %238 = vmatprep.subr.mxu0 0.0
    %v239 = vand.u32 %v46, 4294901760
    %v240 = vsub.f32 %v46, %v239
    %v241 = vand.u32 %v240, 4294901760
    %v242 = vsub.f32 %v240, %v241
    %v243 = vand.u32 %v242, 4294901760
    %244 = vmatpush1.msra.mxu0 %v243
    %245 = vmatprep.subr.mxu0 0.0
    %v246 = vand.u32 %v47, 4294901760
    %v247 = vsub.f32 %v47, %v246
    %v248 = vand.u32 %v247, 4294901760
    %v249 = vsub.f32 %v247, %v248
    %v250 = vand.u32 %v249, 4294901760
    %251 = vmatpush1.msra.mxu0 %v250
    %252 = vmatprep.subr.mxu0 0.0
    %v253 = vand.u32 %v48, 4294901760
    %v254 = vsub.f32 %v48, %v253
    %v255 = vand.u32 %v254, 4294901760
    %v256 = vsub.f32 %v254, %v255
    %v257 = vand.u32 %v256, 4294901760
    %258 = vmatpush1.msra.mxu0 %v257
    %259 = vmatprep.subr.mxu0 0.0
    %260 = vmatpush1.msra.mxu0 0.0
    %261 = vmatprep.subr.mxu0 0.0
    %262 = vmatpush1.msra.mxu0 0.0
    %263 = vmatprep.subr.mxu0 0.0
    %264 = vmatpush1.msra.mxu0 0.0
    %265 = vmatprep.subr.mxu0 0.0
    %266 = vmatpush1.msra.mxu0 0.0
    %267 = vmatprep.subr.mxu0 0.0
    %268 = vmatpush1.msra.mxu0 0.0
    %269 = vmatprep.subr.mxu0 0.0
    %270 = vmatpush1.msra.mxu0 0.0
    %271 = vmatprep.subr.mxu0 0.0
    %272 = vmatpush1.msra.mxu0 0.0
    %273 = vmatprep.subr.mxu0 0.0
    %274 = vmatpush1.msra.mxu0 0.0
    %275 = vmatprep.subr.mxu0 0.0
    %276 = vmatpush1.msra.mxu0 0.0
    %277 = vmatprep.subr.mxu0 0.0
    %278 = vmatpush1.msra.mxu0 0.0
    %279 = vmatprep.subr.mxu0 0.0
    %280 = vmatpush1.msra.mxu0 0.0
    %281 = vmatprep.subr.mxu0 0.0
    %282 = vmatpush1.msra.mxu0 0.0
    %283 = vmatprep.subr.mxu0 0.0
    %284 = vmatpush1.msra.mxu0 0.0
    %285 = vmatprep.subr.mxu0 0.0
    %286 = vmatpush1.msra.mxu0 0.0
    %287 = vmatprep.subr.mxu0 0.0
    %288 = vmatpush1.msra.mxu0 0.0
    %289 = vmatprep.subr.mxu0 0.0
    %290 = vmatpush1.msra.mxu0 0.0
    %291 = vmatprep.mubr.f32.mxu0 0.0
    %v292 = vand.u32 %v32, 4294901760
    %293 = vmatmul.mubr.f32.gmra.mrb[0].mxu0 %v292
    %v294 = vpop.f32.mrb[0].mxu0
    %v295 = vadd.f32 %v144, %v294
    %v296 = vpop.f32.mrb[0].mxu0
    %297 = vdwg.mxu0
    %298 = vmatprep.subr.mxu0 0.0
    %v299 = vand.u32 %v33, 4294901760
    %v300 = vsub.f32 %v33, %v299
    %301 = vmatpush1.msra.mxu0 %v300
    %302 = vmatprep.subr.mxu0 0.0
    %v303 = vand.u32 %v34, 4294901760
    %v304 = vsub.f32 %v34, %v303
    %305 = vmatpush1.msra.mxu0 %v304
    %306 = vmatprep.subr.mxu0 0.0
    %v307 = vand.u32 %v35, 4294901760
    %v308 = vsub.f32 %v35, %v307
    %309 = vmatpush1.msra.mxu0 %v308
    %310 = vmatprep.subr.mxu0 0.0
    %v311 = vand.u32 %v36, 4294901760
    %v312 = vsub.f32 %v36, %v311
    %313 = vmatpush1.msra.mxu0 %v312
    %314 = vmatprep.subr.mxu0 0.0
    %v315 = vand.u32 %v37, 4294901760
    %v316 = vsub.f32 %v37, %v315
    %317 = vmatpush1.msra.mxu0 %v316
    %318 = vmatprep.subr.mxu0 0.0
    %v319 = vand.u32 %v38, 4294901760
    %v320 = vsub.f32 %v38, %v319
    %321 = vmatpush1.msra.mxu0 %v320
    %322 = vmatprep.subr.mxu0 0.0
    %v323 = vand.u32 %v39, 4294901760
    %v324 = vsub.f32 %v39, %v323
    %325 = vmatpush1.msra.mxu0 %v324
    %326 = vmatprep.subr.mxu0 0.0
    %v327 = vand.u32 %v40, 4294901760
    %v328 = vsub.f32 %v40, %v327
    %329 = vmatpush1.msra.mxu0 %v328
    %330 = vmatprep.subr.mxu0 0.0
    %v331 = vand.u32 %v41, 4294901760
    %v332 = vsub.f32 %v41, %v331
    %333 = vmatpush1.msra.mxu0 %v332
    %334 = vmatprep.subr.mxu0 0.0
    %v335 = vand.u32 %v42, 4294901760
    %v336 = vsub.f32 %v42, %v335
    %337 = vmatpush1.msra.mxu0 %v336
    %338 = vmatprep.subr.mxu0 0.0
    %v339 = vand.u32 %v43, 4294901760
    %v340 = vsub.f32 %v43, %v339
    %341 = vmatpush1.msra.mxu0 %v340
    %342 = vmatprep.subr.mxu0 0.0
    %v343 = vand.u32 %v44, 4294901760
    %v344 = vsub.f32 %v44, %v343
    %345 = vmatpush1.msra.mxu0 %v344
    %346 = vmatprep.subr.mxu0 0.0
    %v347 = vand.u32 %v45, 4294901760
    %v348 = vsub.f32 %v45, %v347
    %349 = vmatpush1.msra.mxu0 %v348
    %350 = vmatprep.subr.mxu0 0.0
    %v351 = vand.u32 %v46, 4294901760
    %v352 = vsub.f32 %v46, %v351
    %353 = vmatpush1.msra.mxu0 %v352
    %354 = vmatprep.subr.mxu0 0.0
    %v355 = vand.u32 %v47, 4294901760
    %v356 = vsub.f32 %v47, %v355
    %357 = vmatpush1.msra.mxu0 %v356
    %358 = vmatprep.subr.mxu0 0.0
    %v359 = vand.u32 %v48, 4294901760
    %v360 = vsub.f32 %v48, %v359
    %361 = vmatpush1.msra.mxu0 %v360
    %362 = vmatprep.subr.mxu0 0.0
    %363 = vmatpush1.msra.mxu0 0.0
    %364 = vmatprep.subr.mxu0 0.0
    %365 = vmatpush1.msra.mxu0 0.0
    %366 = vmatprep.subr.mxu0 0.0
    %367 = vmatpush1.msra.mxu0 0.0
    %368 = vmatprep.subr.mxu0 0.0
    %369 = vmatpush1.msra.mxu0 0.0
    %370 = vmatprep.subr.mxu0 0.0
    %371 = vmatpush1.msra.mxu0 0.0
    %372 = vmatprep.subr.mxu0 0.0
    %373 = vmatpush1.msra.mxu0 0.0
    %374 = vmatprep.subr.mxu0 0.0
    %375 = vmatpush1.msra.mxu0 0.0
    %376 = vmatprep.subr.mxu0 0.0
    %377 = vmatpush1.msra.mxu0 0.0
    %378 = vmatprep.subr.mxu0 0.0
    %379 = vmatpush1.msra.mxu0 0.0
    %380 = vmatprep.subr.mxu0 0.0
    %381 = vmatpush1.msra.mxu0 0.0
    %382 = vmatprep.subr.mxu0 0.0
    %383 = vmatpush1.msra.mxu0 0.0
    %384 = vmatprep.subr.mxu0 0.0
    %385 = vmatpush1.msra.mxu0 0.0
    %386 = vmatprep.subr.mxu0 0.0
    %387 = vmatpush1.msra.mxu0 0.0
    %388 = vmatprep.subr.mxu0 0.0
    %389 = vmatpush1.msra.mxu0 0.0
    %390 = vmatprep.subr.mxu0 0.0
    %391 = vmatpush1.msra.mxu0 0.0
    %392 = vmatprep.subr.mxu0 0.0
    %393 = vmatpush1.msra.mxu0 0.0
    %394 = vmatprep.mubr.f32.mxu0 0.0
    %v395 = vand.u32 %v32, 4294901760
    %v396 = vsub.f32 %v32, %v395
    %397 = vmatmul.mubr.f32.gmra.mrb[0].mxu0 %v396
    %v398 = vpop.f32.mrb[0].mxu0
    %v399 = vadd.f32 %v295, %v398
    %v400 = vpop.f32.mrb[0].mxu0
    %401 = vdwg.mxu0
    %402 = vmatprep.subr.mxu0 0.0
    %v403 = vand.u32 %v33, 4294901760
    %404 = vmatpush1.msra.mxu0 %v403
    %405 = vmatprep.subr.mxu0 0.0
    %v406 = vand.u32 %v34, 4294901760
    %407 = vmatpush1.msra.mxu0 %v406
    %408 = vmatprep.subr.mxu0 0.0
    %v409 = vand.u32 %v35, 4294901760
    %410 = vmatpush1.msra.mxu0 %v409
    %411 = vmatprep.subr.mxu0 0.0
    %v412 = vand.u32 %v36, 4294901760
    %413 = vmatpush1.msra.mxu0 %v412
    %414 = vmatprep.subr.mxu0 0.0
    %v415 = vand.u32 %v37, 4294901760
    %416 = vmatpush1.msra.mxu0 %v415
    %417 = vmatprep.subr.mxu0 0.0
    %v418 = vand.u32 %v38, 4294901760
    %419 = vmatpush1.msra.mxu0 %v418
    %420 = vmatprep.subr.mxu0 0.0
    %v421 = vand.u32 %v39, 4294901760
    %422 = vmatpush1.msra.mxu0 %v421
    %423 = vmatprep.subr.mxu0 0.0
    %v424 = vand.u32 %v40, 4294901760
    %425 = vmatpush1.msra.mxu0 %v424
    %426 = vmatprep.subr.mxu0 0.0
    %v427 = vand.u32 %v41, 4294901760
    %428 = vmatpush1.msra.mxu0 %v427
    %429 = vmatprep.subr.mxu0 0.0
    %v430 = vand.u32 %v42, 4294901760
    %431 = vmatpush1.msra.mxu0 %v430
    %432 = vmatprep.subr.mxu0 0.0
    %v433 = vand.u32 %v43, 4294901760
    %434 = vmatpush1.msra.mxu0 %v433
    %435 = vmatprep.subr.mxu0 0.0
    %v436 = vand.u32 %v44, 4294901760
    %437 = vmatpush1.msra.mxu0 %v436
    %438 = vmatprep.subr.mxu0 0.0
    %v439 = vand.u32 %v45, 4294901760
    %440 = vmatpush1.msra.mxu0 %v439
    %441 = vmatprep.subr.mxu0 0.0
    %v442 = vand.u32 %v46, 4294901760
    %443 = vmatpush1.msra.mxu0 %v442
    %444 = vmatprep.subr.mxu0 0.0
    %v445 = vand.u32 %v47, 4294901760
    %446 = vmatpush1.msra.mxu0 %v445
    %447 = vmatprep.subr.mxu0 0.0
    %v448 = vand.u32 %v48, 4294901760
    %449 = vmatpush1.msra.mxu0 %v448
    %450 = vmatprep.subr.mxu0 0.0
    %451 = vmatpush1.msra.mxu0 0.0
    %452 = vmatprep.subr.mxu0 0.0
    %453 = vmatpush1.msra.mxu0 0.0
    %454 = vmatprep.subr.mxu0 0.0
    %455 = vmatpush1.msra.mxu0 0.0
    %456 = vmatprep.subr.mxu0 0.0
    %457 = vmatpush1.msra.mxu0 0.0
    %458 = vmatprep.subr.mxu0 0.0
    %459 = vmatpush1.msra.mxu0 0.0
    %460 = vmatprep.subr.mxu0 0.0
    %461 = vmatpush1.msra.mxu0 0.0
    %462 = vmatprep.subr.mxu0 0.0
    %463 = vmatpush1.msra.mxu0 0.0
    %464 = vmatprep.subr.mxu0 0.0
    %465 = vmatpush1.msra.mxu0 0.0
    %466 = vmatprep.subr.mxu0 0.0
    %467 = vmatpush1.msra.mxu0 0.0
    %468 = vmatprep.subr.mxu0 0.0
    %469 = vmatpush1.msra.mxu0 0.0
    %470 = vmatprep.subr.mxu0 0.0
    %471 = vmatpush1.msra.mxu0 0.0
    %472 = vmatprep.subr.mxu0 0.0
    %473 = vmatpush1.msra.mxu0 0.0
    %474 = vmatprep.subr.mxu0 0.0
    %475 = vmatpush1.msra.mxu0 0.0
    %476 = vmatprep.subr.mxu0 0.0
    %477 = vmatpush1.msra.mxu0 0.0
    %478 = vmatprep.subr.mxu0 0.0
    %479 = vmatpush1.msra.mxu0 0.0
    %480 = vmatprep.subr.mxu0 0.0
    %481 = vmatpush1.msra.mxu0 0.0
    %482 = vmatprep.mubr.f32.mxu0 0.0
    %v483 = vand.u32 %v32, 4294901760
    %v484 = vsub.f32 %v32, %v483
    %v485 = vand.u32 %v484, 4294901760
    %486 = vmatmul.mubr.f32.gmra.mrb[0].mxu0 %v485
    %v487 = vpop.f32.mrb[0].mxu0
    %v488 = vadd.f32 %v399, %v487
    %v489 = vpop.f32.mrb[0].mxu0
    %490 = vdwg.mxu0
    %491 = vmatprep.subr.mxu0 0.0
    %v492 = vand.u32 %v33, 4294901760
    %v493 = vsub.f32 %v33, %v492
    %v494 = vand.u32 %v493, 4294901760
    %495 = vmatpush1.msra.mxu0 %v494
    %496 = vmatprep.subr.mxu0 0.0
    %v497 = vand.u32 %v34, 4294901760
    %v498 = vsub.f32 %v34, %v497
    %v499 = vand.u32 %v498, 4294901760
    %500 = vmatpush1.msra.mxu0 %v499
    %501 = vmatprep.subr.mxu0 0.0
    %v502 = vand.u32 %v35, 4294901760
    %v503 = vsub.f32 %v35, %v502
    %v504 = vand.u32 %v503, 4294901760
    %505 = vmatpush1.msra.mxu0 %v504
    %506 = vmatprep.subr.mxu0 0.0
    %v507 = vand.u32 %v36, 4294901760
    %v508 = vsub.f32 %v36, %v507
    %v509 = vand.u32 %v508, 4294901760
    %510 = vmatpush1.msra.mxu0 %v509
    %511 = vmatprep.subr.mxu0 0.0
    %v512 = vand.u32 %v37, 4294901760
    %v513 = vsub.f32 %v37, %v512
    %v514 = vand.u32 %v513, 4294901760
    %515 = vmatpush1.msra.mxu0 %v514
    %516 = vmatprep.subr.mxu0 0.0
    %v517 = vand.u32 %v38, 4294901760
    %v518 = vsub.f32 %v38, %v517
    %v519 = vand.u32 %v518, 4294901760
    %520 = vmatpush1.msra.mxu0 %v519
    %521 = vmatprep.subr.mxu0 0.0
    %v522 = vand.u32 %v39, 4294901760
    %v523 = vsub.f32 %v39, %v522
    %v524 = vand.u32 %v523, 4294901760
    %525 = vmatpush1.msra.mxu0 %v524
    %526 = vmatprep.subr.mxu0 0.0
    %v527 = vand.u32 %v40, 4294901760
    %v528 = vsub.f32 %v40, %v527
    %v529 = vand.u32 %v528, 4294901760
    %530 = vmatpush1.msra.mxu0 %v529
    %531 = vmatprep.subr.mxu0 0.0
    %v532 = vand.u32 %v41, 4294901760
    %v533 = vsub.f32 %v41, %v532
    %v534 = vand.u32 %v533, 4294901760
    %535 = vmatpush1.msra.mxu0 %v534
    %536 = vmatprep.subr.mxu0 0.0
    %v537 = vand.u32 %v42, 4294901760
    %v538 = vsub.f32 %v42, %v537
    %v539 = vand.u32 %v538, 4294901760
    %540 = vmatpush1.msra.mxu0 %v539
    %541 = vmatprep.subr.mxu0 0.0
    %v542 = vand.u32 %v43, 4294901760
    %v543 = vsub.f32 %v43, %v542
    %v544 = vand.u32 %v543, 4294901760
    %545 = vmatpush1.msra.mxu0 %v544
    %546 = vmatprep.subr.mxu0 0.0
    %v547 = vand.u32 %v44, 4294901760
    %v548 = vsub.f32 %v44, %v547
    %v549 = vand.u32 %v548, 4294901760
    %550 = vmatpush1.msra.mxu0 %v549
    %551 = vmatprep.subr.mxu0 0.0
    %v552 = vand.u32 %v45, 4294901760
    %v553 = vsub.f32 %v45, %v552
    %v554 = vand.u32 %v553, 4294901760
    %555 = vmatpush1.msra.mxu0 %v554
    %556 = vmatprep.subr.mxu0 0.0
    %v557 = vand.u32 %v46, 4294901760
    %v558 = vsub.f32 %v46, %v557
    %v559 = vand.u32 %v558, 4294901760
    %560 = vmatpush1.msra.mxu0 %v559
    %561 = vmatprep.subr.mxu0 0.0
    %v562 = vand.u32 %v47, 4294901760
    %v563 = vsub.f32 %v47, %v562
    %v564 = vand.u32 %v563, 4294901760
    %565 = vmatpush1.msra.mxu0 %v564
    %566 = vmatprep.subr.mxu0 0.0
    %v567 = vand.u32 %v48, 4294901760
    %v568 = vsub.f32 %v48, %v567
    %v569 = vand.u32 %v568, 4294901760
    %570 = vmatpush1.msra.mxu0 %v569
    %571 = vmatprep.subr.mxu0 0.0
    %572 = vmatpush1.msra.mxu0 0.0
    %573 = vmatprep.subr.mxu0 0.0
    %574 = vmatpush1.msra.mxu0 0.0
    %575 = vmatprep.subr.mxu0 0.0
    %576 = vmatpush1.msra.mxu0 0.0
    %577 = vmatprep.subr.mxu0 0.0
    %578 = vmatpush1.msra.mxu0 0.0
    %579 = vmatprep.subr.mxu0 0.0
    %580 = vmatpush1.msra.mxu0 0.0
    %581 = vmatprep.subr.mxu0 0.0
    %582 = vmatpush1.msra.mxu0 0.0
    %583 = vmatprep.subr.mxu0 0.0
    %584 = vmatpush1.msra.mxu0 0.0
    %585 = vmatprep.subr.mxu0 0.0
    %586 = vmatpush1.msra.mxu0 0.0
    %587 = vmatprep.subr.mxu0 0.0
    %588 = vmatpush1.msra.mxu0 0.0
    %589 = vmatprep.subr.mxu0 0.0
    %590 = vmatpush1.msra.mxu0 0.0
    %591 = vmatprep.subr.mxu0 0.0
    %592 = vmatpush1.msra.mxu0 0.0
    %593 = vmatprep.subr.mxu0 0.0
    %594 = vmatpush1.msra.mxu0 0.0
    %595 = vmatprep.subr.mxu0 0.0
    %596 = vmatpush1.msra.mxu0 0.0
    %597 = vmatprep.subr.mxu0 0.0
    %598 = vmatpush1.msra.mxu0 0.0
    %599 = vmatprep.subr.mxu0 0.0
    %600 = vmatpush1.msra.mxu0 0.0
    %601 = vmatprep.subr.mxu0 0.0
    %602 = vmatpush1.msra.mxu0 0.0
    %603 = vmatprep.mubr.f32.mxu0 0.0
    %v604 = vand.u32 %v32, 4294901760
    %605 = vmatmul.mubr.f32.gmra.mrb[0].mxu0 %v604
    %v606 = vpop.f32.mrb[0].mxu0
    %v607 = vadd.f32 %v488, %v606
    %v608 = vpop.f32.mrb[0].mxu0
    %609 = vdwg.mxu0
    %610 = vmatprep.subr.mxu0 0.0
    %v611 = vand.u32 %v33, 4294901760
    %612 = vmatpush1.msra.mxu0 %v611
    %613 = vmatprep.subr.mxu0 0.0
    %v614 = vand.u32 %v34, 4294901760
    %615 = vmatpush1.msra.mxu0 %v614
    %616 = vmatprep.subr.mxu0 0.0
    %v617 = vand.u32 %v35, 4294901760
    %618 = vmatpush1.msra.mxu0 %v617
    %619 = vmatprep.subr.mxu0 0.0
    %v620 = vand.u32 %v36, 4294901760
    %621 = vmatpush1.msra.mxu0 %v620
    %622 = vmatprep.subr.mxu0 0.0
    %v623 = vand.u32 %v37, 4294901760
    %624 = vmatpush1.msra.mxu0 %v623
    %625 = vmatprep.subr.mxu0 0.0
    %v626 = vand.u32 %v38, 4294901760
    %627 = vmatpush1.msra.mxu0 %v626
    %628 = vmatprep.subr.mxu0 0.0
    %v629 = vand.u32 %v39, 4294901760
    %630 = vmatpush1.msra.mxu0 %v629
    %631 = vmatprep.subr.mxu0 0.0
    %v632 = vand.u32 %v40, 4294901760
    %633 = vmatpush1.msra.mxu0 %v632
    %634 = vmatprep.subr.mxu0 0.0
    %v635 = vand.u32 %v41, 4294901760
    %636 = vmatpush1.msra.mxu0 %v635
    %637 = vmatprep.subr.mxu0 0.0
    %v638 = vand.u32 %v42, 4294901760
    %639 = vmatpush1.msra.mxu0 %v638
    %640 = vmatprep.subr.mxu0 0.0
    %v641 = vand.u32 %v43, 4294901760
    %642 = vmatpush1.msra.mxu0 %v641
    %643 = vmatprep.subr.mxu0 0.0
    %v644 = vand.u32 %v44, 4294901760
    %645 = vmatpush1.msra.mxu0 %v644
    %646 = vmatprep.subr.mxu0 0.0
    %v647 = vand.u32 %v45, 4294901760
    %648 = vmatpush1.msra.mxu0 %v647
    %649 = vmatprep.subr.mxu0 0.0
    %v650 = vand.u32 %v46, 4294901760
    %651 = vmatpush1.msra.mxu0 %v650
    %652 = vmatprep.subr.mxu0 0.0
    %v653 = vand.u32 %v47, 4294901760
    %654 = vmatpush1.msra.mxu0 %v653
    %655 = vmatprep.subr.mxu0 0.0
    %v656 = vand.u32 %v48, 4294901760
    %657 = vmatpush1.msra.mxu0 %v656
    %658 = vmatprep.subr.mxu0 0.0
    %659 = vmatpush1.msra.mxu0 0.0
    %660 = vmatprep.subr.mxu0 0.0
    %661 = vmatpush1.msra.mxu0 0.0
    %662 = vmatprep.subr.mxu0 0.0
    %663 = vmatpush1.msra.mxu0 0.0
    %664 = vmatprep.subr.mxu0 0.0
    %665 = vmatpush1.msra.mxu0 0.0
    %666 = vmatprep.subr.mxu0 0.0
    %667 = vmatpush1.msra.mxu0 0.0
    %668 = vmatprep.subr.mxu0 0.0
    %669 = vmatpush1.msra.mxu0 0.0
    %670 = vmatprep.subr.mxu0 0.0
    %671 = vmatpush1.msra.mxu0 0.0
    %672 = vmatprep.subr.mxu0 0.0
    %673 = vmatpush1.msra.mxu0 0.0
    %674 = vmatprep.subr.mxu0 0.0
    %675 = vmatpush1.msra.mxu0 0.0
    %676 = vmatprep.subr.mxu0 0.0
    %677 = vmatpush1.msra.mxu0 0.0
    %678 = vmatprep.subr.mxu0 0.0
    %679 = vmatpush1.msra.mxu0 0.0
    %680 = vmatprep.subr.mxu0 0.0
    %681 = vmatpush1.msra.mxu0 0.0
    %682 = vmatprep.subr.mxu0 0.0
    %683 = vmatpush1.msra.mxu0 0.0
    %684 = vmatprep.subr.mxu0 0.0
    %685 = vmatpush1.msra.mxu0 0.0
    %686 = vmatprep.subr.mxu0 0.0
    %687 = vmatpush1.msra.mxu0 0.0
    %688 = vmatprep.subr.mxu0 0.0
    %689 = vmatpush1.msra.mxu0 0.0
    %690 = vmatprep.mubr.f32.mxu0 0.0
    %v691 = vand.u32 %v32, 4294901760
    %692 = vmatmul.mubr.f32.gmra.mrb[0].mxu0 %v691
    %v693 = vpop.f32.mrb[0].mxu0
    %v694 = vadd.f32 %v607, %v693
    %v695 = vpop.f32.mrb[0].mxu0
    %696 = vdwg.mxu0
    %v697 = vtanh.pop %v694
    %v698 = vadd.f32 %v32, %v697
    %s699 = scalar_lea.vmem [#allocation2], 128
    %v700 = vld [vmem:[%s699] sm:$0xff]
    %v701 = vld [vmem:[%s699 + $0x8] sm:$0xff]
    %v702 = vld [vmem:[%s699 + $0x10] sm:$0xff]
    %v703 = vld [vmem:[%s699 + $0x18] sm:$0xff]
    %v704 = vld [vmem:[%s699 + $0x20] sm:$0xff]
    %v705 = vld [vmem:[%s699 + $0x28] sm:$0xff]
    %v706 = vld [vmem:[%s699 + $0x30] sm:$0xff]
    %v707 = vld [vmem:[%s699 + $0x38] sm:$0xff]
    %v708 = vld [vmem:[%s699 + $0x40] sm:$0xff]
    %v709 = vld [vmem:[%s699 + $0x48] sm:$0xff]
    %v710 = vld [vmem:[%s699 + $0x50] sm:$0xff]
    %v711 = vld [vmem:[%s699 + $0x58] sm:$0xff]
    %v712 = vld [vmem:[%s699 + $0x60] sm:$0xff]
    %v713 = vld [vmem:[%s699 + $0x68] sm:$0xff]
    %v714 = vld [vmem:[%s699 + $0x70] sm:$0xff]
    %v715 = vld [vmem:[%s699 + $0x78] sm:$0xff]
    %s716 = scalar_lea.vmem %s2, 1
    %v717 = vld [vmem:[%s716] sm:$0x1]
    %v719 = vlaneseq
    %v720 = vshrl.u32 %v719, 7
    %v721 = vsub.s32 0, %v720
    %v722 = vrot.slane %v717, %v721
    %724 = vmatprep.subr.mxu0 0.0
    %v725 = vand.u32 %v700, 4294901760
    %726 = vmatpush1.msra.mxu0 %v725
    %727 = vmatprep.subr.mxu0 0.0
    %v728 = vand.u32 %v701, 4294901760
    %729 = vmatpush1.msra.mxu0 %v728
    %730 = vmatprep.subr.mxu0 0.0
    %v731 = vand.u32 %v702, 4294901760
    %732 = vmatpush1.msra.mxu0 %v731
    %733 = vmatprep.subr.mxu0 0.0
    %v734 = vand.u32 %v703, 4294901760
    %735 = vmatpush1.msra.mxu0 %v734
    %736 = vmatprep.subr.mxu0 0.0
    %v737 = vand.u32 %v704, 4294901760
    %738 = vmatpush1.msra.mxu0 %v737
    %739 = vmatprep.subr.mxu0 0.0
    %v740 = vand.u32 %v705, 4294901760
    %741 = vmatpush1.msra.mxu0 %v740
    %742 = vmatprep.subr.mxu0 0.0
    %v743 = vand.u32 %v706, 4294901760
    %744 = vmatpush1.msra.mxu0 %v743
    %745 = vmatprep.subr.mxu0 0.0
    %v746 = vand.u32 %v707, 4294901760
    %747 = vmatpush1.msra.mxu0 %v746
    %748 = vmatprep.subr.mxu0 0.0
    %v749 = vand.u32 %v708, 4294901760
    %750 = vmatpush1.msra.mxu0 %v749
    %751 = vmatprep.subr.mxu0 0.0
    %v752 = vand.u32 %v709, 4294901760
    %753 = vmatpush1.msra.mxu0 %v752
    %754 = vmatprep.subr.mxu0 0.0
    %v755 = vand.u32 %v710, 4294901760
    %756 = vmatpush1.msra.mxu0 %v755
    %757 = vmatprep.subr.mxu0 0.0
    %v758 = vand.u32 %v711, 4294901760
    %759 = vmatpush1.msra.mxu0 %v758
    %760 = vmatprep.subr.mxu0 0.0
    %v761 = vand.u32 %v712, 4294901760
    %762 = vmatpush1.msra.mxu0 %v761
    %763 = vmatprep.subr.mxu0 0.0
    %v764 = vand.u32 %v713, 4294901760
    %765 = vmatpush1.msra.mxu0 %v764
    %766 = vmatprep.subr.mxu0 0.0
    %v767 = vand.u32 %v714, 4294901760
    %768 = vmatpush1.msra.mxu0 %v767
    %769 = vmatprep.subr.mxu0 0.0
    %v770 = vand.u32 %v715, 4294901760
    %771 = vmatpush1.msra.mxu0 %v770
    %772 = vmatprep.subr.mxu0 0.0
    %773 = vmatpush1.msra.mxu0 0.0
    %774 = vmatprep.subr.mxu0 0.0
    %775 = vmatpush1.msra.mxu0 0.0
    %776 = vmatprep.subr.mxu0 0.0
    %777 = vmatpush1.msra.mxu0 0.0
    %778 = vmatprep.subr.mxu0 0.0
    %779 = vmatpush1.msra.mxu0 0.0
    %780 = vmatprep.subr.mxu0 0.0
    %781 = vmatpush1.msra.mxu0 0.0
    %782 = vmatprep.subr.mxu0 0.0
    %783 = vmatpush1.msra.mxu0 0.0
    %784 = vmatprep.subr.mxu0 0.0
    %785 = vmatpush1.msra.mxu0 0.0
    %786 = vmatprep.subr.mxu0 0.0
    %787 = vmatpush1.msra.mxu0 0.0
    %788 = vmatprep.subr.mxu0 0.0
    %789 = vmatpush1.msra.mxu0 0.0
    %790 = vmatprep.subr.mxu0 0.0
    %791 = vmatpush1.msra.mxu0 0.0
    %792 = vmatprep.subr.mxu0 0.0
    %793 = vmatpush1.msra.mxu0 0.0
    %794 = vmatprep.subr.mxu0 0.0
    %795 = vmatpush1.msra.mxu0 0.0
    %796 = vmatprep.subr.mxu0 0.0
    %797 = vmatpush1.msra.mxu0 0.0
    %798 = vmatprep.subr.mxu0 0.0
    %799 = vmatpush1.msra.mxu0 0.0
    %800 = vmatprep.subr.mxu0 0.0
    %801 = vmatpush1.msra.mxu0 0.0
    %802 = vmatprep.subr.mxu0 0.0
    %803 = vmatpush1.msra.mxu0 0.0
    %804 = vmatprep.mubr.f32.mxu0 0.0
    %v805 = vand.u32 %v698, 4294901760
    %v806 = vsub.f32 %v698, %v805
    %v807 = vand.u32 %v806, 4294901760
    %v808 = vsub.f32 %v806, %v807
    %v809 = vand.u32 %v808, 4294901760
    %810 = vmatmul.mubr.f32.gmra.mrb[0].mxu0 %v809
    %v811 = vpop.f32.mrb[0].mxu0
    %v812 = vadd.f32 %v722, %v811
    %v813 = vpop.f32.mrb[0].mxu0
    %814 = vdwg.mxu0
    %815 = vmatprep.subr.mxu0 0.0
    %v816 = vand.u32 %v700, 4294901760
    %v817 = vsub.f32 %v700, %v816
    %v818 = vand.u32 %v817, 4294901760
    %v819 = vsub.f32 %v817, %v818
    %v820 = vand.u32 %v819, 4294901760
    %821 = vmatpush1.msra.mxu0 %v820
    %822 = vmatprep.subr.mxu0 0.0
    %v823 = vand.u32 %v701, 4294901760
    %v824 = vsub.f32 %v701, %v823
    %v825 = vand.u32 %v824, 4294901760
    %v826 = vsub.f32 %v824, %v825
    %v827 = vand.u32 %v826, 4294901760
    %828 = vmatpush1.msra.mxu0 %v827
    %829 = vmatprep.subr.mxu0 0.0
    %v830 = vand.u32 %v702, 4294901760
    %v831 = vsub.f32 %v702, %v830
    %v832 = vand.u32 %v831, 4294901760
    %v833 = vsub.f32 %v831, %v832
    %v834 = vand.u32 %v833, 4294901760
    %835 = vmatpush1.msra.mxu0 %v834
    %836 = vmatprep.subr.mxu0 0.0
    %v837 = vand.u32 %v703, 4294901760
    %v838 = vsub.f32 %v703, %v837
    %v839 = vand.u32 %v838, 4294901760
    %v840 = vsub.f32 %v838, %v839
    %v841 = vand.u32 %v840, 4294901760
    %842 = vmatpush1.msra.mxu0 %v841
    %843 = vmatprep.subr.mxu0 0.0
    %v844 = vand.u32 %v704, 4294901760
    %v845 = vsub.f32 %v704, %v844
    %v846 = vand.u32 %v845, 4294901760
    %v847 = vsub.f32 %v845, %v846
    %v848 = vand.u32 %v847, 4294901760
    %849 = vmatpush1.msra.mxu0 %v848
    %850 = vmatprep.subr.mxu0 0.0
    %v851 = vand.u32 %v705, 4294901760
    %v852 = vsub.f32 %v705, %v851
    %v853 = vand.u32 %v852, 4294901760
    %v854 = vsub.f32 %v852, %v853
    %v855 = vand.u32 %v854, 4294901760
    %856 = vmatpush1.msra.mxu0 %v855
    %857 = vmatprep.subr.mxu0 0.0
    %v858 = vand.u32 %v706, 4294901760
    %v859 = vsub.f32 %v706, %v858
    %v860 = vand.u32 %v859, 4294901760
    %v861 = vsub.f32 %v859, %v860
    %v862 = vand.u32 %v861, 4294901760
    %863 = vmatpush1.msra.mxu0 %v862
    %864 = vmatprep.subr.mxu0 0.0
    %v865 = vand.u32 %v707, 4294901760
    %v866 = vsub.f32 %v707, %v865
    %v867 = vand.u32 %v866, 4294901760
    %v868 = vsub.f32 %v866, %v867
    %v869 = vand.u32 %v868, 4294901760
    %870 = vmatpush1.msra.mxu0 %v869
    %871 = vmatprep.subr.mxu0 0.0
    %v872 = vand.u32 %v708, 4294901760
    %v873 = vsub.f32 %v708, %v872
    %v874 = vand.u32 %v873, 4294901760
    %v875 = vsub.f32 %v873, %v874
    %v876 = vand.u32 %v875, 4294901760
    %877 = vmatpush1.msra.mxu0 %v876
    %878 = vmatprep.subr.mxu0 0.0
    %v879 = vand.u32 %v709, 4294901760
    %v880 = vsub.f32 %v709, %v879
    %v881 = vand.u32 %v880, 4294901760
    %v882 = vsub.f32 %v880, %v881
    %v883 = vand.u32 %v882, 4294901760
    %884 = vmatpush1.msra.mxu0 %v883
    %885 = vmatprep.subr.mxu0 0.0
    %v886 = vand.u32 %v710, 4294901760
    %v887 = vsub.f32 %v710, %v886
    %v888 = vand.u32 %v887, 4294901760
    %v889 = vsub.f32 %v887, %v888
    %v890 = vand.u32 %v889, 4294901760
    %891 = vmatpush1.msra.mxu0 %v890
    %892 = vmatprep.subr.mxu0 0.0
    %v893 = vand.u32 %v711, 4294901760
    %v894 = vsub.f32 %v711, %v893
    %v895 = vand.u32 %v894, 4294901760
    %v896 = vsub.f32 %v894, %v895
    %v897 = vand.u32 %v896, 4294901760
    %898 = vmatpush1.msra.mxu0 %v897
    %899 = vmatprep.subr.mxu0 0.0
    %v900 = vand.u32 %v712, 4294901760
    %v901 = vsub.f32 %v712, %v900
    %v902 = vand.u32 %v901, 4294901760
    %v903 = vsub.f32 %v901, %v902
    %v904 = vand.u32 %v903, 4294901760
    %905 = vmatpush1.msra.mxu0 %v904
    %906 = vmatprep.subr.mxu0 0.0
    %v907 = vand.u32 %v713, 4294901760
    %v908 = vsub.f32 %v713, %v907
    %v909 = vand.u32 %v908, 4294901760
    %v910 = vsub.f32 %v908, %v909
    %v911 = vand.u32 %v910, 4294901760
    %912 = vmatpush1.msra.mxu0 %v911
    %913 = vmatprep.subr.mxu0 0.0
    %v914 = vand.u32 %v714, 4294901760
    %v915 = vsub.f32 %v714, %v914
    %v916 = vand.u32 %v915, 4294901760
    %v917 = vsub.f32 %v915, %v916
    %v918 = vand.u32 %v917, 4294901760
    %919 = vmatpush1.msra.mxu0 %v918
    %920 = vmatprep.subr.mxu0 0.0
    %v921 = vand.u32 %v715, 4294901760
    %v922 = vsub.f32 %v715, %v921
    %v923 = vand.u32 %v922, 4294901760
    %v924 = vsub.f32 %v922, %v923
    %v925 = vand.u32 %v924, 4294901760
    %926 = vmatpush1.msra.mxu0 %v925
    %927 = vmatprep.subr.mxu0 0.0
    %928 = vmatpush1.msra.mxu0 0.0
    %929 = vmatprep.subr.mxu0 0.0
    %930 = vmatpush1.msra.mxu0 0.0
    %931 = vmatprep.subr.mxu0 0.0
    %932 = vmatpush1.msra.mxu0 0.0
    %933 = vmatprep.subr.mxu0 0.0
    %934 = vmatpush1.msra.mxu0 0.0
    %935 = vmatprep.subr.mxu0 0.0
    %936 = vmatpush1.msra.mxu0 0.0
    %937 = vmatprep.subr.mxu0 0.0
    %938 = vmatpush1.msra.mxu0 0.0
    %939 = vmatprep.subr.mxu0 0.0
    %940 = vmatpush1.msra.mxu0 0.0
    %941 = vmatprep.subr.mxu0 0.0
    %942 = vmatpush1.msra.mxu0 0.0
    %943 = vmatprep.subr.mxu0 0.0
    %944 = vmatpush1.msra.mxu0 0.0
    %945 = vmatprep.subr.mxu0 0.0
    %946 = vmatpush1.msra.mxu0 0.0
    %947 = vmatprep.subr.mxu0 0.0
    %948 = vmatpush1.msra.mxu0 0.0
    %949 = vmatprep.subr.mxu0 0.0
    %950 = vmatpush1.msra.mxu0 0.0
    %951 = vmatprep.subr.mxu0 0.0
    %952 = vmatpush1.msra.mxu0 0.0
    %953 = vmatprep.subr.mxu0 0.0
    %954 = vmatpush1.msra.mxu0 0.0
    %955 = vmatprep.subr.mxu0 0.0
    %956 = vmatpush1.msra.mxu0 0.0
    %957 = vmatprep.subr.mxu0 0.0
    %958 = vmatpush1.msra.mxu0 0.0
    %959 = vmatprep.mubr.f32.mxu0 0.0
    %v960 = vand.u32 %v698, 4294901760
    %961 = vmatmul.mubr.f32.gmra.mrb[0].mxu0 %v960
    %v962 = vpop.f32.mrb[0].mxu0
    %v963 = vadd.f32 %v812, %v962
    %v964 = vpop.f32.mrb[0].mxu0
    %965 = vdwg.mxu0
    %966 = vmatprep.subr.mxu0 0.0
    %v967 = vand.u32 %v700, 4294901760
    %v968 = vsub.f32 %v700, %v967
    %969 = vmatpush1.msra.mxu0 %v968
    %970 = vmatprep.subr.mxu0 0.0
    %v971 = vand.u32 %v701, 4294901760
    %v972 = vsub.f32 %v701, %v971
    %973 = vmatpush1.msra.mxu0 %v972
    %974 = vmatprep.subr.mxu0 0.0
    %v975 = vand.u32 %v702, 4294901760
    %v976 = vsub.f32 %v702, %v975
    %977 = vmatpush1.msra.mxu0 %v976
    %978 = vmatprep.subr.mxu0 0.0
    %v979 = vand.u32 %v703, 4294901760
    %v980 = vsub.f32 %v703, %v979
    %981 = vmatpush1.msra.mxu0 %v980
    %982 = vmatprep.subr.mxu0 0.0
    %v983 = vand.u32 %v704, 4294901760
    %v984 = vsub.f32 %v704, %v983
    %985 = vmatpush1.msra.mxu0 %v984
    %986 = vmatprep.subr.mxu0 0.0
    %v987 = vand.u32 %v705, 4294901760
    %v988 = vsub.f32 %v705, %v987
    %989 = vmatpush1.msra.mxu0 %v988
    %990 = vmatprep.subr.mxu0 0.0
    %v991 = vand.u32 %v706, 4294901760
    %v992 = vsub.f32 %v706, %v991
    %993 = vmatpush1.msra.mxu0 %v992
    %994 = vmatprep.subr.mxu0 0.0
    %v995 = vand.u32 %v707, 4294901760
    %v996 = vsub.f32 %v707, %v995
    %997 = vmatpush1.msra.mxu0 %v996
    %998 = vmatprep.subr.mxu0 0.0
    %v999 = vand.u32 %v708, 4294901760
    %v1000 = vsub.f32 %v708, %v999
    %1001 = vmatpush1.msra.mxu0 %v1000
    %1002 = vmatprep.subr.mxu0 0.0
    %v1003 = vand.u32 %v709, 4294901760
    %v1004 = vsub.f32 %v709, %v1003
    %1005 = vmatpush1.msra.mxu0 %v1004
    %1006 = vmatprep.subr.mxu0 0.0
    %v1007 = vand.u32 %v710, 4294901760
    %v1008 = vsub.f32 %v710, %v1007
    %1009 = vmatpush1.msra.mxu0 %v1008
    %1010 = vmatprep.subr.mxu0 0.0
    %v1011 = vand.u32 %v711, 4294901760
    %v1012 = vsub.f32 %v711, %v1011
    %1013 = vmatpush1.msra.mxu0 %v1012
    %1014 = vmatprep.subr.mxu0 0.0
    %v1015 = vand.u32 %v712, 4294901760
    %v1016 = vsub.f32 %v712, %v1015
    %1017 = vmatpush1.msra.mxu0 %v1016
    %1018 = vmatprep.subr.mxu0 0.0
    %v1019 = vand.u32 %v713, 4294901760
    %v1020 = vsub.f32 %v713, %v1019
    %1021 = vmatpush1.msra.mxu0 %v1020
    %1022 = vmatprep.subr.mxu0 0.0
    %v1023 = vand.u32 %v714, 4294901760
    %v1024 = vsub.f32 %v714, %v1023
    %1025 = vmatpush1.msra.mxu0 %v1024
    %1026 = vmatprep.subr.mxu0 0.0
    %v1027 = vand.u32 %v715, 4294901760
    %v1028 = vsub.f32 %v715, %v1027
    %1029 = vmatpush1.msra.mxu0 %v1028
    %1030 = vmatprep.subr.mxu0 0.0
    %1031 = vmatpush1.msra.mxu0 0.0
    %1032 = vmatprep.subr.mxu0 0.0
    %1033 = vmatpush1.msra.mxu0 0.0
    %1034 = vmatprep.subr.mxu0 0.0
    %1035 = vmatpush1.msra.mxu0 0.0
    %1036 = vmatprep.subr.mxu0 0.0
    %1037 = vmatpush1.msra.mxu0 0.0
    %1038 = vmatprep.subr.mxu0 0.0
    %1039 = vmatpush1.msra.mxu0 0.0
    %1040 = vmatprep.subr.mxu0 0.0
    %1041 = vmatpush1.msra.mxu0 0.0
    %1042 = vmatprep.subr.mxu0 0.0
    %1043 = vmatpush1.msra.mxu0 0.0
    %1044 = vmatprep.subr.mxu0 0.0
    %1045 = vmatpush1.msra.mxu0 0.0
    %1046 = vmatprep.subr.mxu0 0.0
    %1047 = vmatpush1.msra.mxu0 0.0
    %1048 = vmatprep.subr.mxu0 0.0
    %1049 = vmatpush1.msra.mxu0 0.0
    %1050 = vmatprep.subr.mxu0 0.0
    %1051 = vmatpush1.msra.mxu0 0.0
    %1052 = vmatprep.subr.mxu0 0.0
    %1053 = vmatpush1.msra.mxu0 0.0
    %1054 = vmatprep.subr.mxu0 0.0
    %1055 = vmatpush1.msra.mxu0 0.0
    %1056 = vmatprep.subr.mxu0 0.0
    %1057 = vmatpush1.msra.mxu0 0.0
    %1058 = vmatprep.subr.mxu0 0.0
    %1059 = vmatpush1.msra.mxu0 0.0
    %1060 = vmatprep.subr.mxu0 0.0
    %1061 = vmatpush1.msra.mxu0 0.0
    %1062 = vmatprep.mubr.f32.mxu0 0.0
    %v1063 = vand.u32 %v698, 4294901760
    %v1064 = vsub.f32 %v698, %v1063
    %1065 = vmatmul.mubr.f32.gmra.mrb[0].mxu0 %v1064
    %v1066 = vpop.f32.mrb[0].mxu0
    %v1067 = vadd.f32 %v963, %v1066
    %v1068 = vpop.f32.mrb[0].mxu0
    %1069 = vdwg.mxu0
    %1070 = vmatprep.subr.mxu0 0.0
    %v1071 = vand.u32 %v700, 4294901760
    %1072 = vmatpush1.msra.mxu0 %v1071
    %1073 = vmatprep.subr.mxu0 0.0
    %v1074 = vand.u32 %v701, 4294901760
    %1075 = vmatpush1.msra.mxu0 %v1074
    %1076 = vmatprep.subr.mxu0 0.0
    %v1077 = vand.u32 %v702, 4294901760
    %1078 = vmatpush1.msra.mxu0 %v1077
    %1079 = vmatprep.subr.mxu0 0.0
    %v1080 = vand.u32 %v703, 4294901760
    %1081 = vmatpush1.msra.mxu0 %v1080
    %1082 = vmatprep.subr.mxu0 0.0
    %v1083 = vand.u32 %v704, 4294901760
    %1084 = vmatpush1.msra.mxu0 %v1083
    %1085 = vmatprep.subr.mxu0 0.0
    %v1086 = vand.u32 %v705, 4294901760
    %1087 = vmatpush1.msra.mxu0 %v1086
    %1088 = vmatprep.subr.mxu0 0.0
    %v1089 = vand.u32 %v706, 4294901760
    %1090 = vmatpush1.msra.mxu0 %v1089
    %1091 = vmatprep.subr.mxu0 0.0
    %v1092 = vand.u32 %v707, 4294901760
    %1093 = vmatpush1.msra.mxu0 %v1092
    %1094 = vmatprep.subr.mxu0 0.0
    %v1095 = vand.u32 %v708, 4294901760
    %1096 = vmatpush1.msra.mxu0 %v1095
    %1097 = vmatprep.subr.mxu0 0.0
    %v1098 = vand.u32 %v709, 4294901760
    %1099 = vmatpush1.msra.mxu0 %v1098
    %1100 = vmatprep.subr.mxu0 0.0
    %v1101 = vand.u32 %v710, 4294901760
    %1102 = vmatpush1.msra.mxu0 %v1101
    %1103 = vmatprep.subr.mxu0 0.0
    %v1104 = vand.u32 %v711, 4294901760
    %1105 = vmatpush1.msra.mxu0 %v1104
    %1106 = vmatprep.subr.mxu0 0.0
    %v1107 = vand.u32 %v712, 4294901760
    %1108 = vmatpush1.msra.mxu0 %v1107
    %1109 = vmatprep.subr.mxu0 0.0
    %v1110 = vand.u32 %v713, 4294901760
    %1111 = vmatpush1.msra.mxu0 %v1110
    %1112 = vmatprep.subr.mxu0 0.0
    %v1113 = vand.u32 %v714, 4294901760
    %1114 = vmatpush1.msra.mxu0 %v1113
    %1115 = vmatprep.subr.mxu0 0.0
    %v1116 = vand.u32 %v715, 4294901760
    %1117 = vmatpush1.msra.mxu0 %v1116
    %1118 = vmatprep.subr.mxu0 0.0
    %1119 = vmatpush1.msra.mxu0 0.0
    %1120 = vmatprep.subr.mxu0 0.0
    %1121 = vmatpush1.msra.mxu0 0.0
    %1122 = vmatprep.subr.mxu0 0.0
    %1123 = vmatpush1.msra.mxu0 0.0
    %1124 = vmatprep.subr.mxu0 0.0
    %1125 = vmatpush1.msra.mxu0 0.0
    %1126 = vmatprep.subr.mxu0 0.0
    %1127 = vmatpush1.msra.mxu0 0.0
    %1128 = vmatprep.subr.mxu0 0.0
    %1129 = vmatpush1.msra.mxu0 0.0
    %1130 = vmatprep.subr.mxu0 0.0
    %1131 = vmatpush1.msra.mxu0 0.0
    %1132 = vmatprep.subr.mxu0 0.0
    %1133 = vmatpush1.msra.mxu0 0.0
    %1134 = vmatprep.subr.mxu0 0.0
    %1135 = vmatpush1.msra.mxu0 0.0
    %1136 = vmatprep.subr.mxu0 0.0
    %1137 = vmatpush1.msra.mxu0 0.0
    %1138 = vmatprep.subr.mxu0 0.0
    %1139 = vmatpush1.msra.mxu0 0.0
    %1140 = vmatprep.subr.mxu0 0.0
    %1141 = vmatpush1.msra.mxu0 0.0
    %1142 = vmatprep.subr.mxu0 0.0
    %1143 = vmatpush1.msra.mxu0 0.0
    %1144 = vmatprep.subr.mxu0 0.0
    %1145 = vmatpush1.msra.mxu0 0.0
    %1146 = vmatprep.subr.mxu0 0.0
    %1147 = vmatpush1.msra.mxu0 0.0
    %1148 = vmatprep.subr.mxu0 0.0
    %1149 = vmatpush1.msra.mxu0 0.0
    %1150 = vmatprep.mubr.f32.mxu0 0.0
    %v1151 = vand.u32 %v698, 4294901760
    %v1152 = vsub.f32 %v698, %v1151
    %v1153 = vand.u32 %v1152, 4294901760
    %1154 = vmatmul.mubr.f32.gmra.mrb[0].mxu0 %v1153
    %v1155 = vpop.f32.mrb[0].mxu0
    %v1156 = vadd.f32 %v1067, %v1155
    %v1157 = vpop.f32.mrb[0].mxu0
    %1158 = vdwg.mxu0
    %1159 = vmatprep.subr.mxu0 0.0
    %v1160 = vand.u32 %v700, 4294901760
    %v1161 = vsub.f32 %v700, %v1160
    %v1162 = vand.u32 %v1161, 4294901760
    %1163 = vmatpush1.msra.mxu0 %v1162
    %1164 = vmatprep.subr.mxu0 0.0
    %v1165 = vand.u32 %v701, 4294901760
    %v1166 = vsub.f32 %v701, %v1165
    %v1167 = vand.u32 %v1166, 4294901760
    %1168 = vmatpush1.msra.mxu0 %v1167
    %1169 = vmatprep.subr.mxu0 0.0
    %v1170 = vand.u32 %v702, 4294901760
    %v1171 = vsub.f32 %v702, %v1170
    %v1172 = vand.u32 %v1171, 4294901760
    %1173 = vmatpush1.msra.mxu0 %v1172
    %1174 = vmatprep.subr.mxu0 0.0
    %v1175 = vand.u32 %v703, 4294901760
    %v1176 = vsub.f32 %v703, %v1175
    %v1177 = vand.u32 %v1176, 4294901760
    %1178 = vmatpush1.msra.mxu0 %v1177
    %1179 = vmatprep.subr.mxu0 0.0
    %v1180 = vand.u32 %v704, 4294901760
    %v1181 = vsub.f32 %v704, %v1180
    %v1182 = vand.u32 %v1181, 4294901760
    %1183 = vmatpush1.msra.mxu0 %v1182
    %1184 = vmatprep.subr.mxu0 0.0
    %v1185 = vand.u32 %v705, 4294901760
    %v1186 = vsub.f32 %v705, %v1185
    %v1187 = vand.u32 %v1186, 4294901760
    %1188 = vmatpush1.msra.mxu0 %v1187
    %1189 = vmatprep.subr.mxu0 0.0
    %v1190 = vand.u32 %v706, 4294901760
    %v1191 = vsub.f32 %v706, %v1190
    %v1192 = vand.u32 %v1191, 4294901760
    %1193 = vmatpush1.msra.mxu0 %v1192
    %1194 = vmatprep.subr.mxu0 0.0
    %v1195 = vand.u32 %v707, 4294901760
    %v1196 = vsub.f32 %v707, %v1195
    %v1197 = vand.u32 %v1196, 4294901760
    %1198 = vmatpush1.msra.mxu0 %v1197
    %1199 = vmatprep.subr.mxu0 0.0
    %v1200 = vand.u32 %v708, 4294901760
    %v1201 = vsub.f32 %v708, %v1200
    %v1202 = vand.u32 %v1201, 4294901760
    %1203 = vmatpush1.msra.mxu0 %v1202
    %1204 = vmatprep.subr.mxu0 0.0
    %v1205 = vand.u32 %v709, 4294901760
    %v1206 = vsub.f32 %v709, %v1205
    %v1207 = vand.u32 %v1206, 4294901760
    %1208 = vmatpush1.msra.mxu0 %v1207
    %1209 = vmatprep.subr.mxu0 0.0
    %v1210 = vand.u32 %v710, 4294901760
    %v1211 = vsub.f32 %v710, %v1210
    %v1212 = vand.u32 %v1211, 4294901760
    %1213 = vmatpush1.msra.mxu0 %v1212
    %1214 = vmatprep.subr.mxu0 0.0
    %v1215 = vand.u32 %v711, 4294901760
    %v1216 = vsub.f32 %v711, %v1215
    %v1217 = vand.u32 %v1216, 4294901760
    %1218 = vmatpush1.msra.mxu0 %v1217
    %1219 = vmatprep.subr.mxu0 0.0
    %v1220 = vand.u32 %v712, 4294901760
    %v1221 = vsub.f32 %v712, %v1220
    %v1222 = vand.u32 %v1221, 4294901760
    %1223 = vmatpush1.msra.mxu0 %v1222
    %1224 = vmatprep.subr.mxu0 0.0
    %v1225 = vand.u32 %v713, 4294901760
    %v1226 = vsub.f32 %v713, %v1225
    %v1227 = vand.u32 %v1226, 4294901760
    %1228 = vmatpush1.msra.mxu0 %v1227
    %1229 = vmatprep.subr.mxu0 0.0
    %v1230 = vand.u32 %v714, 4294901760
    %v1231 = vsub.f32 %v714, %v1230
    %v1232 = vand.u32 %v1231, 4294901760
    %1233 = vmatpush1.msra.mxu0 %v1232
    %1234 = vmatprep.subr.mxu0 0.0
    %v1235 = vand.u32 %v715, 4294901760
    %v1236 = vsub.f32 %v715, %v1235
    %v1237 = vand.u32 %v1236, 4294901760
    %1238 = vmatpush1.msra.mxu0 %v1237
    %1239 = vmatprep.subr.mxu0 0.0
    %1240 = vmatpush1.msra.mxu0 0.0
    %1241 = vmatprep.subr.mxu0 0.0
    %1242 = vmatpush1.msra.mxu0 0.0
    %1243 = vmatprep.subr.mxu0 0.0
    %1244 = vmatpush1.msra.mxu0 0.0
    %1245 = vmatprep.subr.mxu0 0.0
    %1246 = vmatpush1.msra.mxu0 0.0
    %1247 = vmatprep.subr.mxu0 0.0
    %1248 = vmatpush1.msra.mxu0 0.0
    %1249 = vmatprep.subr.mxu0 0.0
    %1250 = vmatpush1.msra.mxu0 0.0
    %1251 = vmatprep.subr.mxu0 0.0
    %1252 = vmatpush1.msra.mxu0 0.0
    %1253 = vmatprep.subr.mxu0 0.0
    %1254 = vmatpush1.msra.mxu0 0.0
    %1255 = vmatprep.subr.mxu0 0.0
    %1256 = vmatpush1.msra.mxu0 0.0
    %1257 = vmatprep.subr.mxu0 0.0
    %1258 = vmatpush1.msra.mxu0 0.0
    %1259 = vmatprep.subr.mxu0 0.0
    %1260 = vmatpush1.msra.mxu0 0.0
    %1261 = vmatprep.subr.mxu0 0.0
    %1262 = vmatpush1.msra.mxu0 0.0
    %1263 = vmatprep.subr.mxu0 0.0
    %1264 = vmatpush1.msra.mxu0 0.0
    %1265 = vmatprep.subr.mxu0 0.0
    %1266 = vmatpush1.msra.mxu0 0.0
    %1267 = vmatprep.subr.mxu0 0.0
    %1268 = vmatpush1.msra.mxu0 0.0
    %1269 = vmatprep.subr.mxu0 0.0
    %1270 = vmatpush1.msra.mxu0 0.0
    %1271 = vmatprep.mubr.f32.mxu0 0.0
    %v1272 = vand.u32 %v698, 4294901760
    %1273 = vmatmul.mubr.f32.gmra.mrb[0].mxu0 %v1272
    %v1274 = vpop.f32.mrb[0].mxu0
    %v1275 = vadd.f32 %v1156, %v1274
    %v1276 = vpop.f32.mrb[0].mxu0
    %1277 = vdwg.mxu0
    %1278 = vmatprep.subr.mxu0 0.0
    %v1279 = vand.u32 %v700, 4294901760
    %1280 = vmatpush1.msra.mxu0 %v1279
    %1281 = vmatprep.subr.mxu0 0.0
    %v1282 = vand.u32 %v701, 4294901760
    %1283 = vmatpush1.msra.mxu0 %v1282
    %1284 = vmatprep.subr.mxu0 0.0
    %v1285 = vand.u32 %v702, 4294901760
    %1286 = vmatpush1.msra.mxu0 %v1285
    %1287 = vmatprep.subr.mxu0 0.0
    %v1288 = vand.u32 %v703, 4294901760
    %1289 = vmatpush1.msra.mxu0 %v1288
    %1290 = vmatprep.subr.mxu0 0.0
    %v1291 = vand.u32 %v704, 4294901760
    %1292 = vmatpush1.msra.mxu0 %v1291
    %1293 = vmatprep.subr.mxu0 0.0
    %v1294 = vand.u32 %v705, 4294901760
    %1295 = vmatpush1.msra.mxu0 %v1294
    %1296 = vmatprep.subr.mxu0 0.0
    %v1297 = vand.u32 %v706, 4294901760
    %1298 = vmatpush1.msra.mxu0 %v1297
    %1299 = vmatprep.subr.mxu0 0.0
    %v1300 = vand.u32 %v707, 4294901760
    %1301 = vmatpush1.msra.mxu0 %v1300
    %1302 = vmatprep.subr.mxu0 0.0
    %v1303 = vand.u32 %v708, 4294901760
    %1304 = vmatpush1.msra.mxu0 %v1303
    %1305 = vmatprep.subr.mxu0 0.0
    %v1306 = vand.u32 %v709, 4294901760
    %1307 = vmatpush1.msra.mxu0 %v1306
    %1308 = vmatprep.subr.mxu0 0.0
    %v1309 = vand.u32 %v710, 4294901760
    %1310 = vmatpush1.msra.mxu0 %v1309
    %1311 = vmatprep.subr.mxu0 0.0
    %v1312 = vand.u32 %v711, 4294901760
    %1313 = vmatpush1.msra.mxu0 %v1312
    %1314 = vmatprep.subr.mxu0 0.0
    %v1315 = vand.u32 %v712, 4294901760
    %1316 = vmatpush1.msra.mxu0 %v1315
    %1317 = vmatprep.subr.mxu0 0.0
    %v1318 = vand.u32 %v713, 4294901760
    %1319 = vmatpush1.msra.mxu0 %v1318
    %1320 = vmatprep.subr.mxu0 0.0
    %v1321 = vand.u32 %v714, 4294901760
    %1322 = vmatpush1.msra.mxu0 %v1321
    %1323 = vmatprep.subr.mxu0 0.0
    %v1324 = vand.u32 %v715, 4294901760
    %1325 = vmatpush1.msra.mxu0 %v1324
    %1326 = vmatprep.subr.mxu0 0.0
    %1327 = vmatpush1.msra.mxu0 0.0
    %1328 = vmatprep.subr.mxu0 0.0
    %1329 = vmatpush1.msra.mxu0 0.0
    %1330 = vmatprep.subr.mxu0 0.0
    %1331 = vmatpush1.msra.mxu0 0.0
    %1332 = vmatprep.subr.mxu0 0.0
    %1333 = vmatpush1.msra.mxu0 0.0
    %1334 = vmatprep.subr.mxu0 0.0
    %1335 = vmatpush1.msra.mxu0 0.0
    %1336 = vmatprep.subr.mxu0 0.0
    %1337 = vmatpush1.msra.mxu0 0.0
    %1338 = vmatprep.subr.mxu0 0.0
    %1339 = vmatpush1.msra.mxu0 0.0
    %1340 = vmatprep.subr.mxu0 0.0
    %1341 = vmatpush1.msra.mxu0 0.0
    %1342 = vmatprep.subr.mxu0 0.0
    %1343 = vmatpush1.msra.mxu0 0.0
    %1344 = vmatprep.subr.mxu0 0.0
    %1345 = vmatpush1.msra.mxu0 0.0
    %1346 = vmatprep.subr.mxu0 0.0
    %1347 = vmatpush1.msra.mxu0 0.0
    %1348 = vmatprep.subr.mxu0 0.0
    %1349 = vmatpush1.msra.mxu0 0.0
    %1350 = vmatprep.subr.mxu0 0.0
    %1351 = vmatpush1.msra.mxu0 0.0
    %1352 = vmatprep.subr.mxu0 0.0
    %1353 = vmatpush1.msra.mxu0 0.0
    %1354 = vmatprep.subr.mxu0 0.0
    %1355 = vmatpush1.msra.mxu0 0.0
    %1356 = vmatprep.subr.mxu0 0.0
    %1357 = vmatpush1.msra.mxu0 0.0
    %1358 = vmatprep.mubr.f32.mxu0 0.0
    %v1359 = vand.u32 %v698, 4294901760
    %1360 = vmatmul.mubr.f32.gmra.mrb[0].mxu0 %v1359
    %v1361 = vpop.f32.mrb[0].mxu0
    %v1362 = vadd.f32 %v1275, %v1361
    %v1363 = vpop.f32.mrb[0].mxu0
    %1364 = vdwg.mxu0
    %v1365 = vtanh.pop %v1362
    %v1366 = vadd.f32 %v698, %v1365
    %s1367 = scalar_lea.vmem [#allocation2], 256
    %v1368 = vld [vmem:[%s1367] sm:$0xff]
    %v1369 = vld [vmem:[%s1367 + $0x8] sm:$0xff]
    %v1370 = vld [vmem:[%s1367 + $0x10] sm:$0xff]
    %v1371 = vld [vmem:[%s1367 + $0x18] sm:$0xff]
    %v1372 = vld [vmem:[%s1367 + $0x20] sm:$0xff]
    %v1373 = vld [vmem:[%s1367 + $0x28] sm:$0xff]
    %v1374 = vld [vmem:[%s1367 + $0x30] sm:$0xff]
    %v1375 = vld [vmem:[%s1367 + $0x38] sm:$0xff]
    %v1376 = vld [vmem:[%s1367 + $0x40] sm:$0xff]
    %v1377 = vld [vmem:[%s1367 + $0x48] sm:$0xff]
    %v1378 = vld [vmem:[%s1367 + $0x50] sm:$0xff]
    %v1379 = vld [vmem:[%s1367 + $0x58] sm:$0xff]
    %v1380 = vld [vmem:[%s1367 + $0x60] sm:$0xff]
    %v1381 = vld [vmem:[%s1367 + $0x68] sm:$0xff]
    %v1382 = vld [vmem:[%s1367 + $0x70] sm:$0xff]
    %v1383 = vld [vmem:[%s1367 + $0x78] sm:$0xff]
    %s1384 = scalar_lea.vmem %s2, 2
    %v1385 = vld [vmem:[%s1384] sm:$0x1]
    %v1387 = vlaneseq
    %v1388 = vshrl.u32 %v1387, 7
    %v1389 = vsub.s32 0, %v1388
    %v1390 = vrot.slane %v1385, %v1389
    %1392 = vmatprep.subr.mxu0 0.0
    %v1393 = vand.u32 %v1368, 4294901760
    %1394 = vmatpush1.msra.mxu0 %v1393
    %1395 = vmatprep.subr.mxu0 0.0
    %v1396 = vand.u32 %v1369, 4294901760
    %1397 = vmatpush1.msra.mxu0 %v1396
    %1398 = vmatprep.subr.mxu0 0.0
    %v1399 = vand.u32 %v1370, 4294901760
    %1400 = vmatpush1.msra.mxu0 %v1399
    %1401 = vmatprep.subr.mxu0 0.0
    %v1402 = vand.u32 %v1371, 4294901760
    %1403 = vmatpush1.msra.mxu0 %v1402
    %1404 = vmatprep.subr.mxu0 0.0
    %v1405 = vand.u32 %v1372, 4294901760
    %1406 = vmatpush1.msra.mxu0 %v1405
    %1407 = vmatprep.subr.mxu0 0.0
    %v1408 = vand.u32 %v1373, 4294901760
    %1409 = vmatpush1.msra.mxu0 %v1408
    %1410 = vmatprep.subr.mxu0 0.0
    %v1411 = vand.u32 %v1374, 4294901760
    %1412 = vmatpush1.msra.mxu0 %v1411
    %1413 = vmatprep.subr.mxu0 0.0
    %v1414 = vand.u32 %v1375, 4294901760
    %1415 = vmatpush1.msra.mxu0 %v1414
    %1416 = vmatprep.subr.mxu0 0.0
    %v1417 = vand.u32 %v1376, 4294901760
    %1418 = vmatpush1.msra.mxu0 %v1417
    %1419 = vmatprep.subr.mxu0 0.0
    %v1420 = vand.u32 %v1377, 4294901760
    %1421 = vmatpush1.msra.mxu0 %v1420
    %1422 = vmatprep.subr.mxu0 0.0
    %v1423 = vand.u32 %v1378, 4294901760
    %1424 = vmatpush1.msra.mxu0 %v1423
    %1425 = vmatprep.subr.mxu0 0.0
    %v1426 = vand.u32 %v1379, 4294901760
    %1427 = vmatpush1.msra.mxu0 %v1426
    %1428 = vmatprep.subr.mxu0 0.0
    %v1429 = vand.u32 %v1380, 4294901760
    %1430 = vmatpush1.msra.mxu0 %v1429
    %1431 = vmatprep.subr.mxu0 0.0
    %v1432 = vand.u32 %v1381, 4294901760
    %1433 = vmatpush1.msra.mxu0 %v1432
    %1434 = vmatprep.subr.mxu0 0.0
    %v1435 = vand.u32 %v1382, 4294901760
    %1436 = vmatpush1.msra.mxu0 %v1435
    %1437 = vmatprep.subr.mxu0 0.0
    %v1438 = vand.u32 %v1383, 4294901760
    %1439 = vmatpush1.msra.mxu0 %v1438
    %1440 = vmatprep.subr.mxu0 0.0
    %1441 = vmatpush1.msra.mxu0 0.0
    %1442 = vmatprep.subr.mxu0 0.0
    %1443 = vmatpush1.msra.mxu0 0.0
    %1444 = vmatprep.subr.mxu0 0.0
    %1445 = vmatpush1.msra.mxu0 0.0
    %1446 = vmatprep.subr.mxu0 0.0
    %1447 = vmatpush1.msra.mxu0 0.0
    %1448 = vmatprep.subr.mxu0 0.0
    %1449 = vmatpush1.msra.mxu0 0.0
    %1450 = vmatprep.subr.mxu0 0.0
    %1451 = vmatpush1.msra.mxu0 0.0
    %1452 = vmatprep.subr.mxu0 0.0
    %1453 = vmatpush1.msra.mxu0 0.0
    %1454 = vmatprep.subr.mxu0 0.0
    %1455 = vmatpush1.msra.mxu0 0.0
    %1456 = vmatprep.subr.mxu0 0.0
    %1457 = vmatpush1.msra.mxu0 0.0
    %1458 = vmatprep.subr.mxu0 0.0
    %1459 = vmatpush1.msra.mxu0 0.0
    %1460 = vmatprep.subr.mxu0 0.0
    %1461 = vmatpush1.msra.mxu0 0.0
    %1462 = vmatprep.subr.mxu0 0.0
    %1463 = vmatpush1.msra.mxu0 0.0
    %1464 = vmatprep.subr.mxu0 0.0
    %1465 = vmatpush1.msra.mxu0 0.0
    %1466 = vmatprep.subr.mxu0 0.0
    %1467 = vmatpush1.msra.mxu0 0.0
    %1468 = vmatprep.subr.mxu0 0.0
    %1469 = vmatpush1.msra.mxu0 0.0
    %1470 = vmatprep.subr.mxu0 0.0
    %1471 = vmatpush1.msra.mxu0 0.0
    %1472 = vmatprep.mubr.f32.mxu0 0.0
    %v1473 = vand.u32 %v1366, 4294901760
    %v1474 = vsub.f32 %v1366, %v1473
    %v1475 = vand.u32 %v1474, 4294901760
    %v1476 = vsub.f32 %v1474, %v1475
    %v1477 = vand.u32 %v1476, 4294901760
    %1478 = vmatmul.mubr.f32.gmra.mrb[0].mxu0 %v1477
    %v1479 = vpop.f32.mrb[0].mxu0
    %v1480 = vadd.f32 %v1390, %v1479
    %v1481 = vpop.f32.mrb[0].mxu0
    %1482 = vdwg.mxu0
    %1483 = vmatprep.subr.mxu0 0.0
    %v1484 = vand.u32 %v1368, 4294901760
    %v1485 = vsub.f32 %v1368, %v1484
    %v1486 = vand.u32 %v1485, 4294901760
    %v1487 = vsub.f32 %v1485, %v1486
    %v1488 = vand.u32 %v1487, 4294901760
    %1489 = vmatpush1.msra.mxu0 %v1488
    %1490 = vmatprep.subr.mxu0 0.0
    %v1491 = vand.u32 %v1369, 4294901760
    %v1492 = vsub.f32 %v1369, %v1491
    %v1493 = vand.u32 %v1492, 4294901760
    %v1494 = vsub.f32 %v1492, %v1493
    %v1495 = vand.u32 %v1494, 4294901760
    %1496 = vmatpush1.msra.mxu0 %v1495
    %1497 = vmatprep.subr.mxu0 0.0
    %v1498 = vand.u32 %v1370, 4294901760
    %v1499 = vsub.f32 %v1370, %v1498
    %v1500 = vand.u32 %v1499, 4294901760
    %v1501 = vsub.f32 %v1499, %v1500
    %v1502 = vand.u32 %v1501, 4294901760
    %1503 = vmatpush1.msra.mxu0 %v1502
    %1504 = vmatprep.subr.mxu0 0.0
    %v1505 = vand.u32 %v1371, 4294901760
    %v1506 = vsub.f32 %v1371, %v1505
    %v1507 = vand.u32 %v1506, 4294901760
    %v1508 = vsub.f32 %v1506, %v1507
    %v1509 = vand.u32 %v1508, 4294901760
    %1510 = vmatpush1.msra.mxu0 %v1509
    %1511 = vmatprep.subr.mxu0 0.0
    %v1512 = vand.u32 %v1372, 4294901760
    %v1513 = vsub.f32 %v1372, %v1512
    %v1514 = vand.u32 %v1513, 4294901760
    %v1515 = vsub.f32 %v1513, %v1514
    %v1516 = vand.u32 %v1515, 4294901760
    %1517 = vmatpush1.msra.mxu0 %v1516
    %1518 = vmatprep.subr.mxu0 0.0
    %v1519 = vand.u32 %v1373, 4294901760
    %v1520 = vsub.f32 %v1373, %v1519
    %v1521 = vand.u32 %v1520, 4294901760
    %v1522 = vsub.f32 %v1520, %v1521
    %v1523 = vand.u32 %v1522, 4294901760
    %1524 = vmatpush1.msra.mxu0 %v1523
    %1525 = vmatprep.subr.mxu0 0.0
    %v1526 = vand.u32 %v1374, 4294901760
    %v1527 = vsub.f32 %v1374, %v1526
    %v1528 = vand.u32 %v1527, 4294901760
    %v1529 = vsub.f32 %v1527, %v1528
    %v1530 = vand.u32 %v1529, 4294901760
    %1531 = vmatpush1.msra.mxu0 %v1530
    %1532 = vmatprep.subr.mxu0 0.0
    %v1533 = vand.u32 %v1375, 4294901760
    %v1534 = vsub.f32 %v1375, %v1533
    %v1535 = vand.u32 %v1534, 4294901760
    %v1536 = vsub.f32 %v1534, %v1535
    %v1537 = vand.u32 %v1536, 4294901760
    %1538 = vmatpush1.msra.mxu0 %v1537
    %1539 = vmatprep.subr.mxu0 0.0
    %v1540 = vand.u32 %v1376, 4294901760
    %v1541 = vsub.f32 %v1376, %v1540
    %v1542 = vand.u32 %v1541, 4294901760
    %v1543 = vsub.f32 %v1541, %v1542
    %v1544 = vand.u32 %v1543, 4294901760
    %1545 = vmatpush1.msra.mxu0 %v1544
    %1546 = vmatprep.subr.mxu0 0.0
    %v1547 = vand.u32 %v1377, 4294901760
    %v1548 = vsub.f32 %v1377, %v1547
    %v1549 = vand.u32 %v1548, 4294901760
    %v1550 = vsub.f32 %v1548, %v1549
    %v1551 = vand.u32 %v1550, 4294901760
    %1552 = vmatpush1.msra.mxu0 %v1551
    %1553 = vmatprep.subr.mxu0 0.0
    %v1554 = vand.u32 %v1378, 4294901760
    %v1555 = vsub.f32 %v1378, %v1554
    %v1556 = vand.u32 %v1555, 4294901760
    %v1557 = vsub.f32 %v1555, %v1556
    %v1558 = vand.u32 %v1557, 4294901760
    %1559 = vmatpush1.msra.mxu0 %v1558
    %1560 = vmatprep.subr.mxu0 0.0
    %v1561 = vand.u32 %v1379, 4294901760
    %v1562 = vsub.f32 %v1379, %v1561
    %v1563 = vand.u32 %v1562, 4294901760
    %v1564 = vsub.f32 %v1562, %v1563
    %v1565 = vand.u32 %v1564, 4294901760
    %1566 = vmatpush1.msra.mxu0 %v1565
    %1567 = vmatprep.subr.mxu0 0.0
    %v1568 = vand.u32 %v1380, 4294901760
    %v1569 = vsub.f32 %v1380, %v1568
    %v1570 = vand.u32 %v1569, 4294901760
    %v1571 = vsub.f32 %v1569, %v1570
    %v1572 = vand.u32 %v1571, 4294901760
    %1573 = vmatpush1.msra.mxu0 %v1572
    %1574 = vmatprep.subr.mxu0 0.0
    %v1575 = vand.u32 %v1381, 4294901760
    %v1576 = vsub.f32 %v1381, %v1575
    %v1577 = vand.u32 %v1576, 4294901760
    %v1578 = vsub.f32 %v1576, %v1577
    %v1579 = vand.u32 %v1578, 4294901760
    %1580 = vmatpush1.msra.mxu0 %v1579
    %1581 = vmatprep.subr.mxu0 0.0
    %v1582 = vand.u32 %v1382, 4294901760
    %v1583 = vsub.f32 %v1382, %v1582
    %v1584 = vand.u32 %v1583, 4294901760
    %v1585 = vsub.f32 %v1583, %v1584
    %v1586 = vand.u32 %v1585, 4294901760
    %1587 = vmatpush1.msra.mxu0 %v1586
    %1588 = vmatprep.subr.mxu0 0.0
    %v1589 = vand.u32 %v1383, 4294901760
    %v1590 = vsub.f32 %v1383, %v1589
    %v1591 = vand.u32 %v1590, 4294901760
    %v1592 = vsub.f32 %v1590, %v1591
    %v1593 = vand.u32 %v1592, 4294901760
    %1594 = vmatpush1.msra.mxu0 %v1593
    %1595 = vmatprep.subr.mxu0 0.0
    %1596 = vmatpush1.msra.mxu0 0.0
    %1597 = vmatprep.subr.mxu0 0.0
    %1598 = vmatpush1.msra.mxu0 0.0
    %1599 = vmatprep.subr.mxu0 0.0
    %1600 = vmatpush1.msra.mxu0 0.0
    %1601 = vmatprep.subr.mxu0 0.0
    %1602 = vmatpush1.msra.mxu0 0.0
    %1603 = vmatprep.subr.mxu0 0.0
    %1604 = vmatpush1.msra.mxu0 0.0
    %1605 = vmatprep.subr.mxu0 0.0
    %1606 = vmatpush1.msra.mxu0 0.0
    %1607 = vmatprep.subr.mxu0 0.0
    %1608 = vmatpush1.msra.mxu0 0.0
    %1609 = vmatprep.subr.mxu0 0.0
    %1610 = vmatpush1.msra.mxu0 0.0
    %1611 = vmatprep.subr.mxu0 0.0
    %1612 = vmatpush1.msra.mxu0 0.0
    %1613 = vmatprep.subr.mxu0 0.0
    %1614 = vmatpush1.msra.mxu0 0.0
    %1615 = vmatprep.subr.mxu0 0.0
    %1616 = vmatpush1.msra.mxu0 0.0
    %1617 = vmatprep.subr.mxu0 0.0
    %1618 = vmatpush1.msra.mxu0 0.0
    %1619 = vmatprep.subr.mxu0 0.0
    %1620 = vmatpush1.msra.mxu0 0.0
    %1621 = vmatprep.subr.mxu0 0.0
    %1622 = vmatpush1.msra.mxu0 0.0
    %1623 = vmatprep.subr.mxu0 0.0
    %1624 = vmatpush1.msra.mxu0 0.0
    %1625 = vmatprep.subr.mxu0 0.0
    %1626 = vmatpush1.msra.mxu0 0.0
    %1627 = vmatprep.mubr.f32.mxu0 0.0
    %v1628 = vand.u32 %v1366, 4294901760
    %1629 = vmatmul.mubr.f32.gmra.mrb[0].mxu0 %v1628
    %v1630 = vpop.f32.mrb[0].mxu0
    %v1631 = vadd.f32 %v1480, %v1630
    %v1632 = vpop.f32.mrb[0].mxu0
    %1633 = vdwg.mxu0
    %1634 = vmatprep.subr.mxu0 0.0
    %v1635 = vand.u32 %v1368, 4294901760
    %v1636 = vsub.f32 %v1368, %v1635
    %1637 = vmatpush1.msra.mxu0 %v1636
    %1638 = vmatprep.subr.mxu0 0.0
    %v1639 = vand.u32 %v1369, 4294901760
    %v1640 = vsub.f32 %v1369, %v1639
    %1641 = vmatpush1.msra.mxu0 %v1640
    %1642 = vmatprep.subr.mxu0 0.0
    %v1643 = vand.u32 %v1370, 4294901760
    %v1644 = vsub.f32 %v1370, %v1643
    %1645 = vmatpush1.msra.mxu0 %v1644
    %1646 = vmatprep.subr.mxu0 0.0
    %v1647 = vand.u32 %v1371, 4294901760
    %v1648 = vsub.f32 %v1371, %v1647
    %1649 = vmatpush1.msra.mxu0 %v1648
    %1650 = vmatprep.subr.mxu0 0.0
    %v1651 = vand.u32 %v1372, 4294901760
    %v1652 = vsub.f32 %v1372, %v1651
    %1653 = vmatpush1.msra.mxu0 %v1652
    %1654 = vmatprep.subr.mxu0 0.0
    %v1655 = vand.u32 %v1373, 4294901760
    %v1656 = vsub.f32 %v1373, %v1655
    %1657 = vmatpush1.msra.mxu0 %v1656
    %1658 = vmatprep.subr.mxu0 0.0
    %v1659 = vand.u32 %v1374, 4294901760
    %v1660 = vsub.f32 %v1374, %v1659
    %1661 = vmatpush1.msra.mxu0 %v1660
    %1662 = vmatprep.subr.mxu0 0.0
    %v1663 = vand.u32 %v1375, 4294901760
    %v1664 = vsub.f32 %v1375, %v1663
    %1665 = vmatpush1.msra.mxu0 %v1664
    %1666 = vmatprep.subr.mxu0 0.0
    %v1667 = vand.u32 %v1376, 4294901760
    %v1668 = vsub.f32 %v1376, %v1667
    %1669 = vmatpush1.msra.mxu0 %v1668
    %1670 = vmatprep.subr.mxu0 0.0
    %v1671 = vand.u32 %v1377, 4294901760
    %v1672 = vsub.f32 %v1377, %v1671
    %1673 = vmatpush1.msra.mxu0 %v1672
    %1674 = vmatprep.subr.mxu0 0.0
    %v1675 = vand.u32 %v1378, 4294901760
    %v1676 = vsub.f32 %v1378, %v1675
    %1677 = vmatpush1.msra.mxu0 %v1676
    %1678 = vmatprep.subr.mxu0 0.0
    %v1679 = vand.u32 %v1379, 4294901760
    %v1680 = vsub.f32 %v1379, %v1679
    %1681 = vmatpush1.msra.mxu0 %v1680
    %1682 = vmatprep.subr.mxu0 0.0
    %v1683 = vand.u32 %v1380, 4294901760
    %v1684 = vsub.f32 %v1380, %v1683
    %1685 = vmatpush1.msra.mxu0 %v1684
    %1686 = vmatprep.subr.mxu0 0.0
    %v1687 = vand.u32 %v1381, 4294901760
    %v1688 = vsub.f32 %v1381, %v1687
    %1689 = vmatpush1.msra.mxu0 %v1688
    %1690 = vmatprep.subr.mxu0 0.0
    %v1691 = vand.u32 %v1382, 4294901760
    %v1692 = vsub.f32 %v1382, %v1691
    %1693 = vmatpush1.msra.mxu0 %v1692
    %1694 = vmatprep.subr.mxu0 0.0
    %v1695 = vand.u32 %v1383, 4294901760
    %v1696 = vsub.f32 %v1383, %v1695
    %1697 = vmatpush1.msra.mxu0 %v1696
    %1698 = vmatprep.subr.mxu0 0.0
    %1699 = vmatpush1.msra.mxu0 0.0
    %1700 = vmatprep.subr.mxu0 0.0
    %1701 = vmatpush1.msra.mxu0 0.0
    %1702 = vmatprep.subr.mxu0 0.0
    %1703 = vmatpush1.msra.mxu0 0.0
    %1704 = vmatprep.subr.mxu0 0.0
    %1705 = vmatpush1.msra.mxu0 0.0
    %1706 = vmatprep.subr.mxu0 0.0
    %1707 = vmatpush1.msra.mxu0 0.0
    %1708 = vmatprep.subr.mxu0 0.0
    %1709 = vmatpush1.msra.mxu0 0.0
    %1710 = vmatprep.subr.mxu0 0.0
    %1711 = vmatpush1.msra.mxu0 0.0
    %1712 = vmatprep.subr.mxu0 0.0
    %1713 = vmatpush1.msra.mxu0 0.0
    %1714 = vmatprep.subr.mxu0 0.0
    %1715 = vmatpush1.msra.mxu0 0.0
    %1716 = vmatprep.subr.mxu0 0.0
    %1717 = vmatpush1.msra.mxu0 0.0
    %1718 = vmatprep.subr.mxu0 0.0
    %1719 = vmatpush1.msra.mxu0 0.0
    %1720 = vmatprep.subr.mxu0 0.0
    %1721 = vmatpush1.msra.mxu0 0.0
    %1722 = vmatprep.subr.mxu0 0.0
    %1723 = vmatpush1.msra.mxu0 0.0
    %1724 = vmatprep.subr.mxu0 0.0
    %1725 = vmatpush1.msra.mxu0 0.0
    %1726 = vmatprep.subr.mxu0 0.0
    %1727 = vmatpush1.msra.mxu0 0.0
    %1728 = vmatprep.subr.mxu0 0.0
    %1729 = vmatpush1.msra.mxu0 0.0
    %1730 = vmatprep.mubr.f32.mxu0 0.0
    %v1731 = vand.u32 %v1366, 4294901760
    %v1732 = vsub.f32 %v1366, %v1731
    %1733 = vmatmul.mubr.f32.gmra.mrb[0].mxu0 %v1732
    %v1734 = vpop.f32.mrb[0].mxu0
    %v1735 = vadd.f32 %v1631, %v1734
    %v1736 = vpop.f32.mrb[0].mxu0
    %1737 = vdwg.mxu0
    %1738 = vmatprep.subr.mxu0 0.0
    %v1739 = vand.u32 %v1368, 4294901760
    %1740 = vmatpush1.msra.mxu0 %v1739
    %1741 = vmatprep.subr.mxu0 0.0
    %v1742 = vand.u32 %v1369, 4294901760
    %1743 = vmatpush1.msra.mxu0 %v1742
    %1744 = vmatprep.subr.mxu0 0.0
    %v1745 = vand.u32 %v1370, 4294901760
    %1746 = vmatpush1.msra.mxu0 %v1745
    %1747 = vmatprep.subr.mxu0 0.0
    %v1748 = vand.u32 %v1371, 4294901760
    %1749 = vmatpush1.msra.mxu0 %v1748
    %1750 = vmatprep.subr.mxu0 0.0
    %v1751 = vand.u32 %v1372, 4294901760
    %1752 = vmatpush1.msra.mxu0 %v1751
    %1753 = vmatprep.subr.mxu0 0.0
    %v1754 = vand.u32 %v1373, 4294901760
    %1755 = vmatpush1.msra.mxu0 %v1754
    %1756 = vmatprep.subr.mxu0 0.0
    %v1757 = vand.u32 %v1374, 4294901760
    %1758 = vmatpush1.msra.mxu0 %v1757
    %1759 = vmatprep.subr.mxu0 0.0
    %v1760 = vand.u32 %v1375, 4294901760
    %1761 = vmatpush1.msra.mxu0 %v1760
    %1762 = vmatprep.subr.mxu0 0.0
    %v1763 = vand.u32 %v1376, 4294901760
    %1764 = vmatpush1.msra.mxu0 %v1763
    %1765 = vmatprep.subr.mxu0 0.0
    %v1766 = vand.u32 %v1377, 4294901760
    %1767 = vmatpush1.msra.mxu0 %v1766
    %1768 = vmatprep.subr.mxu0 0.0
    %v1769 = vand.u32 %v1378, 4294901760
    %1770 = vmatpush1.msra.mxu0 %v1769
    %1771 = vmatprep.subr.mxu0 0.0
    %v1772 = vand.u32 %v1379, 4294901760
    %1773 = vmatpush1.msra.mxu0 %v1772
    %1774 = vmatprep.subr.mxu0 0.0
    %v1775 = vand.u32 %v1380, 4294901760
    %1776 = vmatpush1.msra.mxu0 %v1775
    %1777 = vmatprep.subr.mxu0 0.0
    %v1778 = vand.u32 %v1381, 4294901760
    %1779 = vmatpush1.msra.mxu0 %v1778
    %1780 = vmatprep.subr.mxu0 0.0
    %v1781 = vand.u32 %v1382, 4294901760
    %1782 = vmatpush1.msra.mxu0 %v1781
    %1783 = vmatprep.subr.mxu0 0.0
    %v1784 = vand.u32 %v1383, 4294901760
    %1785 = vmatpush1.msra.mxu0 %v1784
    %1786 = vmatprep.subr.mxu0 0.0
    %1787 = vmatpush1.msra.mxu0 0.0
    %1788 = vmatprep.subr.mxu0 0.0
    %1789 = vmatpush1.msra.mxu0 0.0
    %1790 = vmatprep.subr.mxu0 0.0
    %1791 = vmatpush1.msra.mxu0 0.0
    %1792 = vmatprep.subr.mxu0 0.0
    %1793 = vmatpush1.msra.mxu0 0.0
    %1794 = vmatprep.subr.mxu0 0.0
    %1795 = vmatpush1.msra.mxu0 0.0
    %1796 = vmatprep.subr.mxu0 0.0
    %1797 = vmatpush1.msra.mxu0 0.0
    %1798 = vmatprep.subr.mxu0 0.0
    %1799 = vmatpush1.msra.mxu0 0.0
    %1800 = vmatprep.subr.mxu0 0.0
    %1801 = vmatpush1.msra.mxu0 0.0
    %1802 = vmatprep.subr.mxu0 0.0
    %1803 = vmatpush1.msra.mxu0 0.0
    %1804 = vmatprep.subr.mxu0 0.0
    %1805 = vmatpush1.msra.mxu0 0.0
    %1806 = vmatprep.subr.mxu0 0.0
    %1807 = vmatpush1.msra.mxu0 0.0
    %1808 = vmatprep.subr.mxu0 0.0
    %1809 = vmatpush1.msra.mxu0 0.0
    %1810 = vmatprep.subr.mxu0 0.0
    %1811 = vmatpush1.msra.mxu0 0.0
    %1812 = vmatprep.subr.mxu0 0.0
    %1813 = vmatpush1.msra.mxu0 0.0
    %1814 = vmatprep.subr.mxu0 0.0
    %1815 = vmatpush1.msra.mxu0 0.0
    %1816 = vmatprep.subr.mxu0 0.0
    %1817 = vmatpush1.msra.mxu0 0.0
    %1818 = vmatprep.mubr.f32.mxu0 0.0
    %v1819 = vand.u32 %v1366, 4294901760
    %v1820 = vsub.f32 %v1366, %v1819
    %v1821 = vand.u32 %v1820, 4294901760
    %1822 = vmatmul.mubr.f32.gmra.mrb[0].mxu0 %v1821
    %v1823 = vpop.f32.mrb[0].mxu0
    %v1824 = vadd.f32 %v1735, %v1823
    %v1825 = vpop.f32.mrb[0].mxu0
    %1826 = vdwg.mxu0
    %1827 = vmatprep.subr.mxu0 0.0
    %v1828 = vand.u32 %v1368, 4294901760
    %v1829 = vsub.f32 %v1368, %v1828
    %v1830 = vand.u32 %v1829, 4294901760
    %1831 = vmatpush1.msra.mxu0 %v1830
    %1832 = vmatprep.subr.mxu0 0.0
    %v1833 = vand.u32 %v1369, 4294901760
    %v1834 = vsub.f32 %v1369, %v1833
    %v1835 = vand.u32 %v1834, 4294901760
    %1836 = vmatpush1.msra.mxu0 %v1835
    %1837 = vmatprep.subr.mxu0 0.0
    %v1838 = vand.u32 %v1370, 4294901760
    %v1839 = vsub.f32 %v1370, %v1838
    %v1840 = vand.u32 %v1839, 4294901760
    %1841 = vmatpush1.msra.mxu0 %v1840
    %1842 = vmatprep.subr.mxu0 0.0
    %v1843 = vand.u32 %v1371, 4294901760
    %v1844 = vsub.f32 %v1371, %v1843
    %v1845 = vand.u32 %v1844, 4294901760
    %1846 = vmatpush1.msra.mxu0 %v1845
    %1847 = vmatprep.subr.mxu0 0.0
    %v1848 = vand.u32 %v1372, 4294901760
    %v1849 = vsub.f32 %v1372, %v1848
    %v1850 = vand.u32 %v1849, 4294901760
    %1851 = vmatpush1.msra.mxu0 %v1850
    %1852 = vmatprep.subr.mxu0 0.0
    %v1853 = vand.u32 %v1373, 4294901760
    %v1854 = vsub.f32 %v1373, %v1853
    %v1855 = vand.u32 %v1854, 4294901760
    %1856 = vmatpush1.msra.mxu0 %v1855
    %1857 = vmatprep.subr.mxu0 0.0
    %v1858 = vand.u32 %v1374, 4294901760
    %v1859 = vsub.f32 %v1374, %v1858
    %v1860 = vand.u32 %v1859, 4294901760
    %1861 = vmatpush1.msra.mxu0 %v1860
    %1862 = vmatprep.subr.mxu0 0.0
    %v1863 = vand.u32 %v1375, 4294901760
    %v1864 = vsub.f32 %v1375, %v1863
    %v1865 = vand.u32 %v1864, 4294901760
    %1866 = vmatpush1.msra.mxu0 %v1865
    %1867 = vmatprep.subr.mxu0 0.0
    %v1868 = vand.u32 %v1376, 4294901760
    %v1869 = vsub.f32 %v1376, %v1868
    %v1870 = vand.u32 %v1869, 4294901760
    %1871 = vmatpush1.msra.mxu0 %v1870
    %1872 = vmatprep.subr.mxu0 0.0
    %v1873 = vand.u32 %v1377, 4294901760
    %v1874 = vsub.f32 %v1377, %v1873
    %v1875 = vand.u32 %v1874, 4294901760
    %1876 = vmatpush1.msra.mxu0 %v1875
    %1877 = vmatprep.subr.mxu0 0.0
    %v1878 = vand.u32 %v1378, 4294901760
    %v1879 = vsub.f32 %v1378, %v1878
    %v1880 = vand.u32 %v1879, 4294901760
    %1881 = vmatpush1.msra.mxu0 %v1880
    %1882 = vmatprep.subr.mxu0 0.0
    %v1883 = vand.u32 %v1379, 4294901760
    %v1884 = vsub.f32 %v1379, %v1883
    %v1885 = vand.u32 %v1884, 4294901760
    %1886 = vmatpush1.msra.mxu0 %v1885
    %1887 = vmatprep.subr.mxu0 0.0
    %v1888 = vand.u32 %v1380, 4294901760
    %v1889 = vsub.f32 %v1380, %v1888
    %v1890 = vand.u32 %v1889, 4294901760
    %1891 = vmatpush1.msra.mxu0 %v1890
    %1892 = vmatprep.subr.mxu0 0.0
    %v1893 = vand.u32 %v1381, 4294901760
    %v1894 = vsub.f32 %v1381, %v1893
    %v1895 = vand.u32 %v1894, 4294901760
    %1896 = vmatpush1.msra.mxu0 %v1895
    %1897 = vmatprep.subr.mxu0 0.0
    %v1898 = vand.u32 %v1382, 4294901760
    %v1899 = vsub.f32 %v1382, %v1898
    %v1900 = vand.u32 %v1899, 4294901760
    %1901 = vmatpush1.msra.mxu0 %v1900
    %1902 = vmatprep.subr.mxu0 0.0
    %v1903 = vand.u32 %v1383, 4294901760
    %v1904 = vsub.f32 %v1383, %v1903
    %v1905 = vand.u32 %v1904, 4294901760
    %1906 = vmatpush1.msra.mxu0 %v1905
    %1907 = vmatprep.subr.mxu0 0.0
    %1908 = vmatpush1.msra.mxu0 0.0
    %1909 = vmatprep.subr.mxu0 0.0
    %1910 = vmatpush1.msra.mxu0 0.0
    %1911 = vmatprep.subr.mxu0 0.0
    %1912 = vmatpush1.msra.mxu0 0.0
    %1913 = vmatprep.subr.mxu0 0.0
    %1914 = vmatpush1.msra.mxu0 0.0
    %1915 = vmatprep.subr.mxu0 0.0
    %1916 = vmatpush1.msra.mxu0 0.0
    %1917 = vmatprep.subr.mxu0 0.0
    %1918 = vmatpush1.msra.mxu0 0.0
    %1919 = vmatprep.subr.mxu0 0.0
    %1920 = vmatpush1.msra.mxu0 0.0
    %1921 = vmatprep.subr.mxu0 0.0
    %1922 = vmatpush1.msra.mxu0 0.0
    %1923 = vmatprep.subr.mxu0 0.0
    %1924 = vmatpush1.msra.mxu0 0.0
    %1925 = vmatprep.subr.mxu0 0.0
    %1926 = vmatpush1.msra.mxu0 0.0
    %1927 = vmatprep.subr.mxu0 0.0
    %1928 = vmatpush1.msra.mxu0 0.0
    %1929 = vmatprep.subr.mxu0 0.0
    %1930 = vmatpush1.msra.mxu0 0.0
    %1931 = vmatprep.subr.mxu0 0.0
    %1932 = vmatpush1.msra.mxu0 0.0
    %1933 = vmatprep.subr.mxu0 0.0
    %1934 = vmatpush1.msra.mxu0 0.0
    %1935 = vmatprep.subr.mxu0 0.0
    %1936 = vmatpush1.msra.mxu0 0.0
    %1937 = vmatprep.subr.mxu0 0.0
    %1938 = vmatpush1.msra.mxu0 0.0
    %1939 = vmatprep.mubr.f32.mxu0 0.0
    %v1940 = vand.u32 %v1366, 4294901760
    %1941 = vmatmul.mubr.f32.gmra.mrb[0].mxu0 %v1940
    %v1942 = vpop.f32.mrb[0].mxu0
    %v1943 = vadd.f32 %v1824, %v1942
    %v1944 = vpop.f32.mrb[0].mxu0
    %1945 = vdwg.mxu0
    %1946 = vmatprep.subr.mxu0 0.0
    %v1947 = vand.u32 %v1368, 4294901760
    %1948 = vmatpush1.msra.mxu0 %v1947
    %1949 = vmatprep.subr.mxu0 0.0
    %v1950 = vand.u32 %v1369, 4294901760
    %1951 = vmatpush1.msra.mxu0 %v1950
    %1952 = vmatprep.subr.mxu0 0.0
    %v1953 = vand.u32 %v1370, 4294901760
    %1954 = vmatpush1.msra.mxu0 %v1953
    %1955 = vmatprep.subr.mxu0 0.0
    %v1956 = vand.u32 %v1371, 4294901760
    %1957 = vmatpush1.msra.mxu0 %v1956
    %1958 = vmatprep.subr.mxu0 0.0
    %v1959 = vand.u32 %v1372, 4294901760
    %1960 = vmatpush1.msra.mxu0 %v1959
    %1961 = vmatprep.subr.mxu0 0.0
    %v1962 = vand.u32 %v1373, 4294901760
    %1963 = vmatpush1.msra.mxu0 %v1962
    %1964 = vmatprep.subr.mxu0 0.0
    %v1965 = vand.u32 %v1374, 4294901760
    %1966 = vmatpush1.msra.mxu0 %v1965
    %1967 = vmatprep.subr.mxu0 0.0
    %v1968 = vand.u32 %v1375, 4294901760
    %1969 = vmatpush1.msra.mxu0 %v1968
    %1970 = vmatprep.subr.mxu0 0.0
    %v1971 = vand.u32 %v1376, 4294901760
    %1972 = vmatpush1.msra.mxu0 %v1971
    %1973 = vmatprep.subr.mxu0 0.0
    %v1974 = vand.u32 %v1377, 4294901760
    %1975 = vmatpush1.msra.mxu0 %v1974
    %1976 = vmatprep.subr.mxu0 0.0
    %v1977 = vand.u32 %v1378, 4294901760
    %1978 = vmatpush1.msra.mxu0 %v1977
    %1979 = vmatprep.subr.mxu0 0.0
    %v1980 = vand.u32 %v1379, 4294901760
    %1981 = vmatpush1.msra.mxu0 %v1980
    %1982 = vmatprep.subr.mxu0 0.0
    %v1983 = vand.u32 %v1380, 4294901760
    %1984 = vmatpush1.msra.mxu0 %v1983
    %1985 = vmatprep.subr.mxu0 0.0
    %v1986 = vand.u32 %v1381, 4294901760
    %1987 = vmatpush1.msra.mxu0 %v1986
    %1988 = vmatprep.subr.mxu0 0.0
    %v1989 = vand.u32 %v1382, 4294901760
    %1990 = vmatpush1.msra.mxu0 %v1989
    %1991 = vmatprep.subr.mxu0 0.0
    %v1992 = vand.u32 %v1383, 4294901760
    %1993 = vmatpush1.msra.mxu0 %v1992
    %1994 = vmatprep.subr.mxu0 0.0
    %1995 = vmatpush1.msra.mxu0 0.0
    %1996 = vmatprep.subr.mxu0 0.0
    %1997 = vmatpush1.msra.mxu0 0.0
    %1998 = vmatprep.subr.mxu0 0.0
    %1999 = vmatpush1.msra.mxu0 0.0
    %2000 = vmatprep.subr.mxu0 0.0
    %2001 = vmatpush1.msra.mxu0 0.0
    %2002 = vmatprep.subr.mxu0 0.0
    %2003 = vmatpush1.msra.mxu0 0.0
    %2004 = vmatprep.subr.mxu0 0.0
    %2005 = vmatpush1.msra.mxu0 0.0
    %2006 = vmatprep.subr.mxu0 0.0
    %2007 = vmatpush1.msra.mxu0 0.0
    %2008 = vmatprep.subr.mxu0 0.0
    %2009 = vmatpush1.msra.mxu0 0.0
    %2010 = vmatprep.subr.mxu0 0.0
    %2011 = vmatpush1.msra.mxu0 0.0
    %2012 = vmatprep.subr.mxu0 0.0
    %2013 = vmatpush1.msra.mxu0 0.0
    %2014 = vmatprep.subr.mxu0 0.0
    %2015 = vmatpush1.msra.mxu0 0.0
    %2016 = vmatprep.subr.mxu0 0.0
    %2017 = vmatpush1.msra.mxu0 0.0
    %2018 = vmatprep.subr.mxu0 0.0
    %2019 = vmatpush1.msra.mxu0 0.0
    %2020 = vmatprep.subr.mxu0 0.0
    %2021 = vmatpush1.msra.mxu0 0.0
    %2022 = vmatprep.subr.mxu0 0.0
    %2023 = vmatpush1.msra.mxu0 0.0
    %2024 = vmatprep.subr.mxu0 0.0
    %2025 = vmatpush1.msra.mxu0 0.0
    %2026 = vmatprep.mubr.f32.mxu0 0.0
    %v2027 = vand.u32 %v1366, 4294901760
    %2028 = vmatmul.mubr.f32.gmra.mrb[0].mxu0 %v2027
    %v2029 = vpop.f32.mrb[0].mxu0
    %v2030 = vadd.f32 %v1943, %v2029
    %v2031 = vpop.f32.mrb[0].mxu0
    %2032 = vdwg.mxu0
    %v2033 = vtanh.pop %v2030
    %v2034 = vadd.f32 %v1366, %v2033
    %s2035 = scalar_lea.vmem [#allocation2], 384
    %v2036 = vld [vmem:[%s2035] sm:$0xff]
    %v2037 = vld [vmem:[%s2035 + $0x8] sm:$0xff]
    %v2038 = vld [vmem:[%s2035 + $0x10] sm:$0xff]
    %v2039 = vld [vmem:[%s2035 + $0x18] sm:$0xff]
    %v2040 = vld [vmem:[%s2035 + $0x20] sm:$0xff]
    %v2041 = vld [vmem:[%s2035 + $0x28] sm:$0xff]
    %v2042 = vld [vmem:[%s2035 + $0x30] sm:$0xff]
    %v2043 = vld [vmem:[%s2035 + $0x38] sm:$0xff]
    %v2044 = vld [vmem:[%s2035 + $0x40] sm:$0xff]
    %v2045 = vld [vmem:[%s2035 + $0x48] sm:$0xff]
    %v2046 = vld [vmem:[%s2035 + $0x50] sm:$0xff]
    %v2047 = vld [vmem:[%s2035 + $0x58] sm:$0xff]
    %v2048 = vld [vmem:[%s2035 + $0x60] sm:$0xff]
    %v2049 = vld [vmem:[%s2035 + $0x68] sm:$0xff]
    %v2050 = vld [vmem:[%s2035 + $0x70] sm:$0xff]
    %v2051 = vld [vmem:[%s2035 + $0x78] sm:$0xff]
    %s2052 = scalar_lea.vmem %s2, 3
    %v2053 = vld [vmem:[%s2052] sm:$0x1]
    %v2055 = vlaneseq
    %v2056 = vshrl.u32 %v2055, 7
    %v2057 = vsub.s32 0, %v2056
    %v2058 = vrot.slane %v2053, %v2057
    %2060 = vmatprep.subr.mxu0 0.0
    %v2061 = vand.u32 %v2036, 4294901760
    %2062 = vmatpush1.msra.mxu0 %v2061
    %2063 = vmatprep.subr.mxu0 0.0
    %v2064 = vand.u32 %v2037, 4294901760
    %2065 = vmatpush1.msra.mxu0 %v2064
    %2066 = vmatprep.subr.mxu0 0.0
    %v2067 = vand.u32 %v2038, 4294901760
    %2068 = vmatpush1.msra.mxu0 %v2067
    %2069 = vmatprep.subr.mxu0 0.0
    %v2070 = vand.u32 %v2039, 4294901760
    %2071 = vmatpush1.msra.mxu0 %v2070
    %2072 = vmatprep.subr.mxu0 0.0
    %v2073 = vand.u32 %v2040, 4294901760
    %2074 = vmatpush1.msra.mxu0 %v2073
    %2075 = vmatprep.subr.mxu0 0.0
    %v2076 = vand.u32 %v2041, 4294901760
    %2077 = vmatpush1.msra.mxu0 %v2076
    %2078 = vmatprep.subr.mxu0 0.0
    %v2079 = vand.u32 %v2042, 4294901760
    %2080 = vmatpush1.msra.mxu0 %v2079
    %2081 = vmatprep.subr.mxu0 0.0
    %v2082 = vand.u32 %v2043, 4294901760
    %2083 = vmatpush1.msra.mxu0 %v2082
    %2084 = vmatprep.subr.mxu0 0.0
    %v2085 = vand.u32 %v2044, 4294901760
    %2086 = vmatpush1.msra.mxu0 %v2085
    %2087 = vmatprep.subr.mxu0 0.0
    %v2088 = vand.u32 %v2045, 4294901760
    %2089 = vmatpush1.msra.mxu0 %v2088
    %2090 = vmatprep.subr.mxu0 0.0
    %v2091 = vand.u32 %v2046, 4294901760
    %2092 = vmatpush1.msra.mxu0 %v2091
    %2093 = vmatprep.subr.mxu0 0.0
    %v2094 = vand.u32 %v2047, 4294901760
    %2095 = vmatpush1.msra.mxu0 %v2094
    %2096 = vmatprep.subr.mxu0 0.0
    %v2097 = vand.u32 %v2048, 4294901760
    %2098 = vmatpush1.msra.mxu0 %v2097
    %2099 = vmatprep.subr.mxu0 0.0
    %v2100 = vand.u32 %v2049, 4294901760
    %2101 = vmatpush1.msra.mxu0 %v2100
    %2102 = vmatprep.subr.mxu0 0.0
    %v2103 = vand.u32 %v2050, 4294901760
    %2104 = vmatpush1.msra.mxu0 %v2103
    %2105 = vmatprep.subr.mxu0 0.0
    %v2106 = vand.u32 %v2051, 4294901760
    %2107 = vmatpush1.msra.mxu0 %v2106
    %2108 = vmatprep.subr.mxu0 0.0
    %2109 = vmatpush1.msra.mxu0 0.0
    %2110 = vmatprep.subr.mxu0 0.0
    %2111 = vmatpush1.msra.mxu0 0.0
    %2112 = vmatprep.subr.mxu0 0.0
    %2113 = vmatpush1.msra.mxu0 0.0
    %2114 = vmatprep.subr.mxu0 0.0
    %2115 = vmatpush1.msra.mxu0 0.0
    %2116 = vmatprep.subr.mxu0 0.0
    %2117 = vmatpush1.msra.mxu0 0.0
    %2118 = vmatprep.subr.mxu0 0.0
    %2119 = vmatpush1.msra.mxu0 0.0
    %2120 = vmatprep.subr.mxu0 0.0
    %2121 = vmatpush1.msra.mxu0 0.0
    %2122 = vmatprep.subr.mxu0 0.0
    %2123 = vmatpush1.msra.mxu0 0.0
    %2124 = vmatprep.subr.mxu0 0.0
    %2125 = vmatpush1.msra.mxu0 0.0
    %2126 = vmatprep.subr.mxu0 0.0
    %2127 = vmatpush1.msra.mxu0 0.0
    %2128 = vmatprep.subr.mxu0 0.0
    %2129 = vmatpush1.msra.mxu0 0.0
    %2130 = vmatprep.subr.mxu0 0.0
    %2131 = vmatpush1.msra.mxu0 0.0
    %2132 = vmatprep.subr.mxu0 0.0
    %2133 = vmatpush1.msra.mxu0 0.0
    %2134 = vmatprep.subr.mxu0 0.0
    %2135 = vmatpush1.msra.mxu0 0.0
    %2136 = vmatprep.subr.mxu0 0.0
    %2137 = vmatpush1.msra.mxu0 0.0
    %2138 = vmatprep.subr.mxu0 0.0
    %2139 = vmatpush1.msra.mxu0 0.0
    %2140 = vmatprep.mubr.f32.mxu0 0.0
    %v2141 = vand.u32 %v2034, 4294901760
    %v2142 = vsub.f32 %v2034, %v2141
    %v2143 = vand.u32 %v2142, 4294901760
    %v2144 = vsub.f32 %v2142, %v2143
    %v2145 = vand.u32 %v2144, 4294901760
    %2146 = vmatmul.mubr.f32.gmra.mrb[0].mxu0 %v2145
    %v2147 = vpop.f32.mrb[0].mxu0
    %v2148 = vadd.f32 %v2058, %v2147
    %v2149 = vpop.f32.mrb[0].mxu0
    %2150 = vdwg.mxu0
    %2151 = vmatprep.subr.mxu0 0.0
    %v2152 = vand.u32 %v2036, 4294901760
    %v2153 = vsub.f32 %v2036, %v2152
    %v2154 = vand.u32 %v2153, 4294901760
    %v2155 = vsub.f32 %v2153, %v2154
    %v2156 = vand.u32 %v2155, 4294901760
    %2157 = vmatpush1.msra.mxu0 %v2156
    %2158 = vmatprep.subr.mxu0 0.0
    %v2159 = vand.u32 %v2037, 4294901760
    %v2160 = vsub.f32 %v2037, %v2159
    %v2161 = vand.u32 %v2160, 4294901760
    %v2162 = vsub.f32 %v2160, %v2161
    %v2163 = vand.u32 %v2162, 4294901760
    %2164 = vmatpush1.msra.mxu0 %v2163
    %2165 = vmatprep.subr.mxu0 0.0
    %v2166 = vand.u32 %v2038, 4294901760
    %v2167 = vsub.f32 %v2038, %v2166
    %v2168 = vand.u32 %v2167, 4294901760
    %v2169 = vsub.f32 %v2167, %v2168
    %v2170 = vand.u32 %v2169, 4294901760
    %2171 = vmatpush1.msra.mxu0 %v2170
    %2172 = vmatprep.subr.mxu0 0.0
    %v2173 = vand.u32 %v2039, 4294901760
    %v2174 = vsub.f32 %v2039, %v2173
    %v2175 = vand.u32 %v2174, 4294901760
    %v2176 = vsub.f32 %v2174, %v2175
    %v2177 = vand.u32 %v2176, 4294901760
    %2178 = vmatpush1.msra.mxu0 %v2177
    %2179 = vmatprep.subr.mxu0 0.0
    %v2180 = vand.u32 %v2040, 4294901760
    %v2181 = vsub.f32 %v2040, %v2180
    %v2182 = vand.u32 %v2181, 4294901760
    %v2183 = vsub.f32 %v2181, %v2182
    %v2184 = vand.u32 %v2183, 4294901760
    %2185 = vmatpush1.msra.mxu0 %v2184
    %2186 = vmatprep.subr.mxu0 0.0
    %v2187 = vand.u32 %v2041, 4294901760
    %v2188 = vsub.f32 %v2041, %v2187
    %v2189 = vand.u32 %v2188, 4294901760
    %v2190 = vsub.f32 %v2188, %v2189
    %v2191 = vand.u32 %v2190, 4294901760
    %2192 = vmatpush1.msra.mxu0 %v2191
    %2193 = vmatprep.subr.mxu0 0.0
    %v2194 = vand.u32 %v2042, 4294901760
    %v2195 = vsub.f32 %v2042, %v2194
    %v2196 = vand.u32 %v2195, 4294901760
    %v2197 = vsub.f32 %v2195, %v2196
    %v2198 = vand.u32 %v2197, 4294901760
    %2199 = vmatpush1.msra.mxu0 %v2198
    %2200 = vmatprep.subr.mxu0 0.0
    %v2201 = vand.u32 %v2043, 4294901760
    %v2202 = vsub.f32 %v2043, %v2201
    %v2203 = vand.u32 %v2202, 4294901760
    %v2204 = vsub.f32 %v2202, %v2203
    %v2205 = vand.u32 %v2204, 4294901760
    %2206 = vmatpush1.msra.mxu0 %v2205
    %2207 = vmatprep.subr.mxu0 0.0
    %v2208 = vand.u32 %v2044, 4294901760
    %v2209 = vsub.f32 %v2044, %v2208
    %v2210 = vand.u32 %v2209, 4294901760
    %v2211 = vsub.f32 %v2209, %v2210
    %v2212 = vand.u32 %v2211, 4294901760
    %2213 = vmatpush1.msra.mxu0 %v2212
    %2214 = vmatprep.subr.mxu0 0.0
    %v2215 = vand.u32 %v2045, 4294901760
    %v2216 = vsub.f32 %v2045, %v2215
    %v2217 = vand.u32 %v2216, 4294901760
    %v2218 = vsub.f32 %v2216, %v2217
    %v2219 = vand.u32 %v2218, 4294901760
    %2220 = vmatpush1.msra.mxu0 %v2219
    %2221 = vmatprep.subr.mxu0 0.0
    %v2222 = vand.u32 %v2046, 4294901760
    %v2223 = vsub.f32 %v2046, %v2222
    %v2224 = vand.u32 %v2223, 4294901760
    %v2225 = vsub.f32 %v2223, %v2224
    %v2226 = vand.u32 %v2225, 4294901760
    %2227 = vmatpush1.msra.mxu0 %v2226
    %2228 = vmatprep.subr.mxu0 0.0
    %v2229 = vand.u32 %v2047, 4294901760
    %v2230 = vsub.f32 %v2047, %v2229
    %v2231 = vand.u32 %v2230, 4294901760
    %v2232 = vsub.f32 %v2230, %v2231
    %v2233 = vand.u32 %v2232, 4294901760
    %2234 = vmatpush1.msra.mxu0 %v2233
    %2235 = vmatprep.subr.mxu0 0.0
    %v2236 = vand.u32 %v2048, 4294901760
    %v2237 = vsub.f32 %v2048, %v2236
    %v2238 = vand.u32 %v2237, 4294901760
    %v2239 = vsub.f32 %v2237, %v2238
    %v2240 = vand.u32 %v2239, 4294901760
    %2241 = vmatpush1.msra.mxu0 %v2240
    %2242 = vmatprep.subr.mxu0 0.0
    %v2243 = vand.u32 %v2049, 4294901760
    %v2244 = vsub.f32 %v2049, %v2243
    %v2245 = vand.u32 %v2244, 4294901760
    %v2246 = vsub.f32 %v2244, %v2245
    %v2247 = vand.u32 %v2246, 4294901760
    %2248 = vmatpush1.msra.mxu0 %v2247
    %2249 = vmatprep.subr.mxu0 0.0
    %v2250 = vand.u32 %v2050, 4294901760
    %v2251 = vsub.f32 %v2050, %v2250
    %v2252 = vand.u32 %v2251, 4294901760
    %v2253 = vsub.f32 %v2251, %v2252
    %v2254 = vand.u32 %v2253, 4294901760
    %2255 = vmatpush1.msra.mxu0 %v2254
    %2256 = vmatprep.subr.mxu0 0.0
    %v2257 = vand.u32 %v2051, 4294901760
    %v2258 = vsub.f32 %v2051, %v2257
    %v2259 = vand.u32 %v2258, 4294901760
    %v2260 = vsub.f32 %v2258, %v2259
    %v2261 = vand.u32 %v2260, 4294901760
    %2262 = vmatpush1.msra.mxu0 %v2261
    %2263 = vmatprep.subr.mxu0 0.0
    %2264 = vmatpush1.msra.mxu0 0.0
    %2265 = vmatprep.subr.mxu0 0.0
    %2266 = vmatpush1.msra.mxu0 0.0
    %2267 = vmatprep.subr.mxu0 0.0
    %2268 = vmatpush1.msra.mxu0 0.0
    %2269 = vmatprep.subr.mxu0 0.0
    %2270 = vmatpush1.msra.mxu0 0.0
    %2271 = vmatprep.subr.mxu0 0.0
    %2272 = vmatpush1.msra.mxu0 0.0
    %2273 = vmatprep.subr.mxu0 0.0
    %2274 = vmatpush1.msra.mxu0 0.0
    %2275 = vmatprep.subr.mxu0 0.0
    %2276 = vmatpush1.msra.mxu0 0.0
    %2277 = vmatprep.subr.mxu0 0.0
    %2278 = vmatpush1.msra.mxu0 0.0
    %2279 = vmatprep.subr.mxu0 0.0
    %2280 = vmatpush1.msra.mxu0 0.0
    %2281 = vmatprep.subr.mxu0 0.0
    %2282 = vmatpush1.msra.mxu0 0.0
    %2283 = vmatprep.subr.mxu0 0.0
    %2284 = vmatpush1.msra.mxu0 0.0
    %2285 = vmatprep.subr.mxu0 0.0
    %2286 = vmatpush1.msra.mxu0 0.0
    %2287 = vmatprep.subr.mxu0 0.0
    %2288 = vmatpush1.msra.mxu0 0.0
    %2289 = vmatprep.subr.mxu0 0.0
    %2290 = vmatpush1.msra.mxu0 0.0
    %2291 = vmatprep.subr.mxu0 0.0
    %2292 = vmatpush1.msra.mxu0 0.0
    %2293 = vmatprep.subr.mxu0 0.0
    %2294 = vmatpush1.msra.mxu0 0.0
    %2295 = vmatprep.mubr.f32.mxu0 0.0
    %v2296 = vand.u32 %v2034, 4294901760
    %2297 = vmatmul.mubr.f32.gmra.mrb[0].mxu0 %v2296
    %v2298 = vpop.f32.mrb[0].mxu0
    %v2299 = vadd.f32 %v2148, %v2298
    %v2300 = vpop.f32.mrb[0].mxu0
    %2301 = vdwg.mxu0
    %2302 = vmatprep.subr.mxu0 0.0
    %v2303 = vand.u32 %v2036, 4294901760
    %v2304 = vsub.f32 %v2036, %v2303
    %2305 = vmatpush1.msra.mxu0 %v2304
    %2306 = vmatprep.subr.mxu0 0.0
    %v2307 = vand.u32 %v2037, 4294901760
    %v2308 = vsub.f32 %v2037, %v2307
    %2309 = vmatpush1.msra.mxu0 %v2308
    %2310 = vmatprep.subr.mxu0 0.0
    %v2311 = vand.u32 %v2038, 4294901760
    %v2312 = vsub.f32 %v2038, %v2311
    %2313 = vmatpush1.msra.mxu0 %v2312
    %2314 = vmatprep.subr.mxu0 0.0
    %v2315 = vand.u32 %v2039, 4294901760
    %v2316 = vsub.f32 %v2039, %v2315
    %2317 = vmatpush1.msra.mxu0 %v2316
    %2318 = vmatprep.subr.mxu0 0.0
    %v2319 = vand.u32 %v2040, 4294901760
    %v2320 = vsub.f32 %v2040, %v2319
    %2321 = vmatpush1.msra.mxu0 %v2320
    %2322 = vmatprep.subr.mxu0 0.0
    %v2323 = vand.u32 %v2041, 4294901760
    %v2324 = vsub.f32 %v2041, %v2323
    %2325 = vmatpush1.msra.mxu0 %v2324
    %2326 = vmatprep.subr.mxu0 0.0
    %v2327 = vand.u32 %v2042, 4294901760
    %v2328 = vsub.f32 %v2042, %v2327
    %2329 = vmatpush1.msra.mxu0 %v2328
    %2330 = vmatprep.subr.mxu0 0.0
    %v2331 = vand.u32 %v2043, 4294901760
    %v2332 = vsub.f32 %v2043, %v2331
    %2333 = vmatpush1.msra.mxu0 %v2332
    %2334 = vmatprep.subr.mxu0 0.0
    %v2335 = vand.u32 %v2044, 4294901760
    %v2336 = vsub.f32 %v2044, %v2335
    %2337 = vmatpush1.msra.mxu0 %v2336
    %2338 = vmatprep.subr.mxu0 0.0
    %v2339 = vand.u32 %v2045, 4294901760
    %v2340 = vsub.f32 %v2045, %v2339
    %2341 = vmatpush1.msra.mxu0 %v2340
    %2342 = vmatprep.subr.mxu0 0.0
    %v2343 = vand.u32 %v2046, 4294901760
    %v2344 = vsub.f32 %v2046, %v2343
    %2345 = vmatpush1.msra.mxu0 %v2344
    %2346 = vmatprep.subr.mxu0 0.0
    %v2347 = vand.u32 %v2047, 4294901760
    %v2348 = vsub.f32 %v2047, %v2347
    %2349 = vmatpush1.msra.mxu0 %v2348
    %2350 = vmatprep.subr.mxu0 0.0
    %v2351 = vand.u32 %v2048, 4294901760
    %v2352 = vsub.f32 %v2048, %v2351
    %2353 = vmatpush1.msra.mxu0 %v2352
    %2354 = vmatprep.subr.mxu0 0.0
    %v2355 = vand.u32 %v2049, 4294901760
    %v2356 = vsub.f32 %v2049, %v2355
    %2357 = vmatpush1.msra.mxu0 %v2356
    %2358 = vmatprep.subr.mxu0 0.0
    %v2359 = vand.u32 %v2050, 4294901760
    %v2360 = vsub.f32 %v2050, %v2359
    %2361 = vmatpush1.msra.mxu0 %v2360
    %2362 = vmatprep.subr.mxu0 0.0
    %v2363 = vand.u32 %v2051, 4294901760
    %v2364 = vsub.f32 %v2051, %v2363
    %2365 = vmatpush1.msra.mxu0 %v2364
    %2366 = vmatprep.subr.mxu0 0.0
    %2367 = vmatpush1.msra.mxu0 0.0
    %2368 = vmatprep.subr.mxu0 0.0
    %2369 = vmatpush1.msra.mxu0 0.0
    %2370 = vmatprep.subr.mxu0 0.0
    %2371 = vmatpush1.msra.mxu0 0.0
    %2372 = vmatprep.subr.mxu0 0.0
    %2373 = vmatpush1.msra.mxu0 0.0
    %2374 = vmatprep.subr.mxu0 0.0
    %2375 = vmatpush1.msra.mxu0 0.0
    %2376 = vmatprep.subr.mxu0 0.0
    %2377 = vmatpush1.msra.mxu0 0.0
    %2378 = vmatprep.subr.mxu0 0.0
    %2379 = vmatpush1.msra.mxu0 0.0
    %2380 = vmatprep.subr.mxu0 0.0
    %2381 = vmatpush1.msra.mxu0 0.0
    %2382 = vmatprep.subr.mxu0 0.0
    %2383 = vmatpush1.msra.mxu0 0.0
    %2384 = vmatprep.subr.mxu0 0.0
    %2385 = vmatpush1.msra.mxu0 0.0
    %2386 = vmatprep.subr.mxu0 0.0
    %2387 = vmatpush1.msra.mxu0 0.0
    %2388 = vmatprep.subr.mxu0 0.0
    %2389 = vmatpush1.msra.mxu0 0.0
    %2390 = vmatprep.subr.mxu0 0.0
    %2391 = vmatpush1.msra.mxu0 0.0
    %2392 = vmatprep.subr.mxu0 0.0
    %2393 = vmatpush1.msra.mxu0 0.0
    %2394 = vmatprep.subr.mxu0 0.0
    %2395 = vmatpush1.msra.mxu0 0.0
    %2396 = vmatprep.subr.mxu0 0.0
    %2397 = vmatpush1.msra.mxu0 0.0
    %2398 = vmatprep.mubr.f32.mxu0 0.0
    %v2399 = vand.u32 %v2034, 4294901760
    %v2400 = vsub.f32 %v2034, %v2399
    %2401 = vmatmul.mubr.f32.gmra.mrb[0].mxu0 %v2400
    %v2402 = vpop.f32.mrb[0].mxu0
    %v2403 = vadd.f32 %v2299, %v2402
    %v2404 = vpop.f32.mrb[0].mxu0
    %2405 = vdwg.mxu0
    %2406 = vmatprep.subr.mxu0 0.0
    %v2407 = vand.u32 %v2036, 4294901760
    %2408 = vmatpush1.msra.mxu0 %v2407
    %2409 = vmatprep.subr.mxu0 0.0
    %v2410 = vand.u32 %v2037, 4294901760
    %2411 = vmatpush1.msra.mxu0 %v2410
    %2412 = vmatprep.subr.mxu0 0.0
    %v2413 = vand.u32 %v2038, 4294901760
    %2414 = vmatpush1.msra.mxu0 %v2413
    %2415 = vmatprep.subr.mxu0 0.0
    %v2416 = vand.u32 %v2039, 4294901760
    %2417 = vmatpush1.msra.mxu0 %v2416
    %2418 = vmatprep.subr.mxu0 0.0
    %v2419 = vand.u32 %v2040, 4294901760
    %2420 = vmatpush1.msra.mxu0 %v2419
    %2421 = vmatprep.subr.mxu0 0.0
    %v2422 = vand.u32 %v2041, 4294901760
    %2423 = vmatpush1.msra.mxu0 %v2422
    %2424 = vmatprep.subr.mxu0 0.0
    %v2425 = vand.u32 %v2042, 4294901760
    %2426 = vmatpush1.msra.mxu0 %v2425
    %2427 = vmatprep.subr.mxu0 0.0
    %v2428 = vand.u32 %v2043, 4294901760
    %2429 = vmatpush1.msra.mxu0 %v2428
    %2430 = vmatprep.subr.mxu0 0.0
    %v2431 = vand.u32 %v2044, 4294901760
    %2432 = vmatpush1.msra.mxu0 %v2431
    %2433 = vmatprep.subr.mxu0 0.0
    %v2434 = vand.u32 %v2045, 4294901760
    %2435 = vmatpush1.msra.mxu0 %v2434
    %2436 = vmatprep.subr.mxu0 0.0
    %v2437 = vand.u32 %v2046, 4294901760
    %2438 = vmatpush1.msra.mxu0 %v2437
    %2439 = vmatprep.subr.mxu0 0.0
    %v2440 = vand.u32 %v2047, 4294901760
    %2441 = vmatpush1.msra.mxu0 %v2440
    %2442 = vmatprep.subr.mxu0 0.0
    %v2443 = vand.u32 %v2048, 4294901760
    %2444 = vmatpush1.msra.mxu0 %v2443
    %2445 = vmatprep.subr.mxu0 0.0
    %v2446 = vand.u32 %v2049, 4294901760
    %2447 = vmatpush1.msra.mxu0 %v2446
    %2448 = vmatprep.subr.mxu0 0.0
    %v2449 = vand.u32 %v2050, 4294901760
    %2450 = vmatpush1.msra.mxu0 %v2449
    %2451 = vmatprep.subr.mxu0 0.0
    %v2452 = vand.u32 %v2051, 4294901760
    %2453 = vmatpush1.msra.mxu0 %v2452
    %2454 = vmatprep.subr.mxu0 0.0
    %2455 = vmatpush1.msra.mxu0 0.0
    %2456 = vmatprep.subr.mxu0 0.0
    %2457 = vmatpush1.msra.mxu0 0.0
    %2458 = vmatprep.subr.mxu0 0.0
    %2459 = vmatpush1.msra.mxu0 0.0
    %2460 = vmatprep.subr.mxu0 0.0
    %2461 = vmatpush1.msra.mxu0 0.0
    %2462 = vmatprep.subr.mxu0 0.0
    %2463 = vmatpush1.msra.mxu0 0.0
    %2464 = vmatprep.subr.mxu0 0.0
    %2465 = vmatpush1.msra.mxu0 0.0
    %2466 = vmatprep.subr.mxu0 0.0
    %2467 = vmatpush1.msra.mxu0 0.0
    %2468 = vmatprep.subr.mxu0 0.0
    %2469 = vmatpush1.msra.mxu0 0.0
    %2470 = vmatprep.subr.mxu0 0.0
    %2471 = vmatpush1.msra.mxu0 0.0
    %2472 = vmatprep.subr.mxu0 0.0
    %2473 = vmatpush1.msra.mxu0 0.0
    %2474 = vmatprep.subr.mxu0 0.0
    %2475 = vmatpush1.msra.mxu0 0.0
    %2476 = vmatprep.subr.mxu0 0.0
    %2477 = vmatpush1.msra.mxu0 0.0
    %2478 = vmatprep.subr.mxu0 0.0
    %2479 = vmatpush1.msra.mxu0 0.0
    %2480 = vmatprep.subr.mxu0 0.0
    %2481 = vmatpush1.msra.mxu0 0.0
    %2482 = vmatprep.subr.mxu0 0.0
    %2483 = vmatpush1.msra.mxu0 0.0
    %2484 = vmatprep.subr.mxu0 0.0
    %2485 = vmatpush1.msra.mxu0 0.0
    %2486 = vmatprep.mubr.f32.mxu0 0.0
    %v2487 = vand.u32 %v2034, 4294901760
    %v2488 = vsub.f32 %v2034, %v2487
    %v2489 = vand.u32 %v2488, 4294901760
    %2490 = vmatmul.mubr.f32.gmra.mrb[0].mxu0 %v2489
    %v2491 = vpop.f32.mrb[0].mxu0
    %v2492 = vadd.f32 %v2403, %v2491
    %v2493 = vpop.f32.mrb[0].mxu0
    %2494 = vdwg.mxu0
    %2495 = vmatprep.subr.mxu0 0.0
    %v2496 = vand.u32 %v2036, 4294901760
    %v2497 = vsub.f32 %v2036, %v2496
    %v2498 = vand.u32 %v2497, 4294901760
    %2499 = vmatpush1.msra.mxu0 %v2498
    %2500 = vmatprep.subr.mxu0 0.0
    %v2501 = vand.u32 %v2037, 4294901760
    %v2502 = vsub.f32 %v2037, %v2501
    %v2503 = vand.u32 %v2502, 4294901760
    %2504 = vmatpush1.msra.mxu0 %v2503
    %2505 = vmatprep.subr.mxu0 0.0
    %v2506 = vand.u32 %v2038, 4294901760
    %v2507 = vsub.f32 %v2038, %v2506
    %v2508 = vand.u32 %v2507, 4294901760
    %2509 = vmatpush1.msra.mxu0 %v2508
    %2510 = vmatprep.subr.mxu0 0.0
    %v2511 = vand.u32 %v2039, 4294901760
    %v2512 = vsub.f32 %v2039, %v2511
    %v2513 = vand.u32 %v2512, 4294901760
    %2514 = vmatpush1.msra.mxu0 %v2513
    %2515 = vmatprep.subr.mxu0 0.0
    %v2516 = vand.u32 %v2040, 4294901760
    %v2517 = vsub.f32 %v2040, %v2516
    %v2518 = vand.u32 %v2517, 4294901760
    %2519 = vmatpush1.msra.mxu0 %v2518
    %2520 = vmatprep.subr.mxu0 0.0
    %v2521 = vand.u32 %v2041, 4294901760
    %v2522 = vsub.f32 %v2041, %v2521
    %v2523 = vand.u32 %v2522, 4294901760
    %2524 = vmatpush1.msra.mxu0 %v2523
    %2525 = vmatprep.subr.mxu0 0.0
    %v2526 = vand.u32 %v2042, 4294901760
    %v2527 = vsub.f32 %v2042, %v2526
    %v2528 = vand.u32 %v2527, 4294901760
    %2529 = vmatpush1.msra.mxu0 %v2528
    %2530 = vmatprep.subr.mxu0 0.0
    %v2531 = vand.u32 %v2043, 4294901760
    %v2532 = vsub.f32 %v2043, %v2531
    %v2533 = vand.u32 %v2532, 4294901760
    %2534 = vmatpush1.msra.mxu0 %v2533
    %2535 = vmatprep.subr.mxu0 0.0
    %v2536 = vand.u32 %v2044, 4294901760
    %v2537 = vsub.f32 %v2044, %v2536
    %v2538 = vand.u32 %v2537, 4294901760
    %2539 = vmatpush1.msra.mxu0 %v2538
    %2540 = vmatprep.subr.mxu0 0.0
    %v2541 = vand.u32 %v2045, 4294901760
    %v2542 = vsub.f32 %v2045, %v2541
    %v2543 = vand.u32 %v2542, 4294901760
    %2544 = vmatpush1.msra.mxu0 %v2543
    %2545 = vmatprep.subr.mxu0 0.0
    %v2546 = vand.u32 %v2046, 4294901760
    %v2547 = vsub.f32 %v2046, %v2546
    %v2548 = vand.u32 %v2547, 4294901760
    %2549 = vmatpush1.msra.mxu0 %v2548
    %2550 = vmatprep.subr.mxu0 0.0
    %v2551 = vand.u32 %v2047, 4294901760
    %v2552 = vsub.f32 %v2047, %v2551
    %v2553 = vand.u32 %v2552, 4294901760
    %2554 = vmatpush1.msra.mxu0 %v2553
    %2555 = vmatprep.subr.mxu0 0.0
    %v2556 = vand.u32 %v2048, 4294901760
    %v2557 = vsub.f32 %v2048, %v2556
    %v2558 = vand.u32 %v2557, 4294901760
    %2559 = vmatpush1.msra.mxu0 %v2558
    %2560 = vmatprep.subr.mxu0 0.0
    %v2561 = vand.u32 %v2049, 4294901760
    %v2562 = vsub.f32 %v2049, %v2561
    %v2563 = vand.u32 %v2562, 4294901760
    %2564 = vmatpush1.msra.mxu0 %v2563
    %2565 = vmatprep.subr.mxu0 0.0
    %v2566 = vand.u32 %v2050, 4294901760
    %v2567 = vsub.f32 %v2050, %v2566
    %v2568 = vand.u32 %v2567, 4294901760
    %2569 = vmatpush1.msra.mxu0 %v2568
    %2570 = vmatprep.subr.mxu0 0.0
    %v2571 = vand.u32 %v2051, 4294901760
    %v2572 = vsub.f32 %v2051, %v2571
    %v2573 = vand.u32 %v2572, 4294901760
    %2574 = vmatpush1.msra.mxu0 %v2573
    %2575 = vmatprep.subr.mxu0 0.0
    %2576 = vmatpush1.msra.mxu0 0.0
    %2577 = vmatprep.subr.mxu0 0.0
    %2578 = vmatpush1.msra.mxu0 0.0
    %2579 = vmatprep.subr.mxu0 0.0
    %2580 = vmatpush1.msra.mxu0 0.0
    %2581 = vmatprep.subr.mxu0 0.0
    %2582 = vmatpush1.msra.mxu0 0.0
    %2583 = vmatprep.subr.mxu0 0.0
    %2584 = vmatpush1.msra.mxu0 0.0
    %2585 = vmatprep.subr.mxu0 0.0
    %2586 = vmatpush1.msra.mxu0 0.0
    %2587 = vmatprep.subr.mxu0 0.0
    %2588 = vmatpush1.msra.mxu0 0.0
    %2589 = vmatprep.subr.mxu0 0.0
    %2590 = vmatpush1.msra.mxu0 0.0
    %2591 = vmatprep.subr.mxu0 0.0
    %2592 = vmatpush1.msra.mxu0 0.0
    %2593 = vmatprep.subr.mxu0 0.0
    %2594 = vmatpush1.msra.mxu0 0.0
    %2595 = vmatprep.subr.mxu0 0.0
    %2596 = vmatpush1.msra.mxu0 0.0
    %2597 = vmatprep.subr.mxu0 0.0
    %2598 = vmatpush1.msra.mxu0 0.0
    %2599 = vmatprep.subr.mxu0 0.0
    %2600 = vmatpush1.msra.mxu0 0.0
    %2601 = vmatprep.subr.mxu0 0.0
    %2602 = vmatpush1.msra.mxu0 0.0
    %2603 = vmatprep.subr.mxu0 0.0
    %2604 = vmatpush1.msra.mxu0 0.0
    %2605 = vmatprep.subr.mxu0 0.0
    %2606 = vmatpush1.msra.mxu0 0.0
    %2607 = vmatprep.mubr.f32.mxu0 0.0
    %v2608 = vand.u32 %v2034, 4294901760
    %2609 = vmatmul.mubr.f32.gmra.mrb[0].mxu0 %v2608
    %v2610 = vpop.f32.mrb[0].mxu0
    %v2611 = vadd.f32 %v2492, %v2610
    %v2612 = vpop.f32.mrb[0].mxu0
    %2613 = vdwg.mxu0
    %2614 = vmatprep.subr.mxu0 0.0
    %v2615 = vand.u32 %v2036, 4294901760
    %2616 = vmatpush1.msra.mxu0 %v2615
    %2617 = vmatprep.subr.mxu0 0.0
    %v2618 = vand.u32 %v2037, 4294901760
    %2619 = vmatpush1.msra.mxu0 %v2618
    %2620 = vmatprep.subr.mxu0 0.0
    %v2621 = vand.u32 %v2038, 4294901760
    %2622 = vmatpush1.msra.mxu0 %v2621
    %2623 = vmatprep.subr.mxu0 0.0
    %v2624 = vand.u32 %v2039, 4294901760
    %2625 = vmatpush1.msra.mxu0 %v2624
    %2626 = vmatprep.subr.mxu0 0.0
    %v2627 = vand.u32 %v2040, 4294901760
    %2628 = vmatpush1.msra.mxu0 %v2627
    %2629 = vmatprep.subr.mxu0 0.0
    %v2630 = vand.u32 %v2041, 4294901760
    %2631 = vmatpush1.msra.mxu0 %v2630
    %2632 = vmatprep.subr.mxu0 0.0
    %v2633 = vand.u32 %v2042, 4294901760
    %2634 = vmatpush1.msra.mxu0 %v2633
    %2635 = vmatprep.subr.mxu0 0.0
    %v2636 = vand.u32 %v2043, 4294901760
    %2637 = vmatpush1.msra.mxu0 %v2636
    %2638 = vmatprep.subr.mxu0 0.0
    %v2639 = vand.u32 %v2044, 4294901760
    %2640 = vmatpush1.msra.mxu0 %v2639
    %2641 = vmatprep.subr.mxu0 0.0
    %v2642 = vand.u32 %v2045, 4294901760
    %2643 = vmatpush1.msra.mxu0 %v2642
    %2644 = vmatprep.subr.mxu0 0.0
    %v2645 = vand.u32 %v2046, 4294901760
    %2646 = vmatpush1.msra.mxu0 %v2645
    %2647 = vmatprep.subr.mxu0 0.0
    %v2648 = vand.u32 %v2047, 4294901760
    %2649 = vmatpush1.msra.mxu0 %v2648
    %2650 = vmatprep.subr.mxu0 0.0
    %v2651 = vand.u32 %v2048, 4294901760
    %2652 = vmatpush1.msra.mxu0 %v2651
    %2653 = vmatprep.subr.mxu0 0.0
    %v2654 = vand.u32 %v2049, 4294901760
    %2655 = vmatpush1.msra.mxu0 %v2654
    %2656 = vmatprep.subr.mxu0 0.0
    %v2657 = vand.u32 %v2050, 4294901760
    %2658 = vmatpush1.msra.mxu0 %v2657
    %2659 = vmatprep.subr.mxu0 0.0
    %v2660 = vand.u32 %v2051, 4294901760
    %2661 = vmatpush1.msra.mxu0 %v2660
    %2662 = vmatprep.subr.mxu0 0.0
    %2663 = vmatpush1.msra.mxu0 0.0
    %2664 = vmatprep.subr.mxu0 0.0
    %2665 = vmatpush1.msra.mxu0 0.0
    %2666 = vmatprep.subr.mxu0 0.0
    %2667 = vmatpush1.msra.mxu0 0.0
    %2668 = vmatprep.subr.mxu0 0.0
    %2669 = vmatpush1.msra.mxu0 0.0
    %2670 = vmatprep.subr.mxu0 0.0
    %2671 = vmatpush1.msra.mxu0 0.0
    %2672 = vmatprep.subr.mxu0 0.0
    %2673 = vmatpush1.msra.mxu0 0.0
    %2674 = vmatprep.subr.mxu0 0.0
    %2675 = vmatpush1.msra.mxu0 0.0
    %2676 = vmatprep.subr.mxu0 0.0
    %2677 = vmatpush1.msra.mxu0 0.0
    %2678 = vmatprep.subr.mxu0 0.0
    %2679 = vmatpush1.msra.mxu0 0.0
    %2680 = vmatprep.subr.mxu0 0.0
    %2681 = vmatpush1.msra.mxu0 0.0
    %2682 = vmatprep.subr.mxu0 0.0
    %2683 = vmatpush1.msra.mxu0 0.0
    %2684 = vmatprep.subr.mxu0 0.0
    %2685 = vmatpush1.msra.mxu0 0.0
    %2686 = vmatprep.subr.mxu0 0.0
    %2687 = vmatpush1.msra.mxu0 0.0
    %2688 = vmatprep.subr.mxu0 0.0
    %2689 = vmatpush1.msra.mxu0 0.0
    %2690 = vmatprep.subr.mxu0 0.0
    %2691 = vmatpush1.msra.mxu0 0.0
    %2692 = vmatprep.subr.mxu0 0.0
    %2693 = vmatpush1.msra.mxu0 0.0
    %2694 = vmatprep.mubr.f32.mxu0 0.0
    %v2695 = vand.u32 %v2034, 4294901760
    %2696 = vmatmul.mubr.f32.gmra.mrb[0].mxu0 %v2695
    %v2697 = vpop.f32.mrb[0].mxu0
    %v2698 = vadd.f32 %v2611, %v2697
    %v2699 = vpop.f32.mrb[0].mxu0
    %2700 = vdwg.mxu0
    %v2701 = vtanh.pop %v2698
    %v2702 = vadd.f32 %v2034, %v2701
    %s2703 = scalar_lea.vmem [#allocation2], 512
    %v2704 = vld [vmem:[%s2703] sm:$0xff]
    %v2705 = vld [vmem:[%s2703 + $0x8] sm:$0xff]
    %v2706 = vld [vmem:[%s2703 + $0x10] sm:$0xff]
    %v2707 = vld [vmem:[%s2703 + $0x18] sm:$0xff]
    %v2708 = vld [vmem:[%s2703 + $0x20] sm:$0xff]
    %v2709 = vld [vmem:[%s2703 + $0x28] sm:$0xff]
    %v2710 = vld [vmem:[%s2703 + $0x30] sm:$0xff]
    %v2711 = vld [vmem:[%s2703 + $0x38] sm:$0xff]
    %v2712 = vld [vmem:[%s2703 + $0x40] sm:$0xff]
    %v2713 = vld [vmem:[%s2703 + $0x48] sm:$0xff]
    %v2714 = vld [vmem:[%s2703 + $0x50] sm:$0xff]
    %v2715 = vld [vmem:[%s2703 + $0x58] sm:$0xff]
    %v2716 = vld [vmem:[%s2703 + $0x60] sm:$0xff]
    %v2717 = vld [vmem:[%s2703 + $0x68] sm:$0xff]
    %v2718 = vld [vmem:[%s2703 + $0x70] sm:$0xff]
    %v2719 = vld [vmem:[%s2703 + $0x78] sm:$0xff]
    %s2720 = scalar_lea.vmem %s2, 4
    %v2721 = vld [vmem:[%s2720] sm:$0x1]
    %v2723 = vlaneseq
    %v2724 = vshrl.u32 %v2723, 7
    %v2725 = vsub.s32 0, %v2724
    %v2726 = vrot.slane %v2721, %v2725
    %2728 = vmatprep.subr.mxu0 0.0
    %v2729 = vand.u32 %v2704, 4294901760
    %2730 = vmatpush1.msra.mxu0 %v2729
    %2731 = vmatprep.subr.mxu0 0.0
    %v2732 = vand.u32 %v2705, 4294901760
    %2733 = vmatpush1.msra.mxu0 %v2732
    %2734 = vmatprep.subr.mxu0 0.0
    %v2735 = vand.u32 %v2706, 4294901760
    %2736 = vmatpush1.msra.mxu0 %v2735
    %2737 = vmatprep.subr.mxu0 0.0
    %v2738 = vand.u32 %v2707, 4294901760
    %2739 = vmatpush1.msra.mxu0 %v2738
    %2740 = vmatprep.subr.mxu0 0.0
    %v2741 = vand.u32 %v2708, 4294901760
    %2742 = vmatpush1.msra.mxu0 %v2741
    %2743 = vmatprep.subr.mxu0 0.0
    %v2744 = vand.u32 %v2709, 4294901760
    %2745 = vmatpush1.msra.mxu0 %v2744
    %2746 = vmatprep.subr.mxu0 0.0
    %v2747 = vand.u32 %v2710, 4294901760
    %2748 = vmatpush1.msra.mxu0 %v2747
    %2749 = vmatprep.subr.mxu0 0.0
    %v2750 = vand.u32 %v2711, 4294901760
    %2751 = vmatpush1.msra.mxu0 %v2750
    %2752 = vmatprep.subr.mxu0 0.0
    %v2753 = vand.u32 %v2712, 4294901760
    %2754 = vmatpush1.msra.mxu0 %v2753
    %2755 = vmatprep.subr.mxu0 0.0
    %v2756 = vand.u32 %v2713, 4294901760
    %2757 = vmatpush1.msra.mxu0 %v2756
    %2758 = vmatprep.subr.mxu0 0.0
    %v2759 = vand.u32 %v2714, 4294901760
    %2760 = vmatpush1.msra.mxu0 %v2759
    %2761 = vmatprep.subr.mxu0 0.0
    %v2762 = vand.u32 %v2715, 4294901760
    %2763 = vmatpush1.msra.mxu0 %v2762
    %2764 = vmatprep.subr.mxu0 0.0
    %v2765 = vand.u32 %v2716, 4294901760
    %2766 = vmatpush1.msra.mxu0 %v2765
    %2767 = vmatprep.subr.mxu0 0.0
    %v2768 = vand.u32 %v2717, 4294901760
    %2769 = vmatpush1.msra.mxu0 %v2768
    %2770 = vmatprep.subr.mxu0 0.0
    %v2771 = vand.u32 %v2718, 4294901760
    %2772 = vmatpush1.msra.mxu0 %v2771
    %2773 = vmatprep.subr.mxu0 0.0
    %v2774 = vand.u32 %v2719, 4294901760
    %2775 = vmatpush1.msra.mxu0 %v2774
    %2776 = vmatprep.subr.mxu0 0.0
    %2777 = vmatpush1.msra.mxu0 0.0
    %2778 = vmatprep.subr.mxu0 0.0
    %2779 = vmatpush1.msra.mxu0 0.0
    %2780 = vmatprep.subr.mxu0 0.0
    %2781 = vmatpush1.msra.mxu0 0.0
    %2782 = vmatprep.subr.mxu0 0.0
    %2783 = vmatpush1.msra.mxu0 0.0
    %2784 = vmatprep.subr.mxu0 0.0
    %2785 = vmatpush1.msra.mxu0 0.0
    %2786 = vmatprep.subr.mxu0 0.0
    %2787 = vmatpush1.msra.mxu0 0.0
    %2788 = vmatprep.subr.mxu0 0.0
    %2789 = vmatpush1.msra.mxu0 0.0
    %2790 = vmatprep.subr.mxu0 0.0
    %2791 = vmatpush1.msra.mxu0 0.0
    %2792 = vmatprep.subr.mxu0 0.0
    %2793 = vmatpush1.msra.mxu0 0.0
    %2794 = vmatprep.subr.mxu0 0.0
    %2795 = vmatpush1.msra.mxu0 0.0
    %2796 = vmatprep.subr.mxu0 0.0
    %2797 = vmatpush1.msra.mxu0 0.0
    %2798 = vmatprep.subr.mxu0 0.0
    %2799 = vmatpush1.msra.mxu0 0.0
    %2800 = vmatprep.subr.mxu0 0.0
    %2801 = vmatpush1.msra.mxu0 0.0
    %2802 = vmatprep.subr.mxu0 0.0
    %2803 = vmatpush1.msra.mxu0 0.0
    %2804 = vmatprep.subr.mxu0 0.0
    %2805 = vmatpush1.msra.mxu0 0.0
    %2806 = vmatprep.subr.mxu0 0.0
    %2807 = vmatpush1.msra.mxu0 0.0
    %2808 = vmatprep.mubr.f32.mxu0 0.0
    %v2809 = vand.u32 %v2702, 4294901760
    %v2810 = vsub.f32 %v2702, %v2809
    %v2811 = vand.u32 %v2810, 4294901760
    %v2812 = vsub.f32 %v2810, %v2811
    %v2813 = vand.u32 %v2812, 4294901760
    %2814 = vmatmul.mubr.f32.gmra.mrb[0].mxu0 %v2813
    %v2815 = vpop.f32.mrb[0].mxu0
    %v2816 = vadd.f32 %v2726, %v2815
    %v2817 = vpop.f32.mrb[0].mxu0
    %2818 = vdwg.mxu0
    %2819 = vmatprep.subr.mxu0 0.0
    %v2820 = vand.u32 %v2704, 4294901760
    %v2821 = vsub.f32 %v2704, %v2820
    %v2822 = vand.u32 %v2821, 4294901760
    %v2823 = vsub.f32 %v2821, %v2822
    %v2824 = vand.u32 %v2823, 4294901760
    %2825 = vmatpush1.msra.mxu0 %v2824
    %2826 = vmatprep.subr.mxu0 0.0
    %v2827 = vand.u32 %v2705, 4294901760
    %v2828 = vsub.f32 %v2705, %v2827
    %v2829 = vand.u32 %v2828, 4294901760
    %v2830 = vsub.f32 %v2828, %v2829
    %v2831 = vand.u32 %v2830, 4294901760
    %2832 = vmatpush1.msra.mxu0 %v2831
    %2833 = vmatprep.subr.mxu0 0.0
    %v2834 = vand.u32 %v2706, 4294901760
    %v2835 = vsub.f32 %v2706, %v2834
    %v2836 = vand.u32 %v2835, 4294901760
    %v2837 = vsub.f32 %v2835, %v2836
    %v2838 = vand.u32 %v2837, 4294901760
    %2839 = vmatpush1.msra.mxu0 %v2838
    %2840 = vmatprep.subr.mxu0 0.0
    %v2841 = vand.u32 %v2707, 4294901760
    %v2842 = vsub.f32 %v2707, %v2841
    %v2843 = vand.u32 %v2842, 4294901760
    %v2844 = vsub.f32 %v2842, %v2843
    %v2845 = vand.u32 %v2844, 4294901760
    %2846 = vmatpush1.msra.mxu0 %v2845
    %2847 = vmatprep.subr.mxu0 0.0
    %v2848 = vand.u32 %v2708, 4294901760
    %v2849 = vsub.f32 %v2708, %v2848
    %v2850 = vand.u32 %v2849, 4294901760
    %v2851 = vsub.f32 %v2849, %v2850
    %v2852 = vand.u32 %v2851, 4294901760
    %2853 = vmatpush1.msra.mxu0 %v2852
    %2854 = vmatprep.subr.mxu0 0.0
    %v2855 = vand.u32 %v2709, 4294901760
    %v2856 = vsub.f32 %v2709, %v2855
    %v2857 = vand.u32 %v2856, 4294901760
    %v2858 = vsub.f32 %v2856, %v2857
    %v2859 = vand.u32 %v2858, 4294901760
    %2860 = vmatpush1.msra.mxu0 %v2859
    %2861 = vmatprep.subr.mxu0 0.0
    %v2862 = vand.u32 %v2710, 4294901760
    %v2863 = vsub.f32 %v2710, %v2862
    %v2864 = vand.u32 %v2863, 4294901760
    %v2865 = vsub.f32 %v2863, %v2864
    %v2866 = vand.u32 %v2865, 4294901760
    %2867 = vmatpush1.msra.mxu0 %v2866
    %2868 = vmatprep.subr.mxu0 0.0
    %v2869 = vand.u32 %v2711, 4294901760
    %v2870 = vsub.f32 %v2711, %v2869
    %v2871 = vand.u32 %v2870, 4294901760
    %v2872 = vsub.f32 %v2870, %v2871
    %v2873 = vand.u32 %v2872, 4294901760
    %2874 = vmatpush1.msra.mxu0 %v2873
    %2875 = vmatprep.subr.mxu0 0.0
    %v2876 = vand.u32 %v2712, 4294901760
    %v2877 = vsub.f32 %v2712, %v2876
    %v2878 = vand.u32 %v2877, 4294901760
    %v2879 = vsub.f32 %v2877, %v2878
    %v2880 = vand.u32 %v2879, 4294901760
    %2881 = vmatpush1.msra.mxu0 %v2880
    %2882 = vmatprep.subr.mxu0 0.0
    %v2883 = vand.u32 %v2713, 4294901760
    %v2884 = vsub.f32 %v2713, %v2883
    %v2885 = vand.u32 %v2884, 4294901760
    %v2886 = vsub.f32 %v2884, %v2885
    %v2887 = vand.u32 %v2886, 4294901760
    %2888 = vmatpush1.msra.mxu0 %v2887
    %2889 = vmatprep.subr.mxu0 0.0
    %v2890 = vand.u32 %v2714, 4294901760
    %v2891 = vsub.f32 %v2714, %v2890
    %v2892 = vand.u32 %v2891, 4294901760
    %v2893 = vsub.f32 %v2891, %v2892
    %v2894 = vand.u32 %v2893, 4294901760
    %2895 = vmatpush1.msra.mxu0 %v2894
    %2896 = vmatprep.subr.mxu0 0.0
    %v2897 = vand.u32 %v2715, 4294901760
    %v2898 = vsub.f32 %v2715, %v2897
    %v2899 = vand.u32 %v2898, 4294901760
    %v2900 = vsub.f32 %v2898, %v2899
    %v2901 = vand.u32 %v2900, 4294901760
    %2902 = vmatpush1.msra.mxu0 %v2901
    %2903 = vmatprep.subr.mxu0 0.0
    %v2904 = vand.u32 %v2716, 4294901760
    %v2905 = vsub.f32 %v2716, %v2904
    %v2906 = vand.u32 %v2905, 4294901760
    %v2907 = vsub.f32 %v2905, %v2906
    %v2908 = vand.u32 %v2907, 4294901760
    %2909 = vmatpush1.msra.mxu0 %v2908
    %2910 = vmatprep.subr.mxu0 0.0
    %v2911 = vand.u32 %v2717, 4294901760
    %v2912 = vsub.f32 %v2717, %v2911
    %v2913 = vand.u32 %v2912, 4294901760
    %v2914 = vsub.f32 %v2912, %v2913
    %v2915 = vand.u32 %v2914, 4294901760
    %2916 = vmatpush1.msra.mxu0 %v2915
    %2917 = vmatprep.subr.mxu0 0.0
    %v2918 = vand.u32 %v2718, 4294901760
    %v2919 = vsub.f32 %v2718, %v2918
    %v2920 = vand.u32 %v2919, 4294901760
    %v2921 = vsub.f32 %v2919, %v2920
    %v2922 = vand.u32 %v2921, 4294901760
    %2923 = vmatpush1.msra.mxu0 %v2922
    %2924 = vmatprep.subr.mxu0 0.0
    %v2925 = vand.u32 %v2719, 4294901760
    %v2926 = vsub.f32 %v2719, %v2925
    %v2927 = vand.u32 %v2926, 4294901760
    %v2928 = vsub.f32 %v2926, %v2927
    %v2929 = vand.u32 %v2928, 4294901760
    %2930 = vmatpush1.msra.mxu0 %v2929
    %2931 = vmatprep.subr.mxu0 0.0
    %2932 = vmatpush1.msra.mxu0 0.0
    %2933 = vmatprep.subr.mxu0 0.0
    %2934 = vmatpush1.msra.mxu0 0.0
    %2935 = vmatprep.subr.mxu0 0.0
    %2936 = vmatpush1.msra.mxu0 0.0
    %2937 = vmatprep.subr.mxu0 0.0
    %2938 = vmatpush1.msra.mxu0 0.0
    %2939 = vmatprep.subr.mxu0 0.0
    %2940 = vmatpush1.msra.mxu0 0.0
    %2941 = vmatprep.subr.mxu0 0.0
    %2942 = vmatpush1.msra.mxu0 0.0
    %2943 = vmatprep.subr.mxu0 0.0
    %2944 = vmatpush1.msra.mxu0 0.0
    %2945 = vmatprep.subr.mxu0 0.0
    %2946 = vmatpush1.msra.mxu0 0.0
    %2947 = vmatprep.subr.mxu0 0.0
    %2948 = vmatpush1.msra.mxu0 0.0
    %2949 = vmatprep.subr.mxu0 0.0
    %2950 = vmatpush1.msra.mxu0 0.0
    %2951 = vmatprep.subr.mxu0 0.0
    %2952 = vmatpush1.msra.mxu0 0.0
    %2953 = vmatprep.subr.mxu0 0.0
    %2954 = vmatpush1.msra.mxu0 0.0
    %2955 = vmatprep.subr.mxu0 0.0
    %2956 = vmatpush1.msra.mxu0 0.0
    %2957 = vmatprep.subr.mxu0 0.0
    %2958 = vmatpush1.msra.mxu0 0.0
    %2959 = vmatprep.subr.mxu0 0.0
    %2960 = vmatpush1.msra.mxu0 0.0
    %2961 = vmatprep.subr.mxu0 0.0
    %2962 = vmatpush1.msra.mxu0 0.0
    %2963 = vmatprep.mubr.f32.mxu0 0.0
    %v2964 = vand.u32 %v2702, 4294901760
    %2965 = vmatmul.mubr.f32.gmra.mrb[0].mxu0 %v2964
    %v2966 = vpop.f32.mrb[0].mxu0
    %v2967 = vadd.f32 %v2816, %v2966
    %v2968 = vpop.f32.mrb[0].mxu0
    %2969 = vdwg.mxu0
    %2970 = vmatprep.subr.mxu0 0.0
    %v2971 = vand.u32 %v2704, 4294901760
    %v2972 = vsub.f32 %v2704, %v2971
    %2973 = vmatpush1.msra.mxu0 %v2972
    %2974 = vmatprep.subr.mxu0 0.0
    %v2975 = vand.u32 %v2705, 4294901760
    %v2976 = vsub.f32 %v2705, %v2975
    %2977 = vmatpush1.msra.mxu0 %v2976
    %2978 = vmatprep.subr.mxu0 0.0
    %v2979 = vand.u32 %v2706, 4294901760
    %v2980 = vsub.f32 %v2706, %v2979
    %2981 = vmatpush1.msra.mxu0 %v2980
    %2982 = vmatprep.subr.mxu0 0.0
    %v2983 = vand.u32 %v2707, 4294901760
    %v2984 = vsub.f32 %v2707, %v2983
    %2985 = vmatpush1.msra.mxu0 %v2984
    %2986 = vmatprep.subr.mxu0 0.0
    %v2987 = vand.u32 %v2708, 4294901760
    %v2988 = vsub.f32 %v2708, %v2987
    %2989 = vmatpush1.msra.mxu0 %v2988
    %2990 = vmatprep.subr.mxu0 0.0
    %v2991 = vand.u32 %v2709, 4294901760
    %v2992 = vsub.f32 %v2709, %v2991
    %2993 = vmatpush1.msra.mxu0 %v2992
    %2994 = vmatprep.subr.mxu0 0.0
    %v2995 = vand.u32 %v2710, 4294901760
    %v2996 = vsub.f32 %v2710, %v2995
    %2997 = vmatpush1.msra.mxu0 %v2996
    %2998 = vmatprep.subr.mxu0 0.0
    %v2999 = vand.u32 %v2711, 4294901760
    %v3000 = vsub.f32 %v2711, %v2999
    %3001 = vmatpush1.msra.mxu0 %v3000
    %3002 = vmatprep.subr.mxu0 0.0
    %v3003 = vand.u32 %v2712, 4294901760
    %v3004 = vsub.f32 %v2712, %v3003
    %3005 = vmatpush1.msra.mxu0 %v3004
    %3006 = vmatprep.subr.mxu0 0.0
    %v3007 = vand.u32 %v2713, 4294901760
    %v3008 = vsub.f32 %v2713, %v3007
    %3009 = vmatpush1.msra.mxu0 %v3008
    %3010 = vmatprep.subr.mxu0 0.0
    %v3011 = vand.u32 %v2714, 4294901760
    %v3012 = vsub.f32 %v2714, %v3011
    %3013 = vmatpush1.msra.mxu0 %v3012
    %3014 = vmatprep.subr.mxu0 0.0
    %v3015 = vand.u32 %v2715, 4294901760
    %v3016 = vsub.f32 %v2715, %v3015
    %3017 = vmatpush1.msra.mxu0 %v3016
    %3018 = vmatprep.subr.mxu0 0.0
    %v3019 = vand.u32 %v2716, 4294901760
    %v3020 = vsub.f32 %v2716, %v3019
    %3021 = vmatpush1.msra.mxu0 %v3020
    %3022 = vmatprep.subr.mxu0 0.0
    %v3023 = vand.u32 %v2717, 4294901760
    %v3024 = vsub.f32 %v2717, %v3023
    %3025 = vmatpush1.msra.mxu0 %v3024
    %3026 = vmatprep.subr.mxu0 0.0
    %v3027 = vand.u32 %v2718, 4294901760
    %v3028 = vsub.f32 %v2718, %v3027
    %3029 = vmatpush1.msra.mxu0 %v3028
    %3030 = vmatprep.subr.mxu0 0.0
    %v3031 = vand.u32 %v2719, 4294901760
    %v3032 = vsub.f32 %v2719, %v3031
    %3033 = vmatpush1.msra.mxu0 %v3032
    %3034 = vmatprep.subr.mxu0 0.0
    %3035 = vmatpush1.msra.mxu0 0.0
    %3036 = vmatprep.subr.mxu0 0.0
    %3037 = vmatpush1.msra.mxu0 0.0
    %3038 = vmatprep.subr.mxu0 0.0
    %3039 = vmatpush1.msra.mxu0 0.0
    %3040 = vmatprep.subr.mxu0 0.0
    %3041 = vmatpush1.msra.mxu0 0.0
    %3042 = vmatprep.subr.mxu0 0.0
    %3043 = vmatpush1.msra.mxu0 0.0
    %3044 = vmatprep.subr.mxu0 0.0
    %3045 = vmatpush1.msra.mxu0 0.0
    %3046 = vmatprep.subr.mxu0 0.0
    %3047 = vmatpush1.msra.mxu0 0.0
    %3048 = vmatprep.subr.mxu0 0.0
    %3049 = vmatpush1.msra.mxu0 0.0
    %3050 = vmatprep.subr.mxu0 0.0
    %3051 = vmatpush1.msra.mxu0 0.0
    %3052 = vmatprep.subr.mxu0 0.0
    %3053 = vmatpush1.msra.mxu0 0.0
    %3054 = vmatprep.subr.mxu0 0.0
    %3055 = vmatpush1.msra.mxu0 0.0
    %3056 = vmatprep.subr.mxu0 0.0
    %3057 = vmatpush1.msra.mxu0 0.0
    %3058 = vmatprep.subr.mxu0 0.0
    %3059 = vmatpush1.msra.mxu0 0.0
    %3060 = vmatprep.subr.mxu0 0.0
    %3061 = vmatpush1.msra.mxu0 0.0
    %3062 = vmatprep.subr.mxu0 0.0
    %3063 = vmatpush1.msra.mxu0 0.0
    %3064 = vmatprep.subr.mxu0 0.0
    %3065 = vmatpush1.msra.mxu0 0.0
    %3066 = vmatprep.mubr.f32.mxu0 0.0
    %v3067 = vand.u32 %v2702, 4294901760
    %v3068 = vsub.f32 %v2702, %v3067
    %3069 = vmatmul.mubr.f32.gmra.mrb[0].mxu0 %v3068
    %v3070 = vpop.f32.mrb[0].mxu0
    %v3071 = vadd.f32 %v2967, %v3070
    %v3072 = vpop.f32.mrb[0].mxu0
    %3073 = vdwg.mxu0
    %3074 = vmatprep.subr.mxu0 0.0
    %v3075 = vand.u32 %v2704, 4294901760
    %3076 = vmatpush1.msra.mxu0 %v3075
    %3077 = vmatprep.subr.mxu0 0.0
    %v3078 = vand.u32 %v2705, 4294901760
    %3079 = vmatpush1.msra.mxu0 %v3078
    %3080 = vmatprep.subr.mxu0 0.0
    %v3081 = vand.u32 %v2706, 4294901760
    %3082 = vmatpush1.msra.mxu0 %v3081
    %3083 = vmatprep.subr.mxu0 0.0
    %v3084 = vand.u32 %v2707, 4294901760
    %3085 = vmatpush1.msra.mxu0 %v3084
    %3086 = vmatprep.subr.mxu0 0.0
    %v3087 = vand.u32 %v2708, 4294901760
    %3088 = vmatpush1.msra.mxu0 %v3087
    %3089 = vmatprep.subr.mxu0 0.0
    %v3090 = vand.u32 %v2709, 4294901760
    %3091 = vmatpush1.msra.mxu0 %v3090
    %3092 = vmatprep.subr.mxu0 0.0
    %v3093 = vand.u32 %v2710, 4294901760
    %3094 = vmatpush1.msra.mxu0 %v3093
    %3095 = vmatprep.subr.mxu0 0.0
    %v3096 = vand.u32 %v2711, 4294901760
    %3097 = vmatpush1.msra.mxu0 %v3096
    %3098 = vmatprep.subr.mxu0 0.0
    %v3099 = vand.u32 %v2712, 4294901760
    %3100 = vmatpush1.msra.mxu0 %v3099
    %3101 = vmatprep.subr.mxu0 0.0
    %v3102 = vand.u32 %v2713, 4294901760
    %3103 = vmatpush1.msra.mxu0 %v3102
    %3104 = vmatprep.subr.mxu0 0.0
    %v3105 = vand.u32 %v2714, 4294901760
    %3106 = vmatpush1.msra.mxu0 %v3105
    %3107 = vmatprep.subr.mxu0 0.0
    %v3108 = vand.u32 %v2715, 4294901760
    %3109 = vmatpush1.msra.mxu0 %v3108
    %3110 = vmatprep.subr.mxu0 0.0
    %v3111 = vand.u32 %v2716, 4294901760
    %3112 = vmatpush1.msra.mxu0 %v3111
    %3113 = vmatprep.subr.mxu0 0.0
    %v3114 = vand.u32 %v2717, 4294901760
    %3115 = vmatpush1.msra.mxu0 %v3114
    %3116 = vmatprep.subr.mxu0 0.0
    %v3117 = vand.u32 %v2718, 4294901760
    %3118 = vmatpush1.msra.mxu0 %v3117
    %3119 = vmatprep.subr.mxu0 0.0
    %v3120 = vand.u32 %v2719, 4294901760
    %3121 = vmatpush1.msra.mxu0 %v3120
    %3122 = vmatprep.subr.mxu0 0.0
    %3123 = vmatpush1.msra.mxu0 0.0
    %3124 = vmatprep.subr.mxu0 0.0
    %3125 = vmatpush1.msra.mxu0 0.0
    %3126 = vmatprep.subr.mxu0 0.0
    %3127 = vmatpush1.msra.mxu0 0.0
    %3128 = vmatprep.subr.mxu0 0.0
    %3129 = vmatpush1.msra.mxu0 0.0
    %3130 = vmatprep.subr.mxu0 0.0
    %3131 = vmatpush1.msra.mxu0 0.0
    %3132 = vmatprep.subr.mxu0 0.0
    %3133 = vmatpush1.msra.mxu0 0.0
    %3134 = vmatprep.subr.mxu0 0.0
    %3135 = vmatpush1.msra.mxu0 0.0
    %3136 = vmatprep.subr.mxu0 0.0
    %3137 = vmatpush1.msra.mxu0 0.0
    %3138 = vmatprep.subr.mxu0 0.0
    %3139 = vmatpush1.msra.mxu0 0.0
    %3140 = vmatprep.subr.mxu0 0.0
    %3141 = vmatpush1.msra.mxu0 0.0
    %3142 = vmatprep.subr.mxu0 0.0
    %3143 = vmatpush1.msra.mxu0 0.0
    %3144 = vmatprep.subr.mxu0 0.0
    %3145 = vmatpush1.msra.mxu0 0.0
    %3146 = vmatprep.subr.mxu0 0.0
    %3147 = vmatpush1.msra.mxu0 0.0
    %3148 = vmatprep.subr.mxu0 0.0
    %3149 = vmatpush1.msra.mxu0 0.0
    %3150 = vmatprep.subr.mxu0 0.0
    %3151 = vmatpush1.msra.mxu0 0.0
    %3152 = vmatprep.subr.mxu0 0.0
    %3153 = vmatpush1.msra.mxu0 0.0
    %3154 = vmatprep.mubr.f32.mxu0 0.0
    %v3155 = vand.u32 %v2702, 4294901760
    %v3156 = vsub.f32 %v2702, %v3155
    %v3157 = vand.u32 %v3156, 4294901760
    %3158 = vmatmul.mubr.f32.gmra.mrb[0].mxu0 %v3157
    %v3159 = vpop.f32.mrb[0].mxu0
    %v3160 = vadd.f32 %v3071, %v3159
    %v3161 = vpop.f32.mrb[0].mxu0
    %3162 = vdwg.mxu0
    %3163 = vmatprep.subr.mxu0 0.0
    %v3164 = vand.u32 %v2704, 4294901760
    %v3165 = vsub.f32 %v2704, %v3164
    %v3166 = vand.u32 %v3165, 4294901760
    %3167 = vmatpush1.msra.mxu0 %v3166
    %3168 = vmatprep.subr.mxu0 0.0
    %v3169 = vand.u32 %v2705, 4294901760
    %v3170 = vsub.f32 %v2705, %v3169
    %v3171 = vand.u32 %v3170, 4294901760
    %3172 = vmatpush1.msra.mxu0 %v3171
    %3173 = vmatprep.subr.mxu0 0.0
    %v3174 = vand.u32 %v2706, 4294901760
    %v3175 = vsub.f32 %v2706, %v3174
    %v3176 = vand.u32 %v3175, 4294901760
    %3177 = vmatpush1.msra.mxu0 %v3176
    %3178 = vmatprep.subr.mxu0 0.0
    %v3179 = vand.u32 %v2707, 4294901760
    %v3180 = vsub.f32 %v2707, %v3179
    %v3181 = vand.u32 %v3180, 4294901760
    %3182 = vmatpush1.msra.mxu0 %v3181
    %3183 = vmatprep.subr.mxu0 0.0
    %v3184 = vand.u32 %v2708, 4294901760
    %v3185 = vsub.f32 %v2708, %v3184
    %v3186 = vand.u32 %v3185, 4294901760
    %3187 = vmatpush1.msra.mxu0 %v3186
    %3188 = vmatprep.subr.mxu0 0.0
    %v3189 = vand.u32 %v2709, 4294901760
    %v3190 = vsub.f32 %v2709, %v3189
    %v3191 = vand.u32 %v3190, 4294901760
    %3192 = vmatpush1.msra.mxu0 %v3191
    %3193 = vmatprep.subr.mxu0 0.0
    %v3194 = vand.u32 %v2710, 4294901760
    %v3195 = vsub.f32 %v2710, %v3194
    %v3196 = vand.u32 %v3195, 4294901760
    %3197 = vmatpush1.msra.mxu0 %v3196
    %3198 = vmatprep.subr.mxu0 0.0
    %v3199 = vand.u32 %v2711, 4294901760
    %v3200 = vsub.f32 %v2711, %v3199
    %v3201 = vand.u32 %v3200, 4294901760
    %3202 = vmatpush1.msra.mxu0 %v3201
    %3203 = vmatprep.subr.mxu0 0.0
    %v3204 = vand.u32 %v2712, 4294901760
    %v3205 = vsub.f32 %v2712, %v3204
    %v3206 = vand.u32 %v3205, 4294901760
    %3207 = vmatpush1.msra.mxu0 %v3206
    %3208 = vmatprep.subr.mxu0 0.0
    %v3209 = vand.u32 %v2713, 4294901760
    %v3210 = vsub.f32 %v2713, %v3209
    %v3211 = vand.u32 %v3210, 4294901760
    %3212 = vmatpush1.msra.mxu0 %v3211
    %3213 = vmatprep.subr.mxu0 0.0
    %v3214 = vand.u32 %v2714, 4294901760
    %v3215 = vsub.f32 %v2714, %v3214
    %v3216 = vand.u32 %v3215, 4294901760
    %3217 = vmatpush1.msra.mxu0 %v3216
    %3218 = vmatprep.subr.mxu0 0.0
    %v3219 = vand.u32 %v2715, 4294901760
    %v3220 = vsub.f32 %v2715, %v3219
    %v3221 = vand.u32 %v3220, 4294901760
    %3222 = vmatpush1.msra.mxu0 %v3221
    %3223 = vmatprep.subr.mxu0 0.0
    %v3224 = vand.u32 %v2716, 4294901760
    %v3225 = vsub.f32 %v2716, %v3224
    %v3226 = vand.u32 %v3225, 4294901760
    %3227 = vmatpush1.msra.mxu0 %v3226
    %3228 = vmatprep.subr.mxu0 0.0
    %v3229 = vand.u32 %v2717, 4294901760
    %v3230 = vsub.f32 %v2717, %v3229
    %v3231 = vand.u32 %v3230, 4294901760
    %3232 = vmatpush1.msra.mxu0 %v3231
    %3233 = vmatprep.subr.mxu0 0.0
    %v3234 = vand.u32 %v2718, 4294901760
    %v3235 = vsub.f32 %v2718, %v3234
    %v3236 = vand.u32 %v3235, 4294901760
    %3237 = vmatpush1.msra.mxu0 %v3236
    %3238 = vmatprep.subr.mxu0 0.0
    %v3239 = vand.u32 %v2719, 4294901760
    %v3240 = vsub.f32 %v2719, %v3239
    %v3241 = vand.u32 %v3240, 4294901760
    %3242 = vmatpush1.msra.mxu0 %v3241
    %3243 = vmatprep.subr.mxu0 0.0
    %3244 = vmatpush1.msra.mxu0 0.0
    %3245 = vmatprep.subr.mxu0 0.0
    %3246 = vmatpush1.msra.mxu0 0.0
    %3247 = vmatprep.subr.mxu0 0.0
    %3248 = vmatpush1.msra.mxu0 0.0
    %3249 = vmatprep.subr.mxu0 0.0
    %3250 = vmatpush1.msra.mxu0 0.0
    %3251 = vmatprep.subr.mxu0 0.0
    %3252 = vmatpush1.msra.mxu0 0.0
    %3253 = vmatprep.subr.mxu0 0.0
    %3254 = vmatpush1.msra.mxu0 0.0
    %3255 = vmatprep.subr.mxu0 0.0
    %3256 = vmatpush1.msra.mxu0 0.0
    %3257 = vmatprep.subr.mxu0 0.0
    %3258 = vmatpush1.msra.mxu0 0.0
    %3259 = vmatprep.subr.mxu0 0.0
    %3260 = vmatpush1.msra.mxu0 0.0
    %3261 = vmatprep.subr.mxu0 0.0
    %3262 = vmatpush1.msra.mxu0 0.0
    %3263 = vmatprep.subr.mxu0 0.0
    %3264 = vmatpush1.msra.mxu0 0.0
    %3265 = vmatprep.subr.mxu0 0.0
    %3266 = vmatpush1.msra.mxu0 0.0
    %3267 = vmatprep.subr.mxu0 0.0
    %3268 = vmatpush1.msra.mxu0 0.0
    %3269 = vmatprep.subr.mxu0 0.0
    %3270 = vmatpush1.msra.mxu0 0.0
    %3271 = vmatprep.subr.mxu0 0.0
    %3272 = vmatpush1.msra.mxu0 0.0
    %3273 = vmatprep.subr.mxu0 0.0
    %3274 = vmatpush1.msra.mxu0 0.0
    %3275 = vmatprep.mubr.f32.mxu0 0.0
    %v3276 = vand.u32 %v2702, 4294901760
    %3277 = vmatmul.mubr.f32.gmra.mrb[0].mxu0 %v3276
    %v3278 = vpop.f32.mrb[0].mxu0
    %v3279 = vadd.f32 %v3160, %v3278
    %v3280 = vpop.f32.mrb[0].mxu0
    %3281 = vdwg.mxu0
    %3282 = vmatprep.subr.mxu0 0.0
    %v3283 = vand.u32 %v2704, 4294901760
    %3284 = vmatpush1.msra.mxu0 %v3283
    %3285 = vmatprep.subr.mxu0 0.0
    %v3286 = vand.u32 %v2705, 4294901760
    %3287 = vmatpush1.msra.mxu0 %v3286
    %3288 = vmatprep.subr.mxu0 0.0
    %v3289 = vand.u32 %v2706, 4294901760
    %3290 = vmatpush1.msra.mxu0 %v3289
    %3291 = vmatprep.subr.mxu0 0.0
    %v3292 = vand.u32 %v2707, 4294901760
    %3293 = vmatpush1.msra.mxu0 %v3292
    %3294 = vmatprep.subr.mxu0 0.0
    %v3295 = vand.u32 %v2708, 4294901760
    %3296 = vmatpush1.msra.mxu0 %v3295
    %3297 = vmatprep.subr.mxu0 0.0
    %v3298 = vand.u32 %v2709, 4294901760
    %3299 = vmatpush1.msra.mxu0 %v3298
    %3300 = vmatprep.subr.mxu0 0.0
    %v3301 = vand.u32 %v2710, 4294901760
    %3302 = vmatpush1.msra.mxu0 %v3301
    %3303 = vmatprep.subr.mxu0 0.0
    %v3304 = vand.u32 %v2711, 4294901760
    %3305 = vmatpush1.msra.mxu0 %v3304
    %3306 = vmatprep.subr.mxu0 0.0
    %v3307 = vand.u32 %v2712, 4294901760
    %3308 = vmatpush1.msra.mxu0 %v3307
    %3309 = vmatprep.subr.mxu0 0.0
    %v3310 = vand.u32 %v2713, 4294901760
    %3311 = vmatpush1.msra.mxu0 %v3310
    %3312 = vmatprep.subr.mxu0 0.0
    %v3313 = vand.u32 %v2714, 4294901760
    %3314 = vmatpush1.msra.mxu0 %v3313
    %3315 = vmatprep.subr.mxu0 0.0
    %v3316 = vand.u32 %v2715, 4294901760
    %3317 = vmatpush1.msra.mxu0 %v3316
    %3318 = vmatprep.subr.mxu0 0.0
    %v3319 = vand.u32 %v2716, 4294901760
    %3320 = vmatpush1.msra.mxu0 %v3319
    %3321 = vmatprep.subr.mxu0 0.0
    %v3322 = vand.u32 %v2717, 4294901760
    %3323 = vmatpush1.msra.mxu0 %v3322
    %3324 = vmatprep.subr.mxu0 0.0
    %v3325 = vand.u32 %v2718, 4294901760
    %3326 = vmatpush1.msra.mxu0 %v3325
    %3327 = vmatprep.subr.mxu0 0.0
    %v3328 = vand.u32 %v2719, 4294901760
    %3329 = vmatpush1.msra.mxu0 %v3328
    %3330 = vmatprep.subr.mxu0 0.0
    %3331 = vmatpush1.msra.mxu0 0.0
    %3332 = vmatprep.subr.mxu0 0.0
    %3333 = vmatpush1.msra.mxu0 0.0
    %3334 = vmatprep.subr.mxu0 0.0
    %3335 = vmatpush1.msra.mxu0 0.0
    %3336 = vmatprep.subr.mxu0 0.0
    %3337 = vmatpush1.msra.mxu0 0.0
    %3338 = vmatprep.subr.mxu0 0.0
    %3339 = vmatpush1.msra.mxu0 0.0
    %3340 = vmatprep.subr.mxu0 0.0
    %3341 = vmatpush1.msra.mxu0 0.0
    %3342 = vmatprep.subr.mxu0 0.0
    %3343 = vmatpush1.msra.mxu0 0.0
    %3344 = vmatprep.subr.mxu0 0.0
    %3345 = vmatpush1.msra.mxu0 0.0
    %3346 = vmatprep.subr.mxu0 0.0
    %3347 = vmatpush1.msra.mxu0 0.0
    %3348 = vmatprep.subr.mxu0 0.0
    %3349 = vmatpush1.msra.mxu0 0.0
    %3350 = vmatprep.subr.mxu0 0.0
    %3351 = vmatpush1.msra.mxu0 0.0
    %3352 = vmatprep.subr.mxu0 0.0
    %3353 = vmatpush1.msra.mxu0 0.0
    %3354 = vmatprep.subr.mxu0 0.0
    %3355 = vmatpush1.msra.mxu0 0.0
    %3356 = vmatprep.subr.mxu0 0.0
    %3357 = vmatpush1.msra.mxu0 0.0
    %3358 = vmatprep.subr.mxu0 0.0
    %3359 = vmatpush1.msra.mxu0 0.0
    %3360 = vmatprep.subr.mxu0 0.0
    %3361 = vmatpush1.msra.mxu0 0.0
    %3362 = vmatprep.mubr.f32.mxu0 0.0
    %v3363 = vand.u32 %v2702, 4294901760
    %3364 = vmatmul.mubr.f32.gmra.mrb[0].mxu0 %v3363
    %v3365 = vpop.f32.mrb[0].mxu0
    %v3366 = vadd.f32 %v3279, %v3365
    %v3367 = vpop.f32.mrb[0].mxu0
    %3368 = vdwg.mxu0
    %v3369 = vtanh.pop %v3366
    %v3370 = vadd.f32 %v2702, %v3369
    %s3371 = scalar_lea.vmem [#allocation2], 640
    %v3372 = vld [vmem:[%s3371] sm:$0xff]
    %v3373 = vld [vmem:[%s3371 + $0x8] sm:$0xff]
    %v3374 = vld [vmem:[%s3371 + $0x10] sm:$0xff]
    %v3375 = vld [vmem:[%s3371 + $0x18] sm:$0xff]
    %v3376 = vld [vmem:[%s3371 + $0x20] sm:$0xff]
    %v3377 = vld [vmem:[%s3371 + $0x28] sm:$0xff]
    %v3378 = vld [vmem:[%s3371 + $0x30] sm:$0xff]
    %v3379 = vld [vmem:[%s3371 + $0x38] sm:$0xff]
    %v3380 = vld [vmem:[%s3371 + $0x40] sm:$0xff]
    %v3381 = vld [vmem:[%s3371 + $0x48] sm:$0xff]
    %v3382 = vld [vmem:[%s3371 + $0x50] sm:$0xff]
    %v3383 = vld [vmem:[%s3371 + $0x58] sm:$0xff]
    %v3384 = vld [vmem:[%s3371 + $0x60] sm:$0xff]
    %v3385 = vld [vmem:[%s3371 + $0x68] sm:$0xff]
    %v3386 = vld [vmem:[%s3371 + $0x70] sm:$0xff]
    %v3387 = vld [vmem:[%s3371 + $0x78] sm:$0xff]
    %s3388 = scalar_lea.vmem %s2, 5
    %v3389 = vld [vmem:[%s3388] sm:$0x1]
    %v3391 = vlaneseq
    %v3392 = vshrl.u32 %v3391, 7
    %v3393 = vsub.s32 0, %v3392
    %v3394 = vrot.slane %v3389, %v3393
    %3396 = vmatprep.subr.mxu0 0.0
    %v3397 = vand.u32 %v3372, 4294901760
    %3398 = vmatpush1.msra.mxu0 %v3397
    %3399 = vmatprep.subr.mxu0 0.0
    %v3400 = vand.u32 %v3373, 4294901760
    %3401 = vmatpush1.msra.mxu0 %v3400
    %3402 = vmatprep.subr.mxu0 0.0
    %v3403 = vand.u32 %v3374, 4294901760
    %3404 = vmatpush1.msra.mxu0 %v3403
    %3405 = vmatprep.subr.mxu0 0.0
    %v3406 = vand.u32 %v3375, 4294901760
    %3407 = vmatpush1.msra.mxu0 %v3406
    %3408 = vmatprep.subr.mxu0 0.0
    %v3409 = vand.u32 %v3376, 4294901760
    %3410 = vmatpush1.msra.mxu0 %v3409
    %3411 = vmatprep.subr.mxu0 0.0
    %v3412 = vand.u32 %v3377, 4294901760
    %3413 = vmatpush1.msra.mxu0 %v3412
    %3414 = vmatprep.subr.mxu0 0.0
    %v3415 = vand.u32 %v3378, 4294901760
    %3416 = vmatpush1.msra.mxu0 %v3415
    %3417 = vmatprep.subr.mxu0 0.0
    %v3418 = vand.u32 %v3379, 4294901760
    %3419 = vmatpush1.msra.mxu0 %v3418
    %3420 = vmatprep.subr.mxu0 0.0
    %v3421 = vand.u32 %v3380, 4294901760
    %3422 = vmatpush1.msra.mxu0 %v3421
    %3423 = vmatprep.subr.mxu0 0.0
    %v3424 = vand.u32 %v3381, 4294901760
    %3425 = vmatpush1.msra.mxu0 %v3424
    %3426 = vmatprep.subr.mxu0 0.0
    %v3427 = vand.u32 %v3382, 4294901760
    %3428 = vmatpush1.msra.mxu0 %v3427
    %3429 = vmatprep.subr.mxu0 0.0
    %v3430 = vand.u32 %v3383, 4294901760
    %3431 = vmatpush1.msra.mxu0 %v3430
    %3432 = vmatprep.subr.mxu0 0.0
    %v3433 = vand.u32 %v3384, 4294901760
    %3434 = vmatpush1.msra.mxu0 %v3433
    %3435 = vmatprep.subr.mxu0 0.0
    %v3436 = vand.u32 %v3385, 4294901760
    %3437 = vmatpush1.msra.mxu0 %v3436
    %3438 = vmatprep.subr.mxu0 0.0
    %v3439 = vand.u32 %v3386, 4294901760
    %3440 = vmatpush1.msra.mxu0 %v3439
    %3441 = vmatprep.subr.mxu0 0.0
    %v3442 = vand.u32 %v3387, 4294901760
    %3443 = vmatpush1.msra.mxu0 %v3442
    %3444 = vmatprep.subr.mxu0 0.0
    %3445 = vmatpush1.msra.mxu0 0.0
    %3446 = vmatprep.subr.mxu0 0.0
    %3447 = vmatpush1.msra.mxu0 0.0
    %3448 = vmatprep.subr.mxu0 0.0
    %3449 = vmatpush1.msra.mxu0 0.0
    %3450 = vmatprep.subr.mxu0 0.0
    %3451 = vmatpush1.msra.mxu0 0.0
    %3452 = vmatprep.subr.mxu0 0.0
    %3453 = vmatpush1.msra.mxu0 0.0
    %3454 = vmatprep.subr.mxu0 0.0
    %3455 = vmatpush1.msra.mxu0 0.0
    %3456 = vmatprep.subr.mxu0 0.0
    %3457 = vmatpush1.msra.mxu0 0.0
    %3458 = vmatprep.subr.mxu0 0.0
    %3459 = vmatpush1.msra.mxu0 0.0
    %3460 = vmatprep.subr.mxu0 0.0
    %3461 = vmatpush1.msra.mxu0 0.0
    %3462 = vmatprep.subr.mxu0 0.0
    %3463 = vmatpush1.msra.mxu0 0.0
    %3464 = vmatprep.subr.mxu0 0.0
    %3465 = vmatpush1.msra.mxu0 0.0
    %3466 = vmatprep.subr.mxu0 0.0
    %3467 = vmatpush1.msra.mxu0 0.0
    %3468 = vmatprep.subr.mxu0 0.0
    %3469 = vmatpush1.msra.mxu0 0.0
    %3470 = vmatprep.subr.mxu0 0.0
    %3471 = vmatpush1.msra.mxu0 0.0
    %3472 = vmatprep.subr.mxu0 0.0
    %3473 = vmatpush1.msra.mxu0 0.0
    %3474 = vmatprep.subr.mxu0 0.0
    %3475 = vmatpush1.msra.mxu0 0.0
    %3476 = vmatprep.mubr.f32.mxu0 0.0
    %v3477 = vand.u32 %v3370, 4294901760
    %v3478 = vsub.f32 %v3370, %v3477
    %v3479 = vand.u32 %v3478, 4294901760
    %v3480 = vsub.f32 %v3478, %v3479
    %v3481 = vand.u32 %v3480, 4294901760
    %3482 = vmatmul.mubr.f32.gmra.mrb[0].mxu0 %v3481
    %v3483 = vpop.f32.mrb[0].mxu0
    %v3484 = vadd.f32 %v3394, %v3483
    %v3485 = vpop.f32.mrb[0].mxu0
    %3486 = vdwg.mxu0
    %3487 = vmatprep.subr.mxu0 0.0
    %v3488 = vand.u32 %v3372, 4294901760
    %v3489 = vsub.f32 %v3372, %v3488
    %v3490 = vand.u32 %v3489, 4294901760
    %v3491 = vsub.f32 %v3489, %v3490
    %v3492 = vand.u32 %v3491, 4294901760
    %3493 = vmatpush1.msra.mxu0 %v3492
    %3494 = vmatprep.subr.mxu0 0.0
    %v3495 = vand.u32 %v3373, 4294901760
    %v3496 = vsub.f32 %v3373, %v3495
    %v3497 = vand.u32 %v3496, 4294901760
    %v3498 = vsub.f32 %v3496, %v3497
    %v3499 = vand.u32 %v3498, 4294901760
    %3500 = vmatpush1.msra.mxu0 %v3499
    %3501 = vmatprep.subr.mxu0 0.0
    %v3502 = vand.u32 %v3374, 4294901760
    %v3503 = vsub.f32 %v3374, %v3502
    %v3504 = vand.u32 %v3503, 4294901760
    %v3505 = vsub.f32 %v3503, %v3504
    %v3506 = vand.u32 %v3505, 4294901760
    %3507 = vmatpush1.msra.mxu0 %v3506
    %3508 = vmatprep.subr.mxu0 0.0
    %v3509 = vand.u32 %v3375, 4294901760
    %v3510 = vsub.f32 %v3375, %v3509
    %v3511 = vand.u32 %v3510, 4294901760
    %v3512 = vsub.f32 %v3510, %v3511
    %v3513 = vand.u32 %v3512, 4294901760
    %3514 = vmatpush1.msra.mxu0 %v3513
    %3515 = vmatprep.subr.mxu0 0.0
    %v3516 = vand.u32 %v3376, 4294901760
    %v3517 = vsub.f32 %v3376, %v3516
    %v3518 = vand.u32 %v3517, 4294901760
    %v3519 = vsub.f32 %v3517, %v3518
    %v3520 = vand.u32 %v3519, 4294901760
    %3521 = vmatpush1.msra.mxu0 %v3520
    %3522 = vmatprep.subr.mxu0 0.0
    %v3523 = vand.u32 %v3377, 4294901760
    %v3524 = vsub.f32 %v3377, %v3523
    %v3525 = vand.u32 %v3524, 4294901760
    %v3526 = vsub.f32 %v3524, %v3525
    %v3527 = vand.u32 %v3526, 4294901760
    %3528 = vmatpush1.msra.mxu0 %v3527
    %3529 = vmatprep.subr.mxu0 0.0
    %v3530 = vand.u32 %v3378, 4294901760
    %v3531 = vsub.f32 %v3378, %v3530
    %v3532 = vand.u32 %v3531, 4294901760
    %v3533 = vsub.f32 %v3531, %v3532
    %v3534 = vand.u32 %v3533, 4294901760
    %3535 = vmatpush1.msra.mxu0 %v3534
    %3536 = vmatprep.subr.mxu0 0.0
    %v3537 = vand.u32 %v3379, 4294901760
    %v3538 = vsub.f32 %v3379, %v3537
    %v3539 = vand.u32 %v3538, 4294901760
    %v3540 = vsub.f32 %v3538, %v3539
    %v3541 = vand.u32 %v3540, 4294901760
    %3542 = vmatpush1.msra.mxu0 %v3541
    %3543 = vmatprep.subr.mxu0 0.0
    %v3544 = vand.u32 %v3380, 4294901760
    %v3545 = vsub.f32 %v3380, %v3544
    %v3546 = vand.u32 %v3545, 4294901760
    %v3547 = vsub.f32 %v3545, %v3546
    %v3548 = vand.u32 %v3547, 4294901760
    %3549 = vmatpush1.msra.mxu0 %v3548
    %3550 = vmatprep.subr.mxu0 0.0
    %v3551 = vand.u32 %v3381, 4294901760
    %v3552 = vsub.f32 %v3381, %v3551
    %v3553 = vand.u32 %v3552, 4294901760
    %v3554 = vsub.f32 %v3552, %v3553
    %v3555 = vand.u32 %v3554, 4294901760
    %3556 = vmatpush1.msra.mxu0 %v3555
    %3557 = vmatprep.subr.mxu0 0.0
    %v3558 = vand.u32 %v3382, 4294901760
    %v3559 = vsub.f32 %v3382, %v3558
    %v3560 = vand.u32 %v3559, 4294901760
    %v3561 = vsub.f32 %v3559, %v3560
    %v3562 = vand.u32 %v3561, 4294901760
    %3563 = vmatpush1.msra.mxu0 %v3562
    %3564 = vmatprep.subr.mxu0 0.0
    %v3565 = vand.u32 %v3383, 4294901760
    %v3566 = vsub.f32 %v3383, %v3565
    %v3567 = vand.u32 %v3566, 4294901760
    %v3568 = vsub.f32 %v3566, %v3567
    %v3569 = vand.u32 %v3568, 4294901760
    %3570 = vmatpush1.msra.mxu0 %v3569
    %3571 = vmatprep.subr.mxu0 0.0
    %v3572 = vand.u32 %v3384, 4294901760
    %v3573 = vsub.f32 %v3384, %v3572
    %v3574 = vand.u32 %v3573, 4294901760
    %v3575 = vsub.f32 %v3573, %v3574
    %v3576 = vand.u32 %v3575, 4294901760
    %3577 = vmatpush1.msra.mxu0 %v3576
    %3578 = vmatprep.subr.mxu0 0.0
    %v3579 = vand.u32 %v3385, 4294901760
    %v3580 = vsub.f32 %v3385, %v3579
    %v3581 = vand.u32 %v3580, 4294901760
    %v3582 = vsub.f32 %v3580, %v3581
    %v3583 = vand.u32 %v3582, 4294901760
    %3584 = vmatpush1.msra.mxu0 %v3583
    %3585 = vmatprep.subr.mxu0 0.0
    %v3586 = vand.u32 %v3386, 4294901760
    %v3587 = vsub.f32 %v3386, %v3586
    %v3588 = vand.u32 %v3587, 4294901760
    %v3589 = vsub.f32 %v3587, %v3588
    %v3590 = vand.u32 %v3589, 4294901760
    %3591 = vmatpush1.msra.mxu0 %v3590
    %3592 = vmatprep.subr.mxu0 0.0
    %v3593 = vand.u32 %v3387, 4294901760
    %v3594 = vsub.f32 %v3387, %v3593
    %v3595 = vand.u32 %v3594, 4294901760
    %v3596 = vsub.f32 %v3594, %v3595
    %v3597 = vand.u32 %v3596, 4294901760
    %3598 = vmatpush1.msra.mxu0 %v3597
    %3599 = vmatprep.subr.mxu0 0.0
    %3600 = vmatpush1.msra.mxu0 0.0
    %3601 = vmatprep.subr.mxu0 0.0
    %3602 = vmatpush1.msra.mxu0 0.0
    %3603 = vmatprep.subr.mxu0 0.0
    %3604 = vmatpush1.msra.mxu0 0.0
    %3605 = vmatprep.subr.mxu0 0.0
    %3606 = vmatpush1.msra.mxu0 0.0
    %3607 = vmatprep.subr.mxu0 0.0
    %3608 = vmatpush1.msra.mxu0 0.0
    %3609 = vmatprep.subr.mxu0 0.0
    %3610 = vmatpush1.msra.mxu0 0.0
    %3611 = vmatprep.subr.mxu0 0.0
    %3612 = vmatpush1.msra.mxu0 0.0
    %3613 = vmatprep.subr.mxu0 0.0
    %3614 = vmatpush1.msra.mxu0 0.0
    %3615 = vmatprep.subr.mxu0 0.0
    %3616 = vmatpush1.msra.mxu0 0.0
    %3617 = vmatprep.subr.mxu0 0.0
    %3618 = vmatpush1.msra.mxu0 0.0
    %3619 = vmatprep.subr.mxu0 0.0
    %3620 = vmatpush1.msra.mxu0 0.0
    %3621 = vmatprep.subr.mxu0 0.0
    %3622 = vmatpush1.msra.mxu0 0.0
    %3623 = vmatprep.subr.mxu0 0.0
    %3624 = vmatpush1.msra.mxu0 0.0
    %3625 = vmatprep.subr.mxu0 0.0
    %3626 = vmatpush1.msra.mxu0 0.0
    %3627 = vmatprep.subr.mxu0 0.0
    %3628 = vmatpush1.msra.mxu0 0.0
    %3629 = vmatprep.subr.mxu0 0.0
    %3630 = vmatpush1.msra.mxu0 0.0
    %3631 = vmatprep.mubr.f32.mxu0 0.0
    %v3632 = vand.u32 %v3370, 4294901760
    %3633 = vmatmul.mubr.f32.gmra.mrb[0].mxu0 %v3632
    %v3634 = vpop.f32.mrb[0].mxu0
    %v3635 = vadd.f32 %v3484, %v3634
    %v3636 = vpop.f32.mrb[0].mxu0
    %3637 = vdwg.mxu0
    %3638 = vmatprep.subr.mxu0 0.0
    %v3639 = vand.u32 %v3372, 4294901760
    %v3640 = vsub.f32 %v3372, %v3639
    %3641 = vmatpush1.msra.mxu0 %v3640
    %3642 = vmatprep.subr.mxu0 0.0
    %v3643 = vand.u32 %v3373, 4294901760
    %v3644 = vsub.f32 %v3373, %v3643
    %3645 = vmatpush1.msra.mxu0 %v3644
    %3646 = vmatprep.subr.mxu0 0.0
    %v3647 = vand.u32 %v3374, 4294901760
    %v3648 = vsub.f32 %v3374, %v3647
    %3649 = vmatpush1.msra.mxu0 %v3648
    %3650 = vmatprep.subr.mxu0 0.0
    %v3651 = vand.u32 %v3375, 4294901760
    %v3652 = vsub.f32 %v3375, %v3651
    %3653 = vmatpush1.msra.mxu0 %v3652
    %3654 = vmatprep.subr.mxu0 0.0
    %v3655 = vand.u32 %v3376, 4294901760
    %v3656 = vsub.f32 %v3376, %v3655
    %3657 = vmatpush1.msra.mxu0 %v3656
    %3658 = vmatprep.subr.mxu0 0.0
    %v3659 = vand.u32 %v3377, 4294901760
    %v3660 = vsub.f32 %v3377, %v3659
    %3661 = vmatpush1.msra.mxu0 %v3660
    %3662 = vmatprep.subr.mxu0 0.0
    %v3663 = vand.u32 %v3378, 4294901760
    %v3664 = vsub.f32 %v3378, %v3663
    %3665 = vmatpush1.msra.mxu0 %v3664
    %3666 = vmatprep.subr.mxu0 0.0
    %v3667 = vand.u32 %v3379, 4294901760
    %v3668 = vsub.f32 %v3379, %v3667
    %3669 = vmatpush1.msra.mxu0 %v3668
    %3670 = vmatprep.subr.mxu0 0.0
    %v3671 = vand.u32 %v3380, 4294901760
    %v3672 = vsub.f32 %v3380, %v3671
    %3673 = vmatpush1.msra.mxu0 %v3672
    %3674 = vmatprep.subr.mxu0 0.0
    %v3675 = vand.u32 %v3381, 4294901760
    %v3676 = vsub.f32 %v3381, %v3675
    %3677 = vmatpush1.msra.mxu0 %v3676
    %3678 = vmatprep.subr.mxu0 0.0
    %v3679 = vand.u32 %v3382, 4294901760
    %v3680 = vsub.f32 %v3382, %v3679
    %3681 = vmatpush1.msra.mxu0 %v3680
    %3682 = vmatprep.subr.mxu0 0.0
    %v3683 = vand.u32 %v3383, 4294901760
    %v3684 = vsub.f32 %v3383, %v3683
    %3685 = vmatpush1.msra.mxu0 %v3684
    %3686 = vmatprep.subr.mxu0 0.0
    %v3687 = vand.u32 %v3384, 4294901760
    %v3688 = vsub.f32 %v3384, %v3687
    %3689 = vmatpush1.msra.mxu0 %v3688
    %3690 = vmatprep.subr.mxu0 0.0
    %v3691 = vand.u32 %v3385, 4294901760
    %v3692 = vsub.f32 %v3385, %v3691
    %3693 = vmatpush1.msra.mxu0 %v3692
    %3694 = vmatprep.subr.mxu0 0.0
    %v3695 = vand.u32 %v3386, 4294901760
    %v3696 = vsub.f32 %v3386, %v3695
    %3697 = vmatpush1.msra.mxu0 %v3696
    %3698 = vmatprep.subr.mxu0 0.0
    %v3699 = vand.u32 %v3387, 4294901760
    %v3700 = vsub.f32 %v3387, %v3699
    %3701 = vmatpush1.msra.mxu0 %v3700
    %3702 = vmatprep.subr.mxu0 0.0
    %3703 = vmatpush1.msra.mxu0 0.0
    %3704 = vmatprep.subr.mxu0 0.0
    %3705 = vmatpush1.msra.mxu0 0.0
    %3706 = vmatprep.subr.mxu0 0.0
    %3707 = vmatpush1.msra.mxu0 0.0
    %3708 = vmatprep.subr.mxu0 0.0
    %3709 = vmatpush1.msra.mxu0 0.0
    %3710 = vmatprep.subr.mxu0 0.0
    %3711 = vmatpush1.msra.mxu0 0.0
    %3712 = vmatprep.subr.mxu0 0.0
    %3713 = vmatpush1.msra.mxu0 0.0
    %3714 = vmatprep.subr.mxu0 0.0
    %3715 = vmatpush1.msra.mxu0 0.0
    %3716 = vmatprep.subr.mxu0 0.0
    %3717 = vmatpush1.msra.mxu0 0.0
    %3718 = vmatprep.subr.mxu0 0.0
    %3719 = vmatpush1.msra.mxu0 0.0
    %3720 = vmatprep.subr.mxu0 0.0
    %3721 = vmatpush1.msra.mxu0 0.0
    %3722 = vmatprep.subr.mxu0 0.0
    %3723 = vmatpush1.msra.mxu0 0.0
    %3724 = vmatprep.subr.mxu0 0.0
    %3725 = vmatpush1.msra.mxu0 0.0
    %3726 = vmatprep.subr.mxu0 0.0
    %3727 = vmatpush1.msra.mxu0 0.0
    %3728 = vmatprep.subr.mxu0 0.0
    %3729 = vmatpush1.msra.mxu0 0.0
    %3730 = vmatprep.subr.mxu0 0.0
    %3731 = vmatpush1.msra.mxu0 0.0
    %3732 = vmatprep.subr.mxu0 0.0
    %3733 = vmatpush1.msra.mxu0 0.0
    %3734 = vmatprep.mubr.f32.mxu0 0.0
    %v3735 = vand.u32 %v3370, 4294901760
    %v3736 = vsub.f32 %v3370, %v3735
    %3737 = vmatmul.mubr.f32.gmra.mrb[0].mxu0 %v3736
    %v3738 = vpop.f32.mrb[0].mxu0
    %v3739 = vadd.f32 %v3635, %v3738
    %v3740 = vpop.f32.mrb[0].mxu0
    %3741 = vdwg.mxu0
    %3742 = vmatprep.subr.mxu0 0.0
    %v3743 = vand.u32 %v3372, 4294901760
    %3744 = vmatpush1.msra.mxu0 %v3743
    %3745 = vmatprep.subr.mxu0 0.0
    %v3746 = vand.u32 %v3373, 4294901760
    %3747 = vmatpush1.msra.mxu0 %v3746
    %3748 = vmatprep.subr.mxu0 0.0
    %v3749 = vand.u32 %v3374, 4294901760
    %3750 = vmatpush1.msra.mxu0 %v3749
    %3751 = vmatprep.subr.mxu0 0.0
    %v3752 = vand.u32 %v3375, 4294901760
    %3753 = vmatpush1.msra.mxu0 %v3752
    %3754 = vmatprep.subr.mxu0 0.0
    %v3755 = vand.u32 %v3376, 4294901760
    %3756 = vmatpush1.msra.mxu0 %v3755
    %3757 = vmatprep.subr.mxu0 0.0
    %v3758 = vand.u32 %v3377, 4294901760
    %3759 = vmatpush1.msra.mxu0 %v3758
    %3760 = vmatprep.subr.mxu0 0.0
    %v3761 = vand.u32 %v3378, 4294901760
    %3762 = vmatpush1.msra.mxu0 %v3761
    %3763 = vmatprep.subr.mxu0 0.0
    %v3764 = vand.u32 %v3379, 4294901760
    %3765 = vmatpush1.msra.mxu0 %v3764
    %3766 = vmatprep.subr.mxu0 0.0
    %v3767 = vand.u32 %v3380, 4294901760
    %3768 = vmatpush1.msra.mxu0 %v3767
    %3769 = vmatprep.subr.mxu0 0.0
    %v3770 = vand.u32 %v3381, 4294901760
    %3771 = vmatpush1.msra.mxu0 %v3770
    %3772 = vmatprep.subr.mxu0 0.0
    %v3773 = vand.u32 %v3382, 4294901760
    %3774 = vmatpush1.msra.mxu0 %v3773
    %3775 = vmatprep.subr.mxu0 0.0
    %v3776 = vand.u32 %v3383, 4294901760
    %3777 = vmatpush1.msra.mxu0 %v3776
    %3778 = vmatprep.subr.mxu0 0.0
    %v3779 = vand.u32 %v3384, 4294901760
    %3780 = vmatpush1.msra.mxu0 %v3779
    %3781 = vmatprep.subr.mxu0 0.0
    %v3782 = vand.u32 %v3385, 4294901760
    %3783 = vmatpush1.msra.mxu0 %v3782
    %3784 = vmatprep.subr.mxu0 0.0
    %v3785 = vand.u32 %v3386, 4294901760
    %3786 = vmatpush1.msra.mxu0 %v3785
    %3787 = vmatprep.subr.mxu0 0.0
    %v3788 = vand.u32 %v3387, 4294901760
    %3789 = vmatpush1.msra.mxu0 %v3788
    %3790 = vmatprep.subr.mxu0 0.0
    %3791 = vmatpush1.msra.mxu0 0.0
    %3792 = vmatprep.subr.mxu0 0.0
    %3793 = vmatpush1.msra.mxu0 0.0
    %3794 = vmatprep.subr.mxu0 0.0
    %3795 = vmatpush1.msra.mxu0 0.0
    %3796 = vmatprep.subr.mxu0 0.0
    %3797 = vmatpush1.msra.mxu0 0.0
    %3798 = vmatprep.subr.mxu0 0.0
    %3799 = vmatpush1.msra.mxu0 0.0
    %3800 = vmatprep.subr.mxu0 0.0
    %3801 = vmatpush1.msra.mxu0 0.0
    %3802 = vmatprep.subr.mxu0 0.0
    %3803 = vmatpush1.msra.mxu0 0.0
    %3804 = vmatprep.subr.mxu0 0.0
    %3805 = vmatpush1.msra.mxu0 0.0
    %3806 = vmatprep.subr.mxu0 0.0
    %3807 = vmatpush1.msra.mxu0 0.0
    %3808 = vmatprep.subr.mxu0 0.0
    %3809 = vmatpush1.msra.mxu0 0.0
    %3810 = vmatprep.subr.mxu0 0.0
    %3811 = vmatpush1.msra.mxu0 0.0
    %3812 = vmatprep.subr.mxu0 0.0
    %3813 = vmatpush1.msra.mxu0 0.0
    %3814 = vmatprep.subr.mxu0 0.0
    %3815 = vmatpush1.msra.mxu0 0.0
    %3816 = vmatprep.subr.mxu0 0.0
    %3817 = vmatpush1.msra.mxu0 0.0
    %3818 = vmatprep.subr.mxu0 0.0
    %3819 = vmatpush1.msra.mxu0 0.0
    %3820 = vmatprep.subr.mxu0 0.0
    %3821 = vmatpush1.msra.mxu0 0.0
    %3822 = vmatprep.mubr.f32.mxu0 0.0
    %v3823 = vand.u32 %v3370, 4294901760
    %v3824 = vsub.f32 %v3370, %v3823
    %v3825 = vand.u32 %v3824, 4294901760
    %3826 = vmatmul.mubr.f32.gmra.mrb[0].mxu0 %v3825
    %v3827 = vpop.f32.mrb[0].mxu0
    %v3828 = vadd.f32 %v3739, %v3827
    %v3829 = vpop.f32.mrb[0].mxu0
    %3830 = vdwg.mxu0
    %3831 = vmatprep.subr.mxu0 0.0
    %v3832 = vand.u32 %v3372, 4294901760
    %v3833 = vsub.f32 %v3372, %v3832
    %v3834 = vand.u32 %v3833, 4294901760
    %3835 = vmatpush1.msra.mxu0 %v3834
    %3836 = vmatprep.subr.mxu0 0.0
    %v3837 = vand.u32 %v3373, 4294901760
    %v3838 = vsub.f32 %v3373, %v3837
    %v3839 = vand.u32 %v3838, 4294901760
    %3840 = vmatpush1.msra.mxu0 %v3839
    %3841 = vmatprep.subr.mxu0 0.0
    %v3842 = vand.u32 %v3374, 4294901760
    %v3843 = vsub.f32 %v3374, %v3842
    %v3844 = vand.u32 %v3843, 4294901760
    %3845 = vmatpush1.msra.mxu0 %v3844
    %3846 = vmatprep.subr.mxu0 0.0
    %v3847 = vand.u32 %v3375, 4294901760
    %v3848 = vsub.f32 %v3375, %v3847
    %v3849 = vand.u32 %v3848, 4294901760
    %3850 = vmatpush1.msra.mxu0 %v3849
    %3851 = vmatprep.subr.mxu0 0.0
    %v3852 = vand.u32 %v3376, 4294901760
    %v3853 = vsub.f32 %v3376, %v3852
    %v3854 = vand.u32 %v3853, 4294901760
    %3855 = vmatpush1.msra.mxu0 %v3854
    %3856 = vmatprep.subr.mxu0 0.0
    %v3857 = vand.u32 %v3377, 4294901760
    %v3858 = vsub.f32 %v3377, %v3857
    %v3859 = vand.u32 %v3858, 4294901760
    %3860 = vmatpush1.msra.mxu0 %v3859
    %3861 = vmatprep.subr.mxu0 0.0
    %v3862 = vand.u32 %v3378, 4294901760
    %v3863 = vsub.f32 %v3378, %v3862
    %v3864 = vand.u32 %v3863, 4294901760
    %3865 = vmatpush1.msra.mxu0 %v3864
    %3866 = vmatprep.subr.mxu0 0.0
    %v3867 = vand.u32 %v3379, 4294901760
    %v3868 = vsub.f32 %v3379, %v3867
    %v3869 = vand.u32 %v3868, 4294901760
    %3870 = vmatpush1.msra.mxu0 %v3869
    %3871 = vmatprep.subr.mxu0 0.0
    %v3872 = vand.u32 %v3380, 4294901760
    %v3873 = vsub.f32 %v3380, %v3872
    %v3874 = vand.u32 %v3873, 4294901760
    %3875 = vmatpush1.msra.mxu0 %v3874
    %3876 = vmatprep.subr.mxu0 0.0
    %v3877 = vand.u32 %v3381, 4294901760
    %v3878 = vsub.f32 %v3381, %v3877
    %v3879 = vand.u32 %v3878, 4294901760
    %3880 = vmatpush1.msra.mxu0 %v3879
    %3881 = vmatprep.subr.mxu0 0.0
    %v3882 = vand.u32 %v3382, 4294901760
    %v3883 = vsub.f32 %v3382, %v3882
    %v3884 = vand.u32 %v3883, 4294901760
    %3885 = vmatpush1.msra.mxu0 %v3884
    %3886 = vmatprep.subr.mxu0 0.0
    %v3887 = vand.u32 %v3383, 4294901760
    %v3888 = vsub.f32 %v3383, %v3887
    %v3889 = vand.u32 %v3888, 4294901760
    %3890 = vmatpush1.msra.mxu0 %v3889
    %3891 = vmatprep.subr.mxu0 0.0
    %v3892 = vand.u32 %v3384, 4294901760
    %v3893 = vsub.f32 %v3384, %v3892
    %v3894 = vand.u32 %v3893, 4294901760
    %3895 = vmatpush1.msra.mxu0 %v3894
    %3896 = vmatprep.subr.mxu0 0.0
    %v3897 = vand.u32 %v3385, 4294901760
    %v3898 = vsub.f32 %v3385, %v3897
    %v3899 = vand.u32 %v3898, 4294901760
    %3900 = vmatpush1.msra.mxu0 %v3899
    %3901 = vmatprep.subr.mxu0 0.0
    %v3902 = vand.u32 %v3386, 4294901760
    %v3903 = vsub.f32 %v3386, %v3902
    %v3904 = vand.u32 %v3903, 4294901760
    %3905 = vmatpush1.msra.mxu0 %v3904
    %3906 = vmatprep.subr.mxu0 0.0
    %v3907 = vand.u32 %v3387, 4294901760
    %v3908 = vsub.f32 %v3387, %v3907
    %v3909 = vand.u32 %v3908, 4294901760
    %3910 = vmatpush1.msra.mxu0 %v3909
    %3911 = vmatprep.subr.mxu0 0.0
    %3912 = vmatpush1.msra.mxu0 0.0
    %3913 = vmatprep.subr.mxu0 0.0
    %3914 = vmatpush1.msra.mxu0 0.0
    %3915 = vmatprep.subr.mxu0 0.0
    %3916 = vmatpush1.msra.mxu0 0.0
    %3917 = vmatprep.subr.mxu0 0.0
    %3918 = vmatpush1.msra.mxu0 0.0
    %3919 = vmatprep.subr.mxu0 0.0
    %3920 = vmatpush1.msra.mxu0 0.0
    %3921 = vmatprep.subr.mxu0 0.0
    %3922 = vmatpush1.msra.mxu0 0.0
    %3923 = vmatprep.subr.mxu0 0.0
    %3924 = vmatpush1.msra.mxu0 0.0
    %3925 = vmatprep.subr.mxu0 0.0
    %3926 = vmatpush1.msra.mxu0 0.0
    %3927 = vmatprep.subr.mxu0 0.0
    %3928 = vmatpush1.msra.mxu0 0.0
    %3929 = vmatprep.subr.mxu0 0.0
    %3930 = vmatpush1.msra.mxu0 0.0
    %3931 = vmatprep.subr.mxu0 0.0
    %3932 = vmatpush1.msra.mxu0 0.0
    %3933 = vmatprep.subr.mxu0 0.0
    %3934 = vmatpush1.msra.mxu0 0.0
    %3935 = vmatprep.subr.mxu0 0.0
    %3936 = vmatpush1.msra.mxu0 0.0
    %3937 = vmatprep.subr.mxu0 0.0
    %3938 = vmatpush1.msra.mxu0 0.0
    %3939 = vmatprep.subr.mxu0 0.0
    %3940 = vmatpush1.msra.mxu0 0.0
    %3941 = vmatprep.subr.mxu0 0.0
    %3942 = vmatpush1.msra.mxu0 0.0
    %3943 = vmatprep.mubr.f32.mxu0 0.0
    %v3944 = vand.u32 %v3370, 4294901760
    %3945 = vmatmul.mubr.f32.gmra.mrb[0].mxu0 %v3944
    %v3946 = vpop.f32.mrb[0].mxu0
    %v3947 = vadd.f32 %v3828, %v3946
    %v3948 = vpop.f32.mrb[0].mxu0
    %3949 = vdwg.mxu0
    %3950 = vmatprep.subr.mxu0 0.0
    %v3951 = vand.u32 %v3372, 4294901760
    %3952 = vmatpush1.msra.mxu0 %v3951
    %3953 = vmatprep.subr.mxu0 0.0
    %v3954 = vand.u32 %v3373, 4294901760
    %3955 = vmatpush1.msra.mxu0 %v3954
    %3956 = vmatprep.subr.mxu0 0.0
    %v3957 = vand.u32 %v3374, 4294901760
    %3958 = vmatpush1.msra.mxu0 %v3957
    %3959 = vmatprep.subr.mxu0 0.0
    %v3960 = vand.u32 %v3375, 4294901760
    %3961 = vmatpush1.msra.mxu0 %v3960
    %3962 = vmatprep.subr.mxu0 0.0
    %v3963 = vand.u32 %v3376, 4294901760
    %3964 = vmatpush1.msra.mxu0 %v3963
    %3965 = vmatprep.subr.mxu0 0.0
    %v3966 = vand.u32 %v3377, 4294901760
    %3967 = vmatpush1.msra.mxu0 %v3966
    %3968 = vmatprep.subr.mxu0 0.0
    %v3969 = vand.u32 %v3378, 4294901760
    %3970 = vmatpush1.msra.mxu0 %v3969
    %3971 = vmatprep.subr.mxu0 0.0
    %v3972 = vand.u32 %v3379, 4294901760
    %3973 = vmatpush1.msra.mxu0 %v3972
    %3974 = vmatprep.subr.mxu0 0.0
    %v3975 = vand.u32 %v3380, 4294901760
    %3976 = vmatpush1.msra.mxu0 %v3975
    %3977 = vmatprep.subr.mxu0 0.0
    %v3978 = vand.u32 %v3381, 4294901760
    %3979 = vmatpush1.msra.mxu0 %v3978
    %3980 = vmatprep.subr.mxu0 0.0
    %v3981 = vand.u32 %v3382, 4294901760
    %3982 = vmatpush1.msra.mxu0 %v3981
    %3983 = vmatprep.subr.mxu0 0.0
    %v3984 = vand.u32 %v3383, 4294901760
    %3985 = vmatpush1.msra.mxu0 %v3984
    %3986 = vmatprep.subr.mxu0 0.0
    %v3987 = vand.u32 %v3384, 4294901760
    %3988 = vmatpush1.msra.mxu0 %v3987
    %3989 = vmatprep.subr.mxu0 0.0
    %v3990 = vand.u32 %v3385, 4294901760
    %3991 = vmatpush1.msra.mxu0 %v3990
    %3992 = vmatprep.subr.mxu0 0.0
    %v3993 = vand.u32 %v3386, 4294901760
    %3994 = vmatpush1.msra.mxu0 %v3993
    %3995 = vmatprep.subr.mxu0 0.0
    %v3996 = vand.u32 %v3387, 4294901760
    %3997 = vmatpush1.msra.mxu0 %v3996
    %3998 = vmatprep.subr.mxu0 0.0
    %3999 = vmatpush1.msra.mxu0 0.0
    %4000 = vmatprep.subr.mxu0 0.0
    %4001 = vmatpush1.msra.mxu0 0.0
    %4002 = vmatprep.subr.mxu0 0.0
    %4003 = vmatpush1.msra.mxu0 0.0
    %4004 = vmatprep.subr.mxu0 0.0
    %4005 = vmatpush1.msra.mxu0 0.0
    %4006 = vmatprep.subr.mxu0 0.0
    %4007 = vmatpush1.msra.mxu0 0.0
    %4008 = vmatprep.subr.mxu0 0.0
    %4009 = vmatpush1.msra.mxu0 0.0
    %4010 = vmatprep.subr.mxu0 0.0
    %4011 = vmatpush1.msra.mxu0 0.0
    %4012 = vmatprep.subr.mxu0 0.0
    %4013 = vmatpush1.msra.mxu0 0.0
    %4014 = vmatprep.subr.mxu0 0.0
    %4015 = vmatpush1.msra.mxu0 0.0
    %4016 = vmatprep.subr.mxu0 0.0
    %4017 = vmatpush1.msra.mxu0 0.0
    %4018 = vmatprep.subr.mxu0 0.0
    %4019 = vmatpush1.msra.mxu0 0.0
    %4020 = vmatprep.subr.mxu0 0.0
    %4021 = vmatpush1.msra.mxu0 0.0
    %4022 = vmatprep.subr.mxu0 0.0
    %4023 = vmatpush1.msra.mxu0 0.0
    %4024 = vmatprep.subr.mxu0 0.0
    %4025 = vmatpush1.msra.mxu0 0.0
    %4026 = vmatprep.subr.mxu0 0.0
    %4027 = vmatpush1.msra.mxu0 0.0
    %4028 = vmatprep.subr.mxu0 0.0
    %4029 = vmatpush1.msra.mxu0 0.0
    %4030 = vmatprep.mubr.f32.mxu0 0.0
    %v4031 = vand.u32 %v3370, 4294901760
    %4032 = vmatmul.mubr.f32.gmra.mrb[0].mxu0 %v4031
    %v4033 = vpop.f32.mrb[0].mxu0
    %v4034 = vadd.f32 %v3947, %v4033
    %v4035 = vpop.f32.mrb[0].mxu0
    %4036 = vdwg.mxu0
    %v4037 = vtanh.pop %v4034
    %v4038 = vadd.f32 %v3370, %v4037
    %s4039 = scalar_lea.vmem [#allocation2], 768
    %v4040 = vld [vmem:[%s4039] sm:$0xff]
    %v4041 = vld [vmem:[%s4039 + $0x8] sm:$0xff]
    %v4042 = vld [vmem:[%s4039 + $0x10] sm:$0xff]
    %v4043 = vld [vmem:[%s4039 + $0x18] sm:$0xff]
    %v4044 = vld [vmem:[%s4039 + $0x20] sm:$0xff]
    %v4045 = vld [vmem:[%s4039 + $0x28] sm:$0xff]
    %v4046 = vld [vmem:[%s4039 + $0x30] sm:$0xff]
    %v4047 = vld [vmem:[%s4039 + $0x38] sm:$0xff]
    %v4048 = vld [vmem:[%s4039 + $0x40] sm:$0xff]
    %v4049 = vld [vmem:[%s4039 + $0x48] sm:$0xff]
    %v4050 = vld [vmem:[%s4039 + $0x50] sm:$0xff]
    %v4051 = vld [vmem:[%s4039 + $0x58] sm:$0xff]
    %v4052 = vld [vmem:[%s4039 + $0x60] sm:$0xff]
    %v4053 = vld [vmem:[%s4039 + $0x68] sm:$0xff]
    %v4054 = vld [vmem:[%s4039 + $0x70] sm:$0xff]
    %v4055 = vld [vmem:[%s4039 + $0x78] sm:$0xff]
    %s4056 = scalar_lea.vmem %s2, 6
    %v4057 = vld [vmem:[%s4056] sm:$0x1]
    %v4059 = vlaneseq
    %v4060 = vshrl.u32 %v4059, 7
    %v4061 = vsub.s32 0, %v4060
    %v4062 = vrot.slane %v4057, %v4061
    %4064 = vmatprep.subr.mxu0 0.0
    %v4065 = vand.u32 %v4040, 4294901760
    %4066 = vmatpush1.msra.mxu0 %v4065
    %4067 = vmatprep.subr.mxu0 0.0
    %v4068 = vand.u32 %v4041, 4294901760
    %4069 = vmatpush1.msra.mxu0 %v4068
    %4070 = vmatprep.subr.mxu0 0.0
    %v4071 = vand.u32 %v4042, 4294901760
    %4072 = vmatpush1.msra.mxu0 %v4071
    %4073 = vmatprep.subr.mxu0 0.0
    %v4074 = vand.u32 %v4043, 4294901760
    %4075 = vmatpush1.msra.mxu0 %v4074
    %4076 = vmatprep.subr.mxu0 0.0
    %v4077 = vand.u32 %v4044, 4294901760
    %4078 = vmatpush1.msra.mxu0 %v4077
    %4079 = vmatprep.subr.mxu0 0.0
    %v4080 = vand.u32 %v4045, 4294901760
    %4081 = vmatpush1.msra.mxu0 %v4080
    %4082 = vmatprep.subr.mxu0 0.0
    %v4083 = vand.u32 %v4046, 4294901760
    %4084 = vmatpush1.msra.mxu0 %v4083
    %4085 = vmatprep.subr.mxu0 0.0
    %v4086 = vand.u32 %v4047, 4294901760
    %4087 = vmatpush1.msra.mxu0 %v4086
    %4088 = vmatprep.subr.mxu0 0.0
    %v4089 = vand.u32 %v4048, 4294901760
    %4090 = vmatpush1.msra.mxu0 %v4089
    %4091 = vmatprep.subr.mxu0 0.0
    %v4092 = vand.u32 %v4049, 4294901760
    %4093 = vmatpush1.msra.mxu0 %v4092
    %4094 = vmatprep.subr.mxu0 0.0
    %v4095 = vand.u32 %v4050, 4294901760
    %4096 = vmatpush1.msra.mxu0 %v4095
    %4097 = vmatprep.subr.mxu0 0.0
    %v4098 = vand.u32 %v4051, 4294901760
    %4099 = vmatpush1.msra.mxu0 %v4098
    %4100 = vmatprep.subr.mxu0 0.0
    %v4101 = vand.u32 %v4052, 4294901760
    %4102 = vmatpush1.msra.mxu0 %v4101
    %4103 = vmatprep.subr.mxu0 0.0
    %v4104 = vand.u32 %v4053, 4294901760
    %4105 = vmatpush1.msra.mxu0 %v4104
    %4106 = vmatprep.subr.mxu0 0.0
    %v4107 = vand.u32 %v4054, 4294901760
    %4108 = vmatpush1.msra.mxu0 %v4107
    %4109 = vmatprep.subr.mxu0 0.0
    %v4110 = vand.u32 %v4055, 4294901760
    %4111 = vmatpush1.msra.mxu0 %v4110
    %4112 = vmatprep.subr.mxu0 0.0
    %4113 = vmatpush1.msra.mxu0 0.0
    %4114 = vmatprep.subr.mxu0 0.0
    %4115 = vmatpush1.msra.mxu0 0.0
    %4116 = vmatprep.subr.mxu0 0.0
    %4117 = vmatpush1.msra.mxu0 0.0
    %4118 = vmatprep.subr.mxu0 0.0
    %4119 = vmatpush1.msra.mxu0 0.0
    %4120 = vmatprep.subr.mxu0 0.0
    %4121 = vmatpush1.msra.mxu0 0.0
    %4122 = vmatprep.subr.mxu0 0.0
    %4123 = vmatpush1.msra.mxu0 0.0
    %4124 = vmatprep.subr.mxu0 0.0
    %4125 = vmatpush1.msra.mxu0 0.0
    %4126 = vmatprep.subr.mxu0 0.0
    %4127 = vmatpush1.msra.mxu0 0.0
    %4128 = vmatprep.subr.mxu0 0.0
    %4129 = vmatpush1.msra.mxu0 0.0
    %4130 = vmatprep.subr.mxu0 0.0
    %4131 = vmatpush1.msra.mxu0 0.0
    %4132 = vmatprep.subr.mxu0 0.0
    %4133 = vmatpush1.msra.mxu0 0.0
    %4134 = vmatprep.subr.mxu0 0.0
    %4135 = vmatpush1.msra.mxu0 0.0
    %4136 = vmatprep.subr.mxu0 0.0
    %4137 = vmatpush1.msra.mxu0 0.0
    %4138 = vmatprep.subr.mxu0 0.0
    %4139 = vmatpush1.msra.mxu0 0.0
    %4140 = vmatprep.subr.mxu0 0.0
    %4141 = vmatpush1.msra.mxu0 0.0
    %4142 = vmatprep.subr.mxu0 0.0
    %4143 = vmatpush1.msra.mxu0 0.0
    %4144 = vmatprep.mubr.f32.mxu0 0.0
    %v4145 = vand.u32 %v4038, 4294901760
    %v4146 = vsub.f32 %v4038, %v4145
    %v4147 = vand.u32 %v4146, 4294901760
    %v4148 = vsub.f32 %v4146, %v4147
    %v4149 = vand.u32 %v4148, 4294901760
    %4150 = vmatmul.mubr.f32.gmra.mrb[0].mxu0 %v4149
    %v4151 = vpop.f32.mrb[0].mxu0
    %v4152 = vadd.f32 %v4062, %v4151
    %v4153 = vpop.f32.mrb[0].mxu0
    %4154 = vdwg.mxu0
    %4155 = vmatprep.subr.mxu0 0.0
    %v4156 = vand.u32 %v4040, 4294901760
    %v4157 = vsub.f32 %v4040, %v4156
    %v4158 = vand.u32 %v4157, 4294901760
    %v4159 = vsub.f32 %v4157, %v4158
    %v4160 = vand.u32 %v4159, 4294901760
    %4161 = vmatpush1.msra.mxu0 %v4160
    %4162 = vmatprep.subr.mxu0 0.0
    %v4163 = vand.u32 %v4041, 4294901760
    %v4164 = vsub.f32 %v4041, %v4163
    %v4165 = vand.u32 %v4164, 4294901760
    %v4166 = vsub.f32 %v4164, %v4165
    %v4167 = vand.u32 %v4166, 4294901760
    %4168 = vmatpush1.msra.mxu0 %v4167
    %4169 = vmatprep.subr.mxu0 0.0
    %v4170 = vand.u32 %v4042, 4294901760
    %v4171 = vsub.f32 %v4042, %v4170
    %v4172 = vand.u32 %v4171, 4294901760
    %v4173 = vsub.f32 %v4171, %v4172
    %v4174 = vand.u32 %v4173, 4294901760
    %4175 = vmatpush1.msra.mxu0 %v4174
    %4176 = vmatprep.subr.mxu0 0.0
    %v4177 = vand.u32 %v4043, 4294901760
    %v4178 = vsub.f32 %v4043, %v4177
    %v4179 = vand.u32 %v4178, 4294901760
    %v4180 = vsub.f32 %v4178, %v4179
    %v4181 = vand.u32 %v4180, 4294901760
    %4182 = vmatpush1.msra.mxu0 %v4181
    %4183 = vmatprep.subr.mxu0 0.0
    %v4184 = vand.u32 %v4044, 4294901760
    %v4185 = vsub.f32 %v4044, %v4184
    %v4186 = vand.u32 %v4185, 4294901760
    %v4187 = vsub.f32 %v4185, %v4186
    %v4188 = vand.u32 %v4187, 4294901760
    %4189 = vmatpush1.msra.mxu0 %v4188
    %4190 = vmatprep.subr.mxu0 0.0
    %v4191 = vand.u32 %v4045, 4294901760
    %v4192 = vsub.f32 %v4045, %v4191
    %v4193 = vand.u32 %v4192, 4294901760
    %v4194 = vsub.f32 %v4192, %v4193
    %v4195 = vand.u32 %v4194, 4294901760
    %4196 = vmatpush1.msra.mxu0 %v4195
    %4197 = vmatprep.subr.mxu0 0.0
    %v4198 = vand.u32 %v4046, 4294901760
    %v4199 = vsub.f32 %v4046, %v4198
    %v4200 = vand.u32 %v4199, 4294901760
    %v4201 = vsub.f32 %v4199, %v4200
    %v4202 = vand.u32 %v4201, 4294901760
    %4203 = vmatpush1.msra.mxu0 %v4202
    %4204 = vmatprep.subr.mxu0 0.0
    %v4205 = vand.u32 %v4047, 4294901760
    %v4206 = vsub.f32 %v4047, %v4205
    %v4207 = vand.u32 %v4206, 4294901760
    %v4208 = vsub.f32 %v4206, %v4207
    %v4209 = vand.u32 %v4208, 4294901760
    %4210 = vmatpush1.msra.mxu0 %v4209
    %4211 = vmatprep.subr.mxu0 0.0
    %v4212 = vand.u32 %v4048, 4294901760
    %v4213 = vsub.f32 %v4048, %v4212
    %v4214 = vand.u32 %v4213, 4294901760
    %v4215 = vsub.f32 %v4213, %v4214
    %v4216 = vand.u32 %v4215, 4294901760
    %4217 = vmatpush1.msra.mxu0 %v4216
    %4218 = vmatprep.subr.mxu0 0.0
    %v4219 = vand.u32 %v4049, 4294901760
    %v4220 = vsub.f32 %v4049, %v4219
    %v4221 = vand.u32 %v4220, 4294901760
    %v4222 = vsub.f32 %v4220, %v4221
    %v4223 = vand.u32 %v4222, 4294901760
    %4224 = vmatpush1.msra.mxu0 %v4223
    %4225 = vmatprep.subr.mxu0 0.0
    %v4226 = vand.u32 %v4050, 4294901760
    %v4227 = vsub.f32 %v4050, %v4226
    %v4228 = vand.u32 %v4227, 4294901760
    %v4229 = vsub.f32 %v4227, %v4228
    %v4230 = vand.u32 %v4229, 4294901760
    %4231 = vmatpush1.msra.mxu0 %v4230
    %4232 = vmatprep.subr.mxu0 0.0
    %v4233 = vand.u32 %v4051, 4294901760
    %v4234 = vsub.f32 %v4051, %v4233
    %v4235 = vand.u32 %v4234, 4294901760
    %v4236 = vsub.f32 %v4234, %v4235
    %v4237 = vand.u32 %v4236, 4294901760
    %4238 = vmatpush1.msra.mxu0 %v4237
    %4239 = vmatprep.subr.mxu0 0.0
    %v4240 = vand.u32 %v4052, 4294901760
    %v4241 = vsub.f32 %v4052, %v4240
    %v4242 = vand.u32 %v4241, 4294901760
    %v4243 = vsub.f32 %v4241, %v4242
    %v4244 = vand.u32 %v4243, 4294901760
    %4245 = vmatpush1.msra.mxu0 %v4244
    %4246 = vmatprep.subr.mxu0 0.0
    %v4247 = vand.u32 %v4053, 4294901760
    %v4248 = vsub.f32 %v4053, %v4247
    %v4249 = vand.u32 %v4248, 4294901760
    %v4250 = vsub.f32 %v4248, %v4249
    %v4251 = vand.u32 %v4250, 4294901760
    %4252 = vmatpush1.msra.mxu0 %v4251
    %4253 = vmatprep.subr.mxu0 0.0
    %v4254 = vand.u32 %v4054, 4294901760
    %v4255 = vsub.f32 %v4054, %v4254
    %v4256 = vand.u32 %v4255, 4294901760
    %v4257 = vsub.f32 %v4255, %v4256
    %v4258 = vand.u32 %v4257, 4294901760
    %4259 = vmatpush1.msra.mxu0 %v4258
    %4260 = vmatprep.subr.mxu0 0.0
    %v4261 = vand.u32 %v4055, 4294901760
    %v4262 = vsub.f32 %v4055, %v4261
    %v4263 = vand.u32 %v4262, 4294901760
    %v4264 = vsub.f32 %v4262, %v4263
    %v4265 = vand.u32 %v4264, 4294901760
    %4266 = vmatpush1.msra.mxu0 %v4265
    %4267 = vmatprep.subr.mxu0 0.0
    %4268 = vmatpush1.msra.mxu0 0.0
    %4269 = vmatprep.subr.mxu0 0.0
    %4270 = vmatpush1.msra.mxu0 0.0
    %4271 = vmatprep.subr.mxu0 0.0
    %4272 = vmatpush1.msra.mxu0 0.0
    %4273 = vmatprep.subr.mxu0 0.0
    %4274 = vmatpush1.msra.mxu0 0.0
    %4275 = vmatprep.subr.mxu0 0.0
    %4276 = vmatpush1.msra.mxu0 0.0
    %4277 = vmatprep.subr.mxu0 0.0
    %4278 = vmatpush1.msra.mxu0 0.0
    %4279 = vmatprep.subr.mxu0 0.0
    %4280 = vmatpush1.msra.mxu0 0.0
    %4281 = vmatprep.subr.mxu0 0.0
    %4282 = vmatpush1.msra.mxu0 0.0
    %4283 = vmatprep.subr.mxu0 0.0
    %4284 = vmatpush1.msra.mxu0 0.0
    %4285 = vmatprep.subr.mxu0 0.0
    %4286 = vmatpush1.msra.mxu0 0.0
    %4287 = vmatprep.subr.mxu0 0.0
    %4288 = vmatpush1.msra.mxu0 0.0
    %4289 = vmatprep.subr.mxu0 0.0
    %4290 = vmatpush1.msra.mxu0 0.0
    %4291 = vmatprep.subr.mxu0 0.0
    %4292 = vmatpush1.msra.mxu0 0.0
    %4293 = vmatprep.subr.mxu0 0.0
    %4294 = vmatpush1.msra.mxu0 0.0
    %4295 = vmatprep.subr.mxu0 0.0
    %4296 = vmatpush1.msra.mxu0 0.0
    %4297 = vmatprep.subr.mxu0 0.0
    %4298 = vmatpush1.msra.mxu0 0.0
    %4299 = vmatprep.mubr.f32.mxu0 0.0
    %v4300 = vand.u32 %v4038, 4294901760
    %4301 = vmatmul.mubr.f32.gmra.mrb[0].mxu0 %v4300
    %v4302 = vpop.f32.mrb[0].mxu0
    %v4303 = vadd.f32 %v4152, %v4302
    %v4304 = vpop.f32.mrb[0].mxu0
    %4305 = vdwg.mxu0
    %4306 = vmatprep.subr.mxu0 0.0
    %v4307 = vand.u32 %v4040, 4294901760
    %v4308 = vsub.f32 %v4040, %v4307
    %4309 = vmatpush1.msra.mxu0 %v4308
    %4310 = vmatprep.subr.mxu0 0.0
    %v4311 = vand.u32 %v4041, 4294901760
    %v4312 = vsub.f32 %v4041, %v4311
    %4313 = vmatpush1.msra.mxu0 %v4312
    %4314 = vmatprep.subr.mxu0 0.0
    %v4315 = vand.u32 %v4042, 4294901760
    %v4316 = vsub.f32 %v4042, %v4315
    %4317 = vmatpush1.msra.mxu0 %v4316
    %4318 = vmatprep.subr.mxu0 0.0
    %v4319 = vand.u32 %v4043, 4294901760
    %v4320 = vsub.f32 %v4043, %v4319
    %4321 = vmatpush1.msra.mxu0 %v4320
    %4322 = vmatprep.subr.mxu0 0.0
    %v4323 = vand.u32 %v4044, 4294901760
    %v4324 = vsub.f32 %v4044, %v4323
    %4325 = vmatpush1.msra.mxu0 %v4324
    %4326 = vmatprep.subr.mxu0 0.0
    %v4327 = vand.u32 %v4045, 4294901760
    %v4328 = vsub.f32 %v4045, %v4327
    %4329 = vmatpush1.msra.mxu0 %v4328
    %4330 = vmatprep.subr.mxu0 0.0
    %v4331 = vand.u32 %v4046, 4294901760
    %v4332 = vsub.f32 %v4046, %v4331
    %4333 = vmatpush1.msra.mxu0 %v4332
    %4334 = vmatprep.subr.mxu0 0.0
    %v4335 = vand.u32 %v4047, 4294901760
    %v4336 = vsub.f32 %v4047, %v4335
    %4337 = vmatpush1.msra.mxu0 %v4336
    %4338 = vmatprep.subr.mxu0 0.0
    %v4339 = vand.u32 %v4048, 4294901760
    %v4340 = vsub.f32 %v4048, %v4339
    %4341 = vmatpush1.msra.mxu0 %v4340
    %4342 = vmatprep.subr.mxu0 0.0
    %v4343 = vand.u32 %v4049, 4294901760
    %v4344 = vsub.f32 %v4049, %v4343
    %4345 = vmatpush1.msra.mxu0 %v4344
    %4346 = vmatprep.subr.mxu0 0.0
    %v4347 = vand.u32 %v4050, 4294901760
    %v4348 = vsub.f32 %v4050, %v4347
    %4349 = vmatpush1.msra.mxu0 %v4348
    %4350 = vmatprep.subr.mxu0 0.0
    %v4351 = vand.u32 %v4051, 4294901760
    %v4352 = vsub.f32 %v4051, %v4351
    %4353 = vmatpush1.msra.mxu0 %v4352
    %4354 = vmatprep.subr.mxu0 0.0
    %v4355 = vand.u32 %v4052, 4294901760
    %v4356 = vsub.f32 %v4052, %v4355
    %4357 = vmatpush1.msra.mxu0 %v4356
    %4358 = vmatprep.subr.mxu0 0.0
    %v4359 = vand.u32 %v4053, 4294901760
    %v4360 = vsub.f32 %v4053, %v4359
    %4361 = vmatpush1.msra.mxu0 %v4360
    %4362 = vmatprep.subr.mxu0 0.0
    %v4363 = vand.u32 %v4054, 4294901760
    %v4364 = vsub.f32 %v4054, %v4363
    %4365 = vmatpush1.msra.mxu0 %v4364
    %4366 = vmatprep.subr.mxu0 0.0
    %v4367 = vand.u32 %v4055, 4294901760
    %v4368 = vsub.f32 %v4055, %v4367
    %4369 = vmatpush1.msra.mxu0 %v4368
    %4370 = vmatprep.subr.mxu0 0.0
    %4371 = vmatpush1.msra.mxu0 0.0
    %4372 = vmatprep.subr.mxu0 0.0
    %4373 = vmatpush1.msra.mxu0 0.0
    %4374 = vmatprep.subr.mxu0 0.0
    %4375 = vmatpush1.msra.mxu0 0.0
    %4376 = vmatprep.subr.mxu0 0.0
    %4377 = vmatpush1.msra.mxu0 0.0
    %4378 = vmatprep.subr.mxu0 0.0
    %4379 = vmatpush1.msra.mxu0 0.0
    %4380 = vmatprep.subr.mxu0 0.0
    %4381 = vmatpush1.msra.mxu0 0.0
    %4382 = vmatprep.subr.mxu0 0.0
    %4383 = vmatpush1.msra.mxu0 0.0
    %4384 = vmatprep.subr.mxu0 0.0
    %4385 = vmatpush1.msra.mxu0 0.0
    %4386 = vmatprep.subr.mxu0 0.0
    %4387 = vmatpush1.msra.mxu0 0.0
    %4388 = vmatprep.subr.mxu0 0.0
    %4389 = vmatpush1.msra.mxu0 0.0
    %4390 = vmatprep.subr.mxu0 0.0
    %4391 = vmatpush1.msra.mxu0 0.0
    %4392 = vmatprep.subr.mxu0 0.0
    %4393 = vmatpush1.msra.mxu0 0.0
    %4394 = vmatprep.subr.mxu0 0.0
    %4395 = vmatpush1.msra.mxu0 0.0
    %4396 = vmatprep.subr.mxu0 0.0
    %4397 = vmatpush1.msra.mxu0 0.0
    %4398 = vmatprep.subr.mxu0 0.0
    %4399 = vmatpush1.msra.mxu0 0.0
    %4400 = vmatprep.subr.mxu0 0.0
    %4401 = vmatpush1.msra.mxu0 0.0
    %4402 = vmatprep.mubr.f32.mxu0 0.0
    %v4403 = vand.u32 %v4038, 4294901760
    %v4404 = vsub.f32 %v4038, %v4403
    %4405 = vmatmul.mubr.f32.gmra.mrb[0].mxu0 %v4404
    %v4406 = vpop.f32.mrb[0].mxu0
    %v4407 = vadd.f32 %v4303, %v4406
    %v4408 = vpop.f32.mrb[0].mxu0
    %4409 = vdwg.mxu0
    %4410 = vmatprep.subr.mxu0 0.0
    %v4411 = vand.u32 %v4040, 4294901760
    %4412 = vmatpush1.msra.mxu0 %v4411
    %4413 = vmatprep.subr.mxu0 0.0
    %v4414 = vand.u32 %v4041, 4294901760
    %4415 = vmatpush1.msra.mxu0 %v4414
    %4416 = vmatprep.subr.mxu0 0.0
    %v4417 = vand.u32 %v4042, 4294901760
    %4418 = vmatpush1.msra.mxu0 %v4417
    %4419 = vmatprep.subr.mxu0 0.0
    %v4420 = vand.u32 %v4043, 4294901760
    %4421 = vmatpush1.msra.mxu0 %v4420
    %4422 = vmatprep.subr.mxu0 0.0
    %v4423 = vand.u32 %v4044, 4294901760
    %4424 = vmatpush1.msra.mxu0 %v4423
    %4425 = vmatprep.subr.mxu0 0.0
    %v4426 = vand.u32 %v4045, 4294901760
    %4427 = vmatpush1.msra.mxu0 %v4426
    %4428 = vmatprep.subr.mxu0 0.0
    %v4429 = vand.u32 %v4046, 4294901760
    %4430 = vmatpush1.msra.mxu0 %v4429
    %4431 = vmatprep.subr.mxu0 0.0
    %v4432 = vand.u32 %v4047, 4294901760
    %4433 = vmatpush1.msra.mxu0 %v4432
    %4434 = vmatprep.subr.mxu0 0.0
    %v4435 = vand.u32 %v4048, 4294901760
    %4436 = vmatpush1.msra.mxu0 %v4435
    %4437 = vmatprep.subr.mxu0 0.0
    %v4438 = vand.u32 %v4049, 4294901760
    %4439 = vmatpush1.msra.mxu0 %v4438
    %4440 = vmatprep.subr.mxu0 0.0
    %v4441 = vand.u32 %v4050, 4294901760
    %4442 = vmatpush1.msra.mxu0 %v4441
    %4443 = vmatprep.subr.mxu0 0.0
    %v4444 = vand.u32 %v4051, 4294901760
    %4445 = vmatpush1.msra.mxu0 %v4444
    %4446 = vmatprep.subr.mxu0 0.0
    %v4447 = vand.u32 %v4052, 4294901760
    %4448 = vmatpush1.msra.mxu0 %v4447
    %4449 = vmatprep.subr.mxu0 0.0
    %v4450 = vand.u32 %v4053, 4294901760
    %4451 = vmatpush1.msra.mxu0 %v4450
    %4452 = vmatprep.subr.mxu0 0.0
    %v4453 = vand.u32 %v4054, 4294901760
    %4454 = vmatpush1.msra.mxu0 %v4453
    %4455 = vmatprep.subr.mxu0 0.0
    %v4456 = vand.u32 %v4055, 4294901760
    %4457 = vmatpush1.msra.mxu0 %v4456
    %4458 = vmatprep.subr.mxu0 0.0
    %4459 = vmatpush1.msra.mxu0 0.0
    %4460 = vmatprep.subr.mxu0 0.0
    %4461 = vmatpush1.msra.mxu0 0.0
    %4462 = vmatprep.subr.mxu0 0.0
    %4463 = vmatpush1.msra.mxu0 0.0
    %4464 = vmatprep.subr.mxu0 0.0
    %4465 = vmatpush1.msra.mxu0 0.0
    %4466 = vmatprep.subr.mxu0 0.0
    %4467 = vmatpush1.msra.mxu0 0.0
    %4468 = vmatprep.subr.mxu0 0.0
    %4469 = vmatpush1.msra.mxu0 0.0
    %4470 = vmatprep.subr.mxu0 0.0
    %4471 = vmatpush1.msra.mxu0 0.0
    %4472 = vmatprep.subr.mxu0 0.0
    %4473 = vmatpush1.msra.mxu0 0.0
    %4474 = vmatprep.subr.mxu0 0.0
    %4475 = vmatpush1.msra.mxu0 0.0
    %4476 = vmatprep.subr.mxu0 0.0
    %4477 = vmatpush1.msra.mxu0 0.0
    %4478 = vmatprep.subr.mxu0 0.0
    %4479 = vmatpush1.msra.mxu0 0.0
    %4480 = vmatprep.subr.mxu0 0.0
    %4481 = vmatpush1.msra.mxu0 0.0
    %4482 = vmatprep.subr.mxu0 0.0
    %4483 = vmatpush1.msra.mxu0 0.0
    %4484 = vmatprep.subr.mxu0 0.0
    %4485 = vmatpush1.msra.mxu0 0.0
    %4486 = vmatprep.subr.mxu0 0.0
    %4487 = vmatpush1.msra.mxu0 0.0
    %4488 = vmatprep.subr.mxu0 0.0
    %4489 = vmatpush1.msra.mxu0 0.0
    %4490 = vmatprep.mubr.f32.mxu0 0.0
    %v4491 = vand.u32 %v4038, 4294901760
    %v4492 = vsub.f32 %v4038, %v4491
    %v4493 = vand.u32 %v4492, 4294901760
    %4494 = vmatmul.mubr.f32.gmra.mrb[0].mxu0 %v4493
    %v4495 = vpop.f32.mrb[0].mxu0
    %v4496 = vadd.f32 %v4407, %v4495
    %v4497 = vpop.f32.mrb[0].mxu0
    %4498 = vdwg.mxu0
    %4499 = vmatprep.subr.mxu0 0.0
    %v4500 = vand.u32 %v4040, 4294901760
    %v4501 = vsub.f32 %v4040, %v4500
    %v4502 = vand.u32 %v4501, 4294901760
    %4503 = vmatpush1.msra.mxu0 %v4502
    %4504 = vmatprep.subr.mxu0 0.0
    %v4505 = vand.u32 %v4041, 4294901760
    %v4506 = vsub.f32 %v4041, %v4505
    %v4507 = vand.u32 %v4506, 4294901760
    %4508 = vmatpush1.msra.mxu0 %v4507
    %4509 = vmatprep.subr.mxu0 0.0
    %v4510 = vand.u32 %v4042, 4294901760
    %v4511 = vsub.f32 %v4042, %v4510
    %v4512 = vand.u32 %v4511, 4294901760
    %4513 = vmatpush1.msra.mxu0 %v4512
    %4514 = vmatprep.subr.mxu0 0.0
    %v4515 = vand.u32 %v4043, 4294901760
    %v4516 = vsub.f32 %v4043, %v4515
    %v4517 = vand.u32 %v4516, 4294901760
    %4518 = vmatpush1.msra.mxu0 %v4517
    %4519 = vmatprep.subr.mxu0 0.0
    %v4520 = vand.u32 %v4044, 4294901760
    %v4521 = vsub.f32 %v4044, %v4520
    %v4522 = vand.u32 %v4521, 4294901760
    %4523 = vmatpush1.msra.mxu0 %v4522
    %4524 = vmatprep.subr.mxu0 0.0
    %v4525 = vand.u32 %v4045, 4294901760
    %v4526 = vsub.f32 %v4045, %v4525
    %v4527 = vand.u32 %v4526, 4294901760
    %4528 = vmatpush1.msra.mxu0 %v4527
    %4529 = vmatprep.subr.mxu0 0.0
    %v4530 = vand.u32 %v4046, 4294901760
    %v4531 = vsub.f32 %v4046, %v4530
    %v4532 = vand.u32 %v4531, 4294901760
    %4533 = vmatpush1.msra.mxu0 %v4532
    %4534 = vmatprep.subr.mxu0 0.0
    %v4535 = vand.u32 %v4047, 4294901760
    %v4536 = vsub.f32 %v4047, %v4535
    %v4537 = vand.u32 %v4536, 4294901760
    %4538 = vmatpush1.msra.mxu0 %v4537
    %4539 = vmatprep.subr.mxu0 0.0
    %v4540 = vand.u32 %v4048, 4294901760
    %v4541 = vsub.f32 %v4048, %v4540
    %v4542 = vand.u32 %v4541, 4294901760
    %4543 = vmatpush1.msra.mxu0 %v4542
    %4544 = vmatprep.subr.mxu0 0.0
    %v4545 = vand.u32 %v4049, 4294901760
    %v4546 = vsub.f32 %v4049, %v4545
    %v4547 = vand.u32 %v4546, 4294901760
    %4548 = vmatpush1.msra.mxu0 %v4547
    %4549 = vmatprep.subr.mxu0 0.0
    %v4550 = vand.u32 %v4050, 4294901760
    %v4551 = vsub.f32 %v4050, %v4550
    %v4552 = vand.u32 %v4551, 4294901760
    %4553 = vmatpush1.msra.mxu0 %v4552
    %4554 = vmatprep.subr.mxu0 0.0
    %v4555 = vand.u32 %v4051, 4294901760
    %v4556 = vsub.f32 %v4051, %v4555
    %v4557 = vand.u32 %v4556, 4294901760
    %4558 = vmatpush1.msra.mxu0 %v4557
    %4559 = vmatprep.subr.mxu0 0.0
    %v4560 = vand.u32 %v4052, 4294901760
    %v4561 = vsub.f32 %v4052, %v4560
    %v4562 = vand.u32 %v4561, 4294901760
    %4563 = vmatpush1.msra.mxu0 %v4562
    %4564 = vmatprep.subr.mxu0 0.0
    %v4565 = vand.u32 %v4053, 4294901760
    %v4566 = vsub.f32 %v4053, %v4565
    %v4567 = vand.u32 %v4566, 4294901760
    %4568 = vmatpush1.msra.mxu0 %v4567
    %4569 = vmatprep.subr.mxu0 0.0
    %v4570 = vand.u32 %v4054, 4294901760
    %v4571 = vsub.f32 %v4054, %v4570
    %v4572 = vand.u32 %v4571, 4294901760
    %4573 = vmatpush1.msra.mxu0 %v4572
    %4574 = vmatprep.subr.mxu0 0.0
    %v4575 = vand.u32 %v4055, 4294901760
    %v4576 = vsub.f32 %v4055, %v4575
    %v4577 = vand.u32 %v4576, 4294901760
    %4578 = vmatpush1.msra.mxu0 %v4577
    %4579 = vmatprep.subr.mxu0 0.0
    %4580 = vmatpush1.msra.mxu0 0.0
    %4581 = vmatprep.subr.mxu0 0.0
    %4582 = vmatpush1.msra.mxu0 0.0
    %4583 = vmatprep.subr.mxu0 0.0
    %4584 = vmatpush1.msra.mxu0 0.0
    %4585 = vmatprep.subr.mxu0 0.0
    %4586 = vmatpush1.msra.mxu0 0.0
    %4587 = vmatprep.subr.mxu0 0.0
    %4588 = vmatpush1.msra.mxu0 0.0
    %4589 = vmatprep.subr.mxu0 0.0
    %4590 = vmatpush1.msra.mxu0 0.0
    %4591 = vmatprep.subr.mxu0 0.0
    %4592 = vmatpush1.msra.mxu0 0.0
    %4593 = vmatprep.subr.mxu0 0.0
    %4594 = vmatpush1.msra.mxu0 0.0
    %4595 = vmatprep.subr.mxu0 0.0
    %4596 = vmatpush1.msra.mxu0 0.0
    %4597 = vmatprep.subr.mxu0 0.0
    %4598 = vmatpush1.msra.mxu0 0.0
    %4599 = vmatprep.subr.mxu0 0.0
    %4600 = vmatpush1.msra.mxu0 0.0
    %4601 = vmatprep.subr.mxu0 0.0
    %4602 = vmatpush1.msra.mxu0 0.0
    %4603 = vmatprep.subr.mxu0 0.0
    %4604 = vmatpush1.msra.mxu0 0.0
    %4605 = vmatprep.subr.mxu0 0.0
    %4606 = vmatpush1.msra.mxu0 0.0
    %4607 = vmatprep.subr.mxu0 0.0
    %4608 = vmatpush1.msra.mxu0 0.0
    %4609 = vmatprep.subr.mxu0 0.0
    %4610 = vmatpush1.msra.mxu0 0.0
    %4611 = vmatprep.mubr.f32.mxu0 0.0
    %v4612 = vand.u32 %v4038, 4294901760
    %4613 = vmatmul.mubr.f32.gmra.mrb[0].mxu0 %v4612
    %v4614 = vpop.f32.mrb[0].mxu0
    %v4615 = vadd.f32 %v4496, %v4614
    %v4616 = vpop.f32.mrb[0].mxu0
    %4617 = vdwg.mxu0
    %4618 = vmatprep.subr.mxu0 0.0
    %v4619 = vand.u32 %v4040, 4294901760
    %4620 = vmatpush1.msra.mxu0 %v4619
    %4621 = vmatprep.subr.mxu0 0.0
    %v4622 = vand.u32 %v4041, 4294901760
    %4623 = vmatpush1.msra.mxu0 %v4622
    %4624 = vmatprep.subr.mxu0 0.0
    %v4625 = vand.u32 %v4042, 4294901760
    %4626 = vmatpush1.msra.mxu0 %v4625
    %4627 = vmatprep.subr.mxu0 0.0
    %v4628 = vand.u32 %v4043, 4294901760
    %4629 = vmatpush1.msra.mxu0 %v4628
    %4630 = vmatprep.subr.mxu0 0.0
    %v4631 = vand.u32 %v4044, 4294901760
    %4632 = vmatpush1.msra.mxu0 %v4631
    %4633 = vmatprep.subr.mxu0 0.0
    %v4634 = vand.u32 %v4045, 4294901760
    %4635 = vmatpush1.msra.mxu0 %v4634
    %4636 = vmatprep.subr.mxu0 0.0
    %v4637 = vand.u32 %v4046, 4294901760
    %4638 = vmatpush1.msra.mxu0 %v4637
    %4639 = vmatprep.subr.mxu0 0.0
    %v4640 = vand.u32 %v4047, 4294901760
    %4641 = vmatpush1.msra.mxu0 %v4640
    %4642 = vmatprep.subr.mxu0 0.0
    %v4643 = vand.u32 %v4048, 4294901760
    %4644 = vmatpush1.msra.mxu0 %v4643
    %4645 = vmatprep.subr.mxu0 0.0
    %v4646 = vand.u32 %v4049, 4294901760
    %4647 = vmatpush1.msra.mxu0 %v4646
    %4648 = vmatprep.subr.mxu0 0.0
    %v4649 = vand.u32 %v4050, 4294901760
    %4650 = vmatpush1.msra.mxu0 %v4649
    %4651 = vmatprep.subr.mxu0 0.0
    %v4652 = vand.u32 %v4051, 4294901760
    %4653 = vmatpush1.msra.mxu0 %v4652
    %4654 = vmatprep.subr.mxu0 0.0
    %v4655 = vand.u32 %v4052, 4294901760
    %4656 = vmatpush1.msra.mxu0 %v4655
    %4657 = vmatprep.subr.mxu0 0.0
    %v4658 = vand.u32 %v4053, 4294901760
    %4659 = vmatpush1.msra.mxu0 %v4658
    %4660 = vmatprep.subr.mxu0 0.0
    %v4661 = vand.u32 %v4054, 4294901760
    %4662 = vmatpush1.msra.mxu0 %v4661
    %4663 = vmatprep.subr.mxu0 0.0
    %v4664 = vand.u32 %v4055, 4294901760
    %4665 = vmatpush1.msra.mxu0 %v4664
    %4666 = vmatprep.subr.mxu0 0.0
    %4667 = vmatpush1.msra.mxu0 0.0
    %4668 = vmatprep.subr.mxu0 0.0
    %4669 = vmatpush1.msra.mxu0 0.0
    %4670 = vmatprep.subr.mxu0 0.0
    %4671 = vmatpush1.msra.mxu0 0.0
    %4672 = vmatprep.subr.mxu0 0.0
    %4673 = vmatpush1.msra.mxu0 0.0
    %4674 = vmatprep.subr.mxu0 0.0
    %4675 = vmatpush1.msra.mxu0 0.0
    %4676 = vmatprep.subr.mxu0 0.0
    %4677 = vmatpush1.msra.mxu0 0.0
    %4678 = vmatprep.subr.mxu0 0.0
    %4679 = vmatpush1.msra.mxu0 0.0
    %4680 = vmatprep.subr.mxu0 0.0
    %4681 = vmatpush1.msra.mxu0 0.0
    %4682 = vmatprep.subr.mxu0 0.0
    %4683 = vmatpush1.msra.mxu0 0.0
    %4684 = vmatprep.subr.mxu0 0.0
    %4685 = vmatpush1.msra.mxu0 0.0
    %4686 = vmatprep.subr.mxu0 0.0
    %4687 = vmatpush1.msra.mxu0 0.0
    %4688 = vmatprep.subr.mxu0 0.0
    %4689 = vmatpush1.msra.mxu0 0.0
    %4690 = vmatprep.subr.mxu0 0.0
    %4691 = vmatpush1.msra.mxu0 0.0
    %4692 = vmatprep.subr.mxu0 0.0
    %4693 = vmatpush1.msra.mxu0 0.0
    %4694 = vmatprep.subr.mxu0 0.0
    %4695 = vmatpush1.msra.mxu0 0.0
    %4696 = vmatprep.subr.mxu0 0.0
    %4697 = vmatpush1.msra.mxu0 0.0
    %4698 = vmatprep.mubr.f32.mxu0 0.0
    %v4699 = vand.u32 %v4038, 4294901760
    %4700 = vmatmul.mubr.f32.gmra.mrb[0].mxu0 %v4699
    %v4701 = vpop.f32.mrb[0].mxu0
    %v4702 = vadd.f32 %v4615, %v4701
    %v4703 = vpop.f32.mrb[0].mxu0
    %4704 = vdwg.mxu0
    %v4705 = vtanh.pop %v4702
    %v4706 = vadd.f32 %v4038, %v4705
    %s4707 = scalar_lea.vmem [#allocation2], 896
    %v4708 = vld [vmem:[%s4707] sm:$0xff]
    %v4709 = vld [vmem:[%s4707 + $0x8] sm:$0xff]
    %v4710 = vld [vmem:[%s4707 + $0x10] sm:$0xff]
    %v4711 = vld [vmem:[%s4707 + $0x18] sm:$0xff]
    %v4712 = vld [vmem:[%s4707 + $0x20] sm:$0xff]
    %v4713 = vld [vmem:[%s4707 + $0x28] sm:$0xff]
    %v4714 = vld [vmem:[%s4707 + $0x30] sm:$0xff]
    %v4715 = vld [vmem:[%s4707 + $0x38] sm:$0xff]
    %v4716 = vld [vmem:[%s4707 + $0x40] sm:$0xff]
    %v4717 = vld [vmem:[%s4707 + $0x48] sm:$0xff]
    %v4718 = vld [vmem:[%s4707 + $0x50] sm:$0xff]
    %v4719 = vld [vmem:[%s4707 + $0x58] sm:$0xff]
    %v4720 = vld [vmem:[%s4707 + $0x60] sm:$0xff]
    %v4721 = vld [vmem:[%s4707 + $0x68] sm:$0xff]
    %v4722 = vld [vmem:[%s4707 + $0x70] sm:$0xff]
    %v4723 = vld [vmem:[%s4707 + $0x78] sm:$0xff]
    %s4724 = scalar_lea.vmem %s2, 7
    %v4725 = vld [vmem:[%s4724] sm:$0x1]
    %v4727 = vlaneseq
    %v4728 = vshrl.u32 %v4727, 7
    %v4729 = vsub.s32 0, %v4728
    %v4730 = vrot.slane %v4725, %v4729
    %4732 = vmatprep.subr.mxu0 0.0
    %v4733 = vand.u32 %v4708, 4294901760
    %4734 = vmatpush1.msra.mxu0 %v4733
    %4735 = vmatprep.subr.mxu0 0.0
    %v4736 = vand.u32 %v4709, 4294901760
    %4737 = vmatpush1.msra.mxu0 %v4736
    %4738 = vmatprep.subr.mxu0 0.0
    %v4739 = vand.u32 %v4710, 4294901760
    %4740 = vmatpush1.msra.mxu0 %v4739
    %4741 = vmatprep.subr.mxu0 0.0
    %v4742 = vand.u32 %v4711, 4294901760
    %4743 = vmatpush1.msra.mxu0 %v4742
    %4744 = vmatprep.subr.mxu0 0.0
    %v4745 = vand.u32 %v4712, 4294901760
    %4746 = vmatpush1.msra.mxu0 %v4745
    %4747 = vmatprep.subr.mxu0 0.0
    %v4748 = vand.u32 %v4713, 4294901760
    %4749 = vmatpush1.msra.mxu0 %v4748
    %4750 = vmatprep.subr.mxu0 0.0
    %v4751 = vand.u32 %v4714, 4294901760
    %4752 = vmatpush1.msra.mxu0 %v4751
    %4753 = vmatprep.subr.mxu0 0.0
    %v4754 = vand.u32 %v4715, 4294901760
    %4755 = vmatpush1.msra.mxu0 %v4754
    %4756 = vmatprep.subr.mxu0 0.0
    %v4757 = vand.u32 %v4716, 4294901760
    %4758 = vmatpush1.msra.mxu0 %v4757
    %4759 = vmatprep.subr.mxu0 0.0
    %v4760 = vand.u32 %v4717, 4294901760
    %4761 = vmatpush1.msra.mxu0 %v4760
    %4762 = vmatprep.subr.mxu0 0.0
    %v4763 = vand.u32 %v4718, 4294901760
    %4764 = vmatpush1.msra.mxu0 %v4763
    %4765 = vmatprep.subr.mxu0 0.0
    %v4766 = vand.u32 %v4719, 4294901760
    %4767 = vmatpush1.msra.mxu0 %v4766
    %4768 = vmatprep.subr.mxu0 0.0
    %v4769 = vand.u32 %v4720, 4294901760
    %4770 = vmatpush1.msra.mxu0 %v4769
    %4771 = vmatprep.subr.mxu0 0.0
    %v4772 = vand.u32 %v4721, 4294901760
    %4773 = vmatpush1.msra.mxu0 %v4772
    %4774 = vmatprep.subr.mxu0 0.0
    %v4775 = vand.u32 %v4722, 4294901760
    %4776 = vmatpush1.msra.mxu0 %v4775
    %4777 = vmatprep.subr.mxu0 0.0
    %v4778 = vand.u32 %v4723, 4294901760
    %4779 = vmatpush1.msra.mxu0 %v4778
    %4780 = vmatprep.subr.mxu0 0.0
    %4781 = vmatpush1.msra.mxu0 0.0
    %4782 = vmatprep.subr.mxu0 0.0
    %4783 = vmatpush1.msra.mxu0 0.0
    %4784 = vmatprep.subr.mxu0 0.0
    %4785 = vmatpush1.msra.mxu0 0.0
    %4786 = vmatprep.subr.mxu0 0.0
    %4787 = vmatpush1.msra.mxu0 0.0
    %4788 = vmatprep.subr.mxu0 0.0
    %4789 = vmatpush1.msra.mxu0 0.0
    %4790 = vmatprep.subr.mxu0 0.0
    %4791 = vmatpush1.msra.mxu0 0.0
    %4792 = vmatprep.subr.mxu0 0.0
    %4793 = vmatpush1.msra.mxu0 0.0
    %4794 = vmatprep.subr.mxu0 0.0
    %4795 = vmatpush1.msra.mxu0 0.0
    %4796 = vmatprep.subr.mxu0 0.0
    %4797 = vmatpush1.msra.mxu0 0.0
    %4798 = vmatprep.subr.mxu0 0.0
    %4799 = vmatpush1.msra.mxu0 0.0
    %4800 = vmatprep.subr.mxu0 0.0
    %4801 = vmatpush1.msra.mxu0 0.0
    %4802 = vmatprep.subr.mxu0 0.0
    %4803 = vmatpush1.msra.mxu0 0.0
    %4804 = vmatprep.subr.mxu0 0.0
    %4805 = vmatpush1.msra.mxu0 0.0
    %4806 = vmatprep.subr.mxu0 0.0
    %4807 = vmatpush1.msra.mxu0 0.0
    %4808 = vmatprep.subr.mxu0 0.0
    %4809 = vmatpush1.msra.mxu0 0.0
    %4810 = vmatprep.subr.mxu0 0.0
    %4811 = vmatpush1.msra.mxu0 0.0
    %4812 = vmatprep.mubr.f32.mxu0 0.0
    %v4813 = vand.u32 %v4706, 4294901760
    %v4814 = vsub.f32 %v4706, %v4813
    %v4815 = vand.u32 %v4814, 4294901760
    %v4816 = vsub.f32 %v4814, %v4815
    %v4817 = vand.u32 %v4816, 4294901760
    %4818 = vmatmul.mubr.f32.gmra.mrb[0].mxu0 %v4817
    %v4819 = vpop.f32.mrb[0].mxu0
    %v4820 = vadd.f32 %v4730, %v4819
    %v4821 = vpop.f32.mrb[0].mxu0
    %4822 = vdwg.mxu0
    %4823 = vmatprep.subr.mxu0 0.0
    %v4824 = vand.u32 %v4708, 4294901760
    %v4825 = vsub.f32 %v4708, %v4824
    %v4826 = vand.u32 %v4825, 4294901760
    %v4827 = vsub.f32 %v4825, %v4826
    %v4828 = vand.u32 %v4827, 4294901760
    %4829 = vmatpush1.msra.mxu0 %v4828
    %4830 = vmatprep.subr.mxu0 0.0
    %v4831 = vand.u32 %v4709, 4294901760
    %v4832 = vsub.f32 %v4709, %v4831
    %v4833 = vand.u32 %v4832, 4294901760
    %v4834 = vsub.f32 %v4832, %v4833
    %v4835 = vand.u32 %v4834, 4294901760
    %4836 = vmatpush1.msra.mxu0 %v4835
    %4837 = vmatprep.subr.mxu0 0.0
    %v4838 = vand.u32 %v4710, 4294901760
    %v4839 = vsub.f32 %v4710, %v4838
    %v4840 = vand.u32 %v4839, 4294901760
    %v4841 = vsub.f32 %v4839, %v4840
    %v4842 = vand.u32 %v4841, 4294901760
    %4843 = vmatpush1.msra.mxu0 %v4842
    %4844 = vmatprep.subr.mxu0 0.0
    %v4845 = vand.u32 %v4711, 4294901760
    %v4846 = vsub.f32 %v4711, %v4845
    %v4847 = vand.u32 %v4846, 4294901760
    %v4848 = vsub.f32 %v4846, %v4847
    %v4849 = vand.u32 %v4848, 4294901760
    %4850 = vmatpush1.msra.mxu0 %v4849
    %4851 = vmatprep.subr.mxu0 0.0
    %v4852 = vand.u32 %v4712, 4294901760
    %v4853 = vsub.f32 %v4712, %v4852
    %v4854 = vand.u32 %v4853, 4294901760
    %v4855 = vsub.f32 %v4853, %v4854
    %v4856 = vand.u32 %v4855, 4294901760
    %4857 = vmatpush1.msra.mxu0 %v4856
    %4858 = vmatprep.subr.mxu0 0.0
    %v4859 = vand.u32 %v4713, 4294901760
    %v4860 = vsub.f32 %v4713, %v4859
    %v4861 = vand.u32 %v4860, 4294901760
    %v4862 = vsub.f32 %v4860, %v4861
    %v4863 = vand.u32 %v4862, 4294901760
    %4864 = vmatpush1.msra.mxu0 %v4863
    %4865 = vmatprep.subr.mxu0 0.0
    %v4866 = vand.u32 %v4714, 4294901760
    %v4867 = vsub.f32 %v4714, %v4866
    %v4868 = vand.u32 %v4867, 4294901760
    %v4869 = vsub.f32 %v4867, %v4868
    %v4870 = vand.u32 %v4869, 4294901760
    %4871 = vmatpush1.msra.mxu0 %v4870
    %4872 = vmatprep.subr.mxu0 0.0
    %v4873 = vand.u32 %v4715, 4294901760
    %v4874 = vsub.f32 %v4715, %v4873
    %v4875 = vand.u32 %v4874, 4294901760
    %v4876 = vsub.f32 %v4874, %v4875
    %v4877 = vand.u32 %v4876, 4294901760
    %4878 = vmatpush1.msra.mxu0 %v4877
    %4879 = vmatprep.subr.mxu0 0.0
    %v4880 = vand.u32 %v4716, 4294901760
    %v4881 = vsub.f32 %v4716, %v4880
    %v4882 = vand.u32 %v4881, 4294901760
    %v4883 = vsub.f32 %v4881, %v4882
    %v4884 = vand.u32 %v4883, 4294901760
    %4885 = vmatpush1.msra.mxu0 %v4884
    %4886 = vmatprep.subr.mxu0 0.0
    %v4887 = vand.u32 %v4717, 4294901760
    %v4888 = vsub.f32 %v4717, %v4887
    %v4889 = vand.u32 %v4888, 4294901760
    %v4890 = vsub.f32 %v4888, %v4889
    %v4891 = vand.u32 %v4890, 4294901760
    %4892 = vmatpush1.msra.mxu0 %v4891
    %4893 = vmatprep.subr.mxu0 0.0
    %v4894 = vand.u32 %v4718, 4294901760
    %v4895 = vsub.f32 %v4718, %v4894
    %v4896 = vand.u32 %v4895, 4294901760
    %v4897 = vsub.f32 %v4895, %v4896
    %v4898 = vand.u32 %v4897, 4294901760
    %4899 = vmatpush1.msra.mxu0 %v4898
    %4900 = vmatprep.subr.mxu0 0.0
    %v4901 = vand.u32 %v4719, 4294901760
    %v4902 = vsub.f32 %v4719, %v4901
    %v4903 = vand.u32 %v4902, 4294901760
    %v4904 = vsub.f32 %v4902, %v4903
    %v4905 = vand.u32 %v4904, 4294901760
    %4906 = vmatpush1.msra.mxu0 %v4905
    %4907 = vmatprep.subr.mxu0 0.0
    %v4908 = vand.u32 %v4720, 4294901760
    %v4909 = vsub.f32 %v4720, %v4908
    %v4910 = vand.u32 %v4909, 4294901760
    %v4911 = vsub.f32 %v4909, %v4910
    %v4912 = vand.u32 %v4911, 4294901760
    %4913 = vmatpush1.msra.mxu0 %v4912
    %4914 = vmatprep.subr.mxu0 0.0
    %v4915 = vand.u32 %v4721, 4294901760
    %v4916 = vsub.f32 %v4721, %v4915
    %v4917 = vand.u32 %v4916, 4294901760
    %v4918 = vsub.f32 %v4916, %v4917
    %v4919 = vand.u32 %v4918, 4294901760
    %4920 = vmatpush1.msra.mxu0 %v4919
    %4921 = vmatprep.subr.mxu0 0.0
    %v4922 = vand.u32 %v4722, 4294901760
    %v4923 = vsub.f32 %v4722, %v4922
    %v4924 = vand.u32 %v4923, 4294901760
    %v4925 = vsub.f32 %v4923, %v4924
    %v4926 = vand.u32 %v4925, 4294901760
    %4927 = vmatpush1.msra.mxu0 %v4926
    %4928 = vmatprep.subr.mxu0 0.0
    %v4929 = vand.u32 %v4723, 4294901760
    %v4930 = vsub.f32 %v4723, %v4929
    %v4931 = vand.u32 %v4930, 4294901760
    %v4932 = vsub.f32 %v4930, %v4931
    %v4933 = vand.u32 %v4932, 4294901760
    %4934 = vmatpush1.msra.mxu0 %v4933
    %4935 = vmatprep.subr.mxu0 0.0
    %4936 = vmatpush1.msra.mxu0 0.0
    %4937 = vmatprep.subr.mxu0 0.0
    %4938 = vmatpush1.msra.mxu0 0.0
    %4939 = vmatprep.subr.mxu0 0.0
    %4940 = vmatpush1.msra.mxu0 0.0
    %4941 = vmatprep.subr.mxu0 0.0
    %4942 = vmatpush1.msra.mxu0 0.0
    %4943 = vmatprep.subr.mxu0 0.0
    %4944 = vmatpush1.msra.mxu0 0.0
    %4945 = vmatprep.subr.mxu0 0.0
    %4946 = vmatpush1.msra.mxu0 0.0
    %4947 = vmatprep.subr.mxu0 0.0
    %4948 = vmatpush1.msra.mxu0 0.0
    %4949 = vmatprep.subr.mxu0 0.0
    %4950 = vmatpush1.msra.mxu0 0.0
    %4951 = vmatprep.subr.mxu0 0.0
    %4952 = vmatpush1.msra.mxu0 0.0
    %4953 = vmatprep.subr.mxu0 0.0
    %4954 = vmatpush1.msra.mxu0 0.0
    %4955 = vmatprep.subr.mxu0 0.0
    %4956 = vmatpush1.msra.mxu0 0.0
    %4957 = vmatprep.subr.mxu0 0.0
    %4958 = vmatpush1.msra.mxu0 0.0
    %4959 = vmatprep.subr.mxu0 0.0
    %4960 = vmatpush1.msra.mxu0 0.0
    %4961 = vmatprep.subr.mxu0 0.0
    %4962 = vmatpush1.msra.mxu0 0.0
    %4963 = vmatprep.subr.mxu0 0.0
    %4964 = vmatpush1.msra.mxu0 0.0
    %4965 = vmatprep.subr.mxu0 0.0
    %4966 = vmatpush1.msra.mxu0 0.0
    %4967 = vmatprep.mubr.f32.mxu0 0.0
    %v4968 = vand.u32 %v4706, 4294901760
    %4969 = vmatmul.mubr.f32.gmra.mrb[0].mxu0 %v4968
    %v4970 = vpop.f32.mrb[0].mxu0
    %v4971 = vadd.f32 %v4820, %v4970
    %v4972 = vpop.f32.mrb[0].mxu0
    %4973 = vdwg.mxu0
    %4974 = vmatprep.subr.mxu0 0.0
    %v4975 = vand.u32 %v4708, 4294901760
    %v4976 = vsub.f32 %v4708, %v4975
    %4977 = vmatpush1.msra.mxu0 %v4976
    %4978 = vmatprep.subr.mxu0 0.0
    %v4979 = vand.u32 %v4709, 4294901760
    %v4980 = vsub.f32 %v4709, %v4979
    %4981 = vmatpush1.msra.mxu0 %v4980
    %4982 = vmatprep.subr.mxu0 0.0
    %v4983 = vand.u32 %v4710, 4294901760
    %v4984 = vsub.f32 %v4710, %v4983
    %4985 = vmatpush1.msra.mxu0 %v4984
    %4986 = vmatprep.subr.mxu0 0.0
    %v4987 = vand.u32 %v4711, 4294901760
    %v4988 = vsub.f32 %v4711, %v4987
    %4989 = vmatpush1.msra.mxu0 %v4988
    %4990 = vmatprep.subr.mxu0 0.0
    %v4991 = vand.u32 %v4712, 4294901760
    %v4992 = vsub.f32 %v4712, %v4991
    %4993 = vmatpush1.msra.mxu0 %v4992
    %4994 = vmatprep.subr.mxu0 0.0
    %v4995 = vand.u32 %v4713, 4294901760
    %v4996 = vsub.f32 %v4713, %v4995
    %4997 = vmatpush1.msra.mxu0 %v4996
    %4998 = vmatprep.subr.mxu0 0.0
    %v4999 = vand.u32 %v4714, 4294901760
    %v5000 = vsub.f32 %v4714, %v4999
    %5001 = vmatpush1.msra.mxu0 %v5000
    %5002 = vmatprep.subr.mxu0 0.0
    %v5003 = vand.u32 %v4715, 4294901760
    %v5004 = vsub.f32 %v4715, %v5003
    %5005 = vmatpush1.msra.mxu0 %v5004
    %5006 = vmatprep.subr.mxu0 0.0
    %v5007 = vand.u32 %v4716, 4294901760
    %v5008 = vsub.f32 %v4716, %v5007
    %5009 = vmatpush1.msra.mxu0 %v5008
    %5010 = vmatprep.subr.mxu0 0.0
    %v5011 = vand.u32 %v4717, 4294901760
    %v5012 = vsub.f32 %v4717, %v5011
    %5013 = vmatpush1.msra.mxu0 %v5012
    %5014 = vmatprep.subr.mxu0 0.0
    %v5015 = vand.u32 %v4718, 4294901760
    %v5016 = vsub.f32 %v4718, %v5015
    %5017 = vmatpush1.msra.mxu0 %v5016
    %5018 = vmatprep.subr.mxu0 0.0
    %v5019 = vand.u32 %v4719, 4294901760
    %v5020 = vsub.f32 %v4719, %v5019
    %5021 = vmatpush1.msra.mxu0 %v5020
    %5022 = vmatprep.subr.mxu0 0.0
    %v5023 = vand.u32 %v4720, 4294901760
    %v5024 = vsub.f32 %v4720, %v5023
    %5025 = vmatpush1.msra.mxu0 %v5024
    %5026 = vmatprep.subr.mxu0 0.0
    %v5027 = vand.u32 %v4721, 4294901760
    %v5028 = vsub.f32 %v4721, %v5027
    %5029 = vmatpush1.msra.mxu0 %v5028
    %5030 = vmatprep.subr.mxu0 0.0
    %v5031 = vand.u32 %v4722, 4294901760
    %v5032 = vsub.f32 %v4722, %v5031
    %5033 = vmatpush1.msra.mxu0 %v5032
    %5034 = vmatprep.subr.mxu0 0.0
    %v5035 = vand.u32 %v4723, 4294901760
    %v5036 = vsub.f32 %v4723, %v5035
    %5037 = vmatpush1.msra.mxu0 %v5036
    %5038 = vmatprep.subr.mxu0 0.0
    %5039 = vmatpush1.msra.mxu0 0.0
    %5040 = vmatprep.subr.mxu0 0.0
    %5041 = vmatpush1.msra.mxu0 0.0
    %5042 = vmatprep.subr.mxu0 0.0
    %5043 = vmatpush1.msra.mxu0 0.0
    %5044 = vmatprep.subr.mxu0 0.0
    %5045 = vmatpush1.msra.mxu0 0.0
    %5046 = vmatprep.subr.mxu0 0.0
    %5047 = vmatpush1.msra.mxu0 0.0
    %5048 = vmatprep.subr.mxu0 0.0
    %5049 = vmatpush1.msra.mxu0 0.0
    %5050 = vmatprep.subr.mxu0 0.0
    %5051 = vmatpush1.msra.mxu0 0.0
    %5052 = vmatprep.subr.mxu0 0.0
    %5053 = vmatpush1.msra.mxu0 0.0
    %5054 = vmatprep.subr.mxu0 0.0
    %5055 = vmatpush1.msra.mxu0 0.0
    %5056 = vmatprep.subr.mxu0 0.0
    %5057 = vmatpush1.msra.mxu0 0.0
    %5058 = vmatprep.subr.mxu0 0.0
    %5059 = vmatpush1.msra.mxu0 0.0
    %5060 = vmatprep.subr.mxu0 0.0
    %5061 = vmatpush1.msra.mxu0 0.0
    %5062 = vmatprep.subr.mxu0 0.0
    %5063 = vmatpush1.msra.mxu0 0.0
    %5064 = vmatprep.subr.mxu0 0.0
    %5065 = vmatpush1.msra.mxu0 0.0
    %5066 = vmatprep.subr.mxu0 0.0
    %5067 = vmatpush1.msra.mxu0 0.0
    %5068 = vmatprep.subr.mxu0 0.0
    %5069 = vmatpush1.msra.mxu0 0.0
    %5070 = vmatprep.mubr.f32.mxu0 0.0
    %v5071 = vand.u32 %v4706, 4294901760
    %v5072 = vsub.f32 %v4706, %v5071
    %5073 = vmatmul.mubr.f32.gmra.mrb[0].mxu0 %v5072
    %v5074 = vpop.f32.mrb[0].mxu0
    %v5075 = vadd.f32 %v4971, %v5074
    %v5076 = vpop.f32.mrb[0].mxu0
    %5077 = vdwg.mxu0
    %5078 = vmatprep.subr.mxu0 0.0
    %v5079 = vand.u32 %v4708, 4294901760
    %5080 = vmatpush1.msra.mxu0 %v5079
    %5081 = vmatprep.subr.mxu0 0.0
    %v5082 = vand.u32 %v4709, 4294901760
    %5083 = vmatpush1.msra.mxu0 %v5082
    %5084 = vmatprep.subr.mxu0 0.0
    %v5085 = vand.u32 %v4710, 4294901760
    %5086 = vmatpush1.msra.mxu0 %v5085
    %5087 = vmatprep.subr.mxu0 0.0
    %v5088 = vand.u32 %v4711, 4294901760
    %5089 = vmatpush1.msra.mxu0 %v5088
    %5090 = vmatprep.subr.mxu0 0.0
    %v5091 = vand.u32 %v4712, 4294901760
    %5092 = vmatpush1.msra.mxu0 %v5091
    %5093 = vmatprep.subr.mxu0 0.0
    %v5094 = vand.u32 %v4713, 4294901760
    %5095 = vmatpush1.msra.mxu0 %v5094
    %5096 = vmatprep.subr.mxu0 0.0
    %v5097 = vand.u32 %v4714, 4294901760
    %5098 = vmatpush1.msra.mxu0 %v5097
    %5099 = vmatprep.subr.mxu0 0.0
    %v5100 = vand.u32 %v4715, 4294901760
    %5101 = vmatpush1.msra.mxu0 %v5100
    %5102 = vmatprep.subr.mxu0 0.0
    %v5103 = vand.u32 %v4716, 4294901760
    %5104 = vmatpush1.msra.mxu0 %v5103
    %5105 = vmatprep.subr.mxu0 0.0
    %v5106 = vand.u32 %v4717, 4294901760
    %5107 = vmatpush1.msra.mxu0 %v5106
    %5108 = vmatprep.subr.mxu0 0.0
    %v5109 = vand.u32 %v4718, 4294901760
    %5110 = vmatpush1.msra.mxu0 %v5109
    %5111 = vmatprep.subr.mxu0 0.0
    %v5112 = vand.u32 %v4719, 4294901760
    %5113 = vmatpush1.msra.mxu0 %v5112
    %5114 = vmatprep.subr.mxu0 0.0
    %v5115 = vand.u32 %v4720, 4294901760
    %5116 = vmatpush1.msra.mxu0 %v5115
    %5117 = vmatprep.subr.mxu0 0.0
    %v5118 = vand.u32 %v4721, 4294901760
    %5119 = vmatpush1.msra.mxu0 %v5118
    %5120 = vmatprep.subr.mxu0 0.0
    %v5121 = vand.u32 %v4722, 4294901760
    %5122 = vmatpush1.msra.mxu0 %v5121
    %5123 = vmatprep.subr.mxu0 0.0
    %v5124 = vand.u32 %v4723, 4294901760
    %5125 = vmatpush1.msra.mxu0 %v5124
    %5126 = vmatprep.subr.mxu0 0.0
    %5127 = vmatpush1.msra.mxu0 0.0
    %5128 = vmatprep.subr.mxu0 0.0
    %5129 = vmatpush1.msra.mxu0 0.0
    %5130 = vmatprep.subr.mxu0 0.0
    %5131 = vmatpush1.msra.mxu0 0.0
    %5132 = vmatprep.subr.mxu0 0.0
    %5133 = vmatpush1.msra.mxu0 0.0
    %5134 = vmatprep.subr.mxu0 0.0
    %5135 = vmatpush1.msra.mxu0 0.0
    %5136 = vmatprep.subr.mxu0 0.0
    %5137 = vmatpush1.msra.mxu0 0.0
    %5138 = vmatprep.subr.mxu0 0.0
    %5139 = vmatpush1.msra.mxu0 0.0
    %5140 = vmatprep.subr.mxu0 0.0
    %5141 = vmatpush1.msra.mxu0 0.0
    %5142 = vmatprep.subr.mxu0 0.0
    %5143 = vmatpush1.msra.mxu0 0.0
    %5144 = vmatprep.subr.mxu0 0.0
    %5145 = vmatpush1.msra.mxu0 0.0
    %5146 = vmatprep.subr.mxu0 0.0
    %5147 = vmatpush1.msra.mxu0 0.0
    %5148 = vmatprep.subr.mxu0 0.0
    %5149 = vmatpush1.msra.mxu0 0.0
    %5150 = vmatprep.subr.mxu0 0.0
    %5151 = vmatpush1.msra.mxu0 0.0
    %5152 = vmatprep.subr.mxu0 0.0
    %5153 = vmatpush1.msra.mxu0 0.0
    %5154 = vmatprep.subr.mxu0 0.0
    %5155 = vmatpush1.msra.mxu0 0.0
    %5156 = vmatprep.subr.mxu0 0.0
    %5157 = vmatpush1.msra.mxu0 0.0
    %5158 = vmatprep.mubr.f32.mxu0 0.0
    %v5159 = vand.u32 %v4706, 4294901760
    %v5160 = vsub.f32 %v4706, %v5159
    %v5161 = vand.u32 %v5160, 4294901760
    %5162 = vmatmul.mubr.f32.gmra.mrb[0].mxu0 %v5161
    %v5163 = vpop.f32.mrb[0].mxu0
    %v5164 = vadd.f32 %v5075, %v5163
    %v5165 = vpop.f32.mrb[0].mxu0
    %5166 = vdwg.mxu0
    %5167 = vmatprep.subr.mxu0 0.0
    %v5168 = vand.u32 %v4708, 4294901760
    %v5169 = vsub.f32 %v4708, %v5168
    %v5170 = vand.u32 %v5169, 4294901760
    %5171 = vmatpush1.msra.mxu0 %v5170
    %5172 = vmatprep.subr.mxu0 0.0
    %v5173 = vand.u32 %v4709, 4294901760
    %v5174 = vsub.f32 %v4709, %v5173
    %v5175 = vand.u32 %v5174, 4294901760
    %5176 = vmatpush1.msra.mxu0 %v5175
    %5177 = vmatprep.subr.mxu0 0.0
    %v5178 = vand.u32 %v4710, 4294901760
    %v5179 = vsub.f32 %v4710, %v5178
    %v5180 = vand.u32 %v5179, 4294901760
    %5181 = vmatpush1.msra.mxu0 %v5180
    %5182 = vmatprep.subr.mxu0 0.0
    %v5183 = vand.u32 %v4711, 4294901760
    %v5184 = vsub.f32 %v4711, %v5183
    %v5185 = vand.u32 %v5184, 4294901760
    %5186 = vmatpush1.msra.mxu0 %v5185
    %5187 = vmatprep.subr.mxu0 0.0
    %v5188 = vand.u32 %v4712, 4294901760
    %v5189 = vsub.f32 %v4712, %v5188
    %v5190 = vand.u32 %v5189, 4294901760
    %5191 = vmatpush1.msra.mxu0 %v5190
    %5192 = vmatprep.subr.mxu0 0.0
    %v5193 = vand.u32 %v4713, 4294901760
    %v5194 = vsub.f32 %v4713, %v5193
    %v5195 = vand.u32 %v5194, 4294901760
    %5196 = vmatpush1.msra.mxu0 %v5195
    %5197 = vmatprep.subr.mxu0 0.0
    %v5198 = vand.u32 %v4714, 4294901760
    %v5199 = vsub.f32 %v4714, %v5198
    %v5200 = vand.u32 %v5199, 4294901760
    %5201 = vmatpush1.msra.mxu0 %v5200
    %5202 = vmatprep.subr.mxu0 0.0
    %v5203 = vand.u32 %v4715, 4294901760
    %v5204 = vsub.f32 %v4715, %v5203
    %v5205 = vand.u32 %v5204, 4294901760
    %5206 = vmatpush1.msra.mxu0 %v5205
    %5207 = vmatprep.subr.mxu0 0.0
    %v5208 = vand.u32 %v4716, 4294901760
    %v5209 = vsub.f32 %v4716, %v5208
    %v5210 = vand.u32 %v5209, 4294901760
    %5211 = vmatpush1.msra.mxu0 %v5210
    %5212 = vmatprep.subr.mxu0 0.0
    %v5213 = vand.u32 %v4717, 4294901760
    %v5214 = vsub.f32 %v4717, %v5213
    %v5215 = vand.u32 %v5214, 4294901760
    %5216 = vmatpush1.msra.mxu0 %v5215
    %5217 = vmatprep.subr.mxu0 0.0
    %v5218 = vand.u32 %v4718, 4294901760
    %v5219 = vsub.f32 %v4718, %v5218
    %v5220 = vand.u32 %v5219, 4294901760
    %5221 = vmatpush1.msra.mxu0 %v5220
    %5222 = vmatprep.subr.mxu0 0.0
    %v5223 = vand.u32 %v4719, 4294901760
    %v5224 = vsub.f32 %v4719, %v5223
    %v5225 = vand.u32 %v5224, 4294901760
    %5226 = vmatpush1.msra.mxu0 %v5225
    %5227 = vmatprep.subr.mxu0 0.0
    %v5228 = vand.u32 %v4720, 4294901760
    %v5229 = vsub.f32 %v4720, %v5228
    %v5230 = vand.u32 %v5229, 4294901760
    %5231 = vmatpush1.msra.mxu0 %v5230
    %5232 = vmatprep.subr.mxu0 0.0
    %v5233 = vand.u32 %v4721, 4294901760
    %v5234 = vsub.f32 %v4721, %v5233
    %v5235 = vand.u32 %v5234, 4294901760
    %5236 = vmatpush1.msra.mxu0 %v5235
    %5237 = vmatprep.subr.mxu0 0.0
    %v5238 = vand.u32 %v4722, 4294901760
    %v5239 = vsub.f32 %v4722, %v5238
    %v5240 = vand.u32 %v5239, 4294901760
    %5241 = vmatpush1.msra.mxu0 %v5240
    %5242 = vmatprep.subr.mxu0 0.0
    %v5243 = vand.u32 %v4723, 4294901760
    %v5244 = vsub.f32 %v4723, %v5243
    %v5245 = vand.u32 %v5244, 4294901760
    %5246 = vmatpush1.msra.mxu0 %v5245
    %5247 = vmatprep.subr.mxu0 0.0
    %5248 = vmatpush1.msra.mxu0 0.0
    %5249 = vmatprep.subr.mxu0 0.0
    %5250 = vmatpush1.msra.mxu0 0.0
    %5251 = vmatprep.subr.mxu0 0.0
    %5252 = vmatpush1.msra.mxu0 0.0
    %5253 = vmatprep.subr.mxu0 0.0
    %5254 = vmatpush1.msra.mxu0 0.0
    %5255 = vmatprep.subr.mxu0 0.0
    %5256 = vmatpush1.msra.mxu0 0.0
    %5257 = vmatprep.subr.mxu0 0.0
    %5258 = vmatpush1.msra.mxu0 0.0
    %5259 = vmatprep.subr.mxu0 0.0
    %5260 = vmatpush1.msra.mxu0 0.0
    %5261 = vmatprep.subr.mxu0 0.0
    %5262 = vmatpush1.msra.mxu0 0.0
    %5263 = vmatprep.subr.mxu0 0.0
    %5264 = vmatpush1.msra.mxu0 0.0
    %5265 = vmatprep.subr.mxu0 0.0
    %5266 = vmatpush1.msra.mxu0 0.0
    %5267 = vmatprep.subr.mxu0 0.0
    %5268 = vmatpush1.msra.mxu0 0.0
    %5269 = vmatprep.subr.mxu0 0.0
    %5270 = vmatpush1.msra.mxu0 0.0
    %5271 = vmatprep.subr.mxu0 0.0
    %5272 = vmatpush1.msra.mxu0 0.0
    %5273 = vmatprep.subr.mxu0 0.0
    %5274 = vmatpush1.msra.mxu0 0.0
    %5275 = vmatprep.subr.mxu0 0.0
    %5276 = vmatpush1.msra.mxu0 0.0
    %5277 = vmatprep.subr.mxu0 0.0
    %5278 = vmatpush1.msra.mxu0 0.0
    %5279 = vmatprep.mubr.f32.mxu0 0.0
    %v5280 = vand.u32 %v4706, 4294901760
    %5281 = vmatmul.mubr.f32.gmra.mrb[0].mxu0 %v5280
    %v5282 = vpop.f32.mrb[0].mxu0
    %v5283 = vadd.f32 %v5164, %v5282
    %v5284 = vpop.f32.mrb[0].mxu0
    %5285 = vdwg.mxu0
    %5286 = vmatprep.subr.mxu0 0.0
    %v5287 = vand.u32 %v4708, 4294901760
    %5288 = vmatpush1.msra.mxu0 %v5287
    %5289 = vmatprep.subr.mxu0 0.0
    %v5290 = vand.u32 %v4709, 4294901760
    %5291 = vmatpush1.msra.mxu0 %v5290
    %5292 = vmatprep.subr.mxu0 0.0
    %v5293 = vand.u32 %v4710, 4294901760
    %5294 = vmatpush1.msra.mxu0 %v5293
    %5295 = vmatprep.subr.mxu0 0.0
    %v5296 = vand.u32 %v4711, 4294901760
    %5297 = vmatpush1.msra.mxu0 %v5296
    %5298 = vmatprep.subr.mxu0 0.0
    %v5299 = vand.u32 %v4712, 4294901760
    %5300 = vmatpush1.msra.mxu0 %v5299
    %5301 = vmatprep.subr.mxu0 0.0
    %v5302 = vand.u32 %v4713, 4294901760
    %5303 = vmatpush1.msra.mxu0 %v5302
    %5304 = vmatprep.subr.mxu0 0.0
    %v5305 = vand.u32 %v4714, 4294901760
    %5306 = vmatpush1.msra.mxu0 %v5305
    %5307 = vmatprep.subr.mxu0 0.0
    %v5308 = vand.u32 %v4715, 4294901760
    %5309 = vmatpush1.msra.mxu0 %v5308
    %5310 = vmatprep.subr.mxu0 0.0
    %v5311 = vand.u32 %v4716, 4294901760
    %5312 = vmatpush1.msra.mxu0 %v5311
    %5313 = vmatprep.subr.mxu0 0.0
    %v5314 = vand.u32 %v4717, 4294901760
    %5315 = vmatpush1.msra.mxu0 %v5314
    %5316 = vmatprep.subr.mxu0 0.0
    %v5317 = vand.u32 %v4718, 4294901760
    %5318 = vmatpush1.msra.mxu0 %v5317
    %5319 = vmatprep.subr.mxu0 0.0
    %v5320 = vand.u32 %v4719, 4294901760
    %5321 = vmatpush1.msra.mxu0 %v5320
    %5322 = vmatprep.subr.mxu0 0.0
    %v5323 = vand.u32 %v4720, 4294901760
    %5324 = vmatpush1.msra.mxu0 %v5323
    %5325 = vmatprep.subr.mxu0 0.0
    %v5326 = vand.u32 %v4721, 4294901760
    %5327 = vmatpush1.msra.mxu0 %v5326
    %5328 = vmatprep.subr.mxu0 0.0
    %v5329 = vand.u32 %v4722, 4294901760
    %5330 = vmatpush1.msra.mxu0 %v5329
    %5331 = vmatprep.subr.mxu0 0.0
    %v5332 = vand.u32 %v4723, 4294901760
    %5333 = vmatpush1.msra.mxu0 %v5332
    %5334 = vmatprep.subr.mxu0 0.0
    %5335 = vmatpush1.msra.mxu0 0.0
    %5336 = vmatprep.subr.mxu0 0.0
    %5337 = vmatpush1.msra.mxu0 0.0
    %5338 = vmatprep.subr.mxu0 0.0
    %5339 = vmatpush1.msra.mxu0 0.0
    %5340 = vmatprep.subr.mxu0 0.0
    %5341 = vmatpush1.msra.mxu0 0.0
    %5342 = vmatprep.subr.mxu0 0.0
    %5343 = vmatpush1.msra.mxu0 0.0
    %5344 = vmatprep.subr.mxu0 0.0
    %5345 = vmatpush1.msra.mxu0 0.0
    %5346 = vmatprep.subr.mxu0 0.0
    %5347 = vmatpush1.msra.mxu0 0.0
    %5348 = vmatprep.subr.mxu0 0.0
    %5349 = vmatpush1.msra.mxu0 0.0
    %5350 = vmatprep.subr.mxu0 0.0
    %5351 = vmatpush1.msra.mxu0 0.0
    %5352 = vmatprep.subr.mxu0 0.0
    %5353 = vmatpush1.msra.mxu0 0.0
    %5354 = vmatprep.subr.mxu0 0.0
    %5355 = vmatpush1.msra.mxu0 0.0
    %5356 = vmatprep.subr.mxu0 0.0
    %5357 = vmatpush1.msra.mxu0 0.0
    %5358 = vmatprep.subr.mxu0 0.0
    %5359 = vmatpush1.msra.mxu0 0.0
    %5360 = vmatprep.subr.mxu0 0.0
    %5361 = vmatpush1.msra.mxu0 0.0
    %5362 = vmatprep.subr.mxu0 0.0
    %5363 = vmatpush1.msra.mxu0 0.0
    %5364 = vmatprep.subr.mxu0 0.0
    %5365 = vmatpush1.msra.mxu0 0.0
    %5366 = vmatprep.mubr.f32.mxu0 0.0
    %v5367 = vand.u32 %v4706, 4294901760
    %5368 = vmatmul.mubr.f32.gmra.mrb[0].mxu0 %v5367
    %v5369 = vpop.f32.mrb[0].mxu0
    %v5370 = vadd.f32 %v5283, %v5369
    %v5371 = vpop.f32.mrb[0].mxu0
    %5372 = vdwg.mxu0
    %v5373 = vlaneseq
    %v5374 = vand.u32 %v5373, 127
    %vm5375 = vcmp.ge.s32.totalorder %v5374, 111
    %vm5376 = vcmp.lt.s32.totalorder %v5374, 113
    %vm5377 = vmand %vm5375, %vm5376
    %v5378 = vsel %vm5377, %v5370, -inf
    %5379 = vmax.xlane.f32.xlu0 %v5378
    %v5380 = vpop.xlane.xlu0 %5379
    %v5381 = vsub.f32 %v5370, %v5380
    %v5382 = vmul.f32 %v5381, 1.442695
    %v5383 = vpow.pop %v5382
    %v5384 = vsel %vm5377, %v5383, 0.0
    %5385 = vadd.xlane.f32.xlu0 %v5384
    %v5386 = vpop.xlane.xlu0 %5385
    %v5387 = vrcp.pop %v5386
    %v5388 = vmul.f32 %v5384, %v5387
    %v5389 = vadd.f32 %v4706, %v5388
    %5390 = vst [vmem:[%s3] sm:$0xff] %v5389
    // Predicated region
    $region18: #{mlp_forward.1} parent=1 // pred_check
      _
    $region19: #{mlp_forward.1} parent=1 // pred_check_branch
      %5392 = sbr.rel (0) target = $region21
    $region20: #{mlp_forward.1} parent=1 // pred_region
      _
    $region21: #{mlp_forward.1} parent=1 // pred_fallthru
      _
    // Predicated region
    $region22: #{mlp_forward.1} parent=1 // pred_check
      _
    $region23: #{mlp_forward.1} parent=1 // pred_check_branch
      %5394 = sbr.rel (0) target = $region25
    $region24: #{mlp_forward.1} parent=1 // pred_region
      _
    $region25: #{mlp_forward.1} parent=1 // pred_fallthru
      _
    %5395 = vsyncpa [#allocation3], 1

</llo_original>
